<compile_context>
chip_gen: v7x
topology: tpu7x:2x2x1
jax: 0.10.0
libtpu: 0.0.40
codegen_flags: <defaults>
</compile_context>

<pallas_src>
import jax
import jax.numpy as jnp
from jax.experimental import pallas as pl
from jax.experimental.pallas import tpu as pltpu

# Small shapes consistent with the module's forward (seq = n_patches).
B, N, D = 2, 16, 32          # batch, n_patches, emb_dim
H = 4                        # num_heads
DH = D // H                  # head dim
M = 64                       # mlp_dim
L = 2                        # num_layers
EPS = 1e-5                   # nn.LayerNorm default eps
BN = B * N
SCALE = 1.0 / (DH ** 0.5)


# ---------------------------------------------------------------------------
# In-kernel math helpers (pure jnp, traced inside the Pallas kernel body)
# ---------------------------------------------------------------------------
def _layernorm(x, w, b):
    # var = E[x^2] - E[x]^2 : two independent lane reductions (no serial chain).
    mu = jnp.mean(x, axis=-1, keepdims=True)
    mu2 = jnp.mean(x * x, axis=-1, keepdims=True)
    var = mu2 - mu * mu
    return (x - mu) * jax.lax.rsqrt(var + EPS) * w + b


def _softmax(s):
    m = jnp.max(s, axis=-1, keepdims=True)
    e = jnp.exp(s - m)
    return e * pl.reciprocal(jnp.sum(e, axis=-1, keepdims=True), approx=True)


def _gelu_tanh(x):
    # tanh-form GELU: tanh executes on the EUP (otherwise idle), ~3 VALU ops.
    c = 0.7978845608028654   # sqrt(2/pi)
    return 0.5 * x * (1.0 + jnp.tanh(c * (x + 0.044715 * x * x * x)))


def _matmul_t(x, w, b):
    # x: (R, Din); w: (Dout, Din) [PyTorch layout]; b: (1, Dout) -> (R, Dout)
    return jax.lax.dot_general(
        x, w, dimension_numbers=(((1,), (1,)), ((), ())),
        preferred_element_type=jnp.float32) + b


def _bmm(a, b3, ca, cb):
    # single-batch (dim 0) 3-D matmul
    return jax.lax.dot_general(
        a, b3, dimension_numbers=(((ca,), (cb,)), ((0,), (0,))),
        preferred_element_type=jnp.float32)


# ---------------------------------------------------------------------------
# Single fused Pallas kernel: pos-embed add + L transformer blocks + final LN
# ---------------------------------------------------------------------------
def vit_kernel(x_ref, pos_ref, hmask_ref,
               ln1w_ref, ln1b_ref,
               qkvw_ref, qkvb_ref, outw_ref, outb_ref,
               ln2w_ref, ln2b_ref,
               fc1w_ref, fc1b_ref, fc2w_ref, fc2b_ref,
               lnw_ref, lnb_ref,
               o_ref):
    # x + pos_embed (pos broadcasts over batch), then flatten to (B*N, D) once.
    x = (x_ref[...] + pos_ref[...]).reshape(BN, D)
    hmask = hmask_ref[...]                               # (H, D): 1.0 where d//DH == h

    for l in range(L):                                   # unrolled (L = 2)
        # --- attention sub-block -------------------------------------------
        x2 = _layernorm(x, ln1w_ref[l], ln1b_ref[l])
        qkv = _matmul_t(x2, qkvw_ref[l], qkvb_ref[l])    # (BN, 3D): one fused MXU pass
        q = qkv[:, 0:D].reshape(B, N, D)
        k = qkv[:, D:2 * D].reshape(B, N, D)
        v = qkv[:, 2 * D:3 * D].reshape(B, N, D)

        # Per-head scores via head-masked full-width contraction:
        #   s[b, h*N+n, m] = sum_d q[b,n,d] * hmask[h,d] * k[b,m,d]
        qh = (q[:, None, :, :] * hmask[None, :, None, :]).reshape(B, H * N, D)
        s = _bmm(qh, k, 2, 2) * SCALE                    # (B, H*N, N)
        p = _softmax(s)                                  # attn dropout -> identity (eval)

        # Per-head attention output; head-merge = sum over h of masked terms
        # (cross-head contributions are exactly zero because of the mask).
        vh = (v[:, None, :, :] * hmask[None, :, None, :]).reshape(B * H, N, D)
        a_bh = _bmm(p.reshape(B * H, N, N), vh, 2, 1)    # (B*H, N, D)
        a4 = a_bh.reshape(B, H, N, D)
        a = a4[:, 0]
        for h_ in range(1, H):
            a = a + a4[:, h_]
        a = a.reshape(BN, D)                             # merged heads, lane-dense

        x = x + _matmul_t(a, outw_ref[l], outb_ref[l])

        # --- MLP sub-block ---------------------------------------------------
        x2 = _layernorm(x, ln2w_ref[l], ln2b_ref[l])
        h1 = _gelu_tanh(_matmul_t(x2, fc1w_ref[l], fc1b_ref[l]))     # (BN, M)
        x = x + _matmul_t(h1, fc2w_ref[l], fc2b_ref[l])
        # TODO(synk): nn.Dropout layers are identity here (inference semantics).

    # --- fused final LayerNorm on token 0 only ------------------------------
    x0 = x.reshape(B, N, D)[:, 0, :]                     # (B, D)
    o_ref[...] = _layernorm(x0, lnw_ref[...], lnb_ref[...])


# ---------------------------------------------------------------------------
# Wrapper
# ---------------------------------------------------------------------------
def vit_forward(x, p):
    # Head-selection mask (H, D): row h is 1.0 on features [h*DH, (h+1)*DH).
    # Built once in the wrapper (free layout plumbing, constant across layers).
    hmask = jnp.repeat(jnp.eye(H, dtype=jnp.float32), DH, axis=1)

    inputs = [x, p['pos'], hmask,
              p['ln1w'], p['ln1b'],
              p['qkvw'], p['qkvb'], p['outw'], p['outb'],
              p['ln2w'], p['ln2b'],
              p['fc1w'], p['fc1b'], p['fc2w'], p['fc2b'],
              p['lnw'], p['lnb']]

    def full(shape):
        nd = len(shape)
        return pl.BlockSpec(shape, lambda i, nd=nd: (0,) * nd)

    return pl.pallas_call(
        vit_kernel,
        out_shape=jax.ShapeDtypeStruct((B, D), jnp.float32),
        grid=(1,),                                   # single grid point; all VMEM-resident
        in_specs=[full(a.shape) for a in inputs],
        out_specs=full((B, D)),
        compiler_params=pltpu.CompilerParams(
            dimension_semantics=("arbitrary",)),
    )(*inputs)


# ---------------------------------------------------------------------------
# Deterministic parameter init (shapes from VisionTransformer.__init__)
# ---------------------------------------------------------------------------
def init_params(key):
    ks = jax.random.split(key, 9)
    s = 0.02
    return dict(
        pos=s * jax.random.normal(ks[0], (1, N, D), jnp.float32),
        ln1w=jnp.ones((L, 1, D), jnp.float32),
        ln1b=jnp.zeros((L, 1, D), jnp.float32),
        qkvw=s * jax.random.normal(ks[1], (L, 3 * D, D), jnp.float32),
        qkvb=s * jax.random.normal(ks[2], (L, 1, 3 * D), jnp.float32),
        outw=s * jax.random.normal(ks[3], (L, D, D), jnp.float32),
        outb=s * jax.random.normal(ks[4], (L, 1, D), jnp.float32),
        ln2w=jnp.ones((L, 1, D), jnp.float32),
        ln2b=jnp.zeros((L, 1, D), jnp.float32),
        fc1w=s * jax.random.normal(ks[5], (L, M, D), jnp.float32),
        fc1b=s * jax.random.normal(ks[6], (L, 1, M), jnp.float32),
        fc2w=s * jax.random.normal(ks[7], (L, D, M), jnp.float32),
        fc2b=s * jax.random.normal(ks[8], (L, 1, D), jnp.float32),
        lnw=jnp.ones((1, D), jnp.float32),
        lnb=jnp.zeros((1, D), jnp.float32),
    )


# Pure-JAX reference (mirrors nn.MultiheadAttention / nn.GELU semantics, eval mode)
def vit_reference(x, p):
    def ln(x, w, b):
        mu = jnp.mean(x, axis=-1, keepdims=True)
        var = jnp.mean((x - mu) ** 2, axis=-1, keepdims=True)
        return (x - mu) * jax.lax.rsqrt(var + EPS) * w + b

    x = x + p['pos']
    for l in range(L):
        x2 = ln(x, p['ln1w'][l, 0], p['ln1b'][l, 0])
        qkv = x2 @ p['qkvw'][l].T + p['qkvb'][l, 0]
        q, k, v = jnp.split(qkv, 3, axis=-1)
        sh = lambda t: t.reshape(B, N, H, DH).transpose(0, 2, 1, 3)
        qh, kh, vh = sh(q), sh(k), sh(v)
        s = jnp.einsum('bhnd,bhmd->bhnm', qh, kh) / jnp.sqrt(DH)
        a = jnp.einsum('bhnm,bhmd->bhnd', jax.nn.softmax(s, axis=-1), vh)
        a = a.transpose(0, 2, 1, 3).reshape(B, N, D)
        a = a @ p['outw'][l].T + p['outb'][l, 0]
        x = x + a
        x2 = ln(x, p['ln2w'][l, 0], p['ln2b'][l, 0])
        h1 = jax.nn.gelu(x2 @ p['fc1w'][l].T + p['fc1b'][l, 0], approximate=False)
        x = x + h1 @ p['fc2w'][l].T + p['fc2b'][l, 0]
    x = ln(x, p['lnw'][0], p['lnb'][0])
    return x[:, 0]


if __name__ == "__main__":
    key = jax.random.PRNGKey(0)
    kx, kp = jax.random.split(key)
    params = init_params(kp)
    x = jax.random.normal(kx, (B, N, D), jnp.float32)

    out = jax.block_until_ready(vit_forward(x, params))
    ref = jax.block_until_ready(vit_reference(x, params))

    assert out.shape == (B, D), out.shape
    assert bool(jnp.all(jnp.isfinite(out)))
    err = float(jnp.max(jnp.abs(out - ref)))
    assert err < 2e-3, err
    print("KERNEL_OK")
</pallas_src>

<mosaic_0001>
module attributes {stable_mosaic.version = 11 : i64} {
  func.func @vit_kernel(%arg0: i32, %arg1: memref<2x16x32xf32, #tpu.memory_space<vmem>>, %arg2: memref<1x16x32xf32, #tpu.memory_space<vmem>>, %arg3: memref<4x32xf32, #tpu.memory_space<vmem>>, %arg4: memref<2x1x32xf32, #tpu.memory_space<vmem>>, %arg5: memref<2x1x32xf32, #tpu.memory_space<vmem>>, %arg6: memref<2x96x32xf32, #tpu.memory_space<vmem>>, %arg7: memref<2x1x96xf32, #tpu.memory_space<vmem>>, %arg8: memref<2x32x32xf32, #tpu.memory_space<vmem>>, %arg9: memref<2x1x32xf32, #tpu.memory_space<vmem>>, %arg10: memref<2x1x32xf32, #tpu.memory_space<vmem>>, %arg11: memref<2x1x32xf32, #tpu.memory_space<vmem>>, %arg12: memref<2x64x32xf32, #tpu.memory_space<vmem>>, %arg13: memref<2x1x64xf32, #tpu.memory_space<vmem>>, %arg14: memref<2x32x64xf32, #tpu.memory_space<vmem>>, %arg15: memref<2x1x32xf32, #tpu.memory_space<vmem>>, %arg16: memref<1x32xf32, #tpu.memory_space<vmem>>, %arg17: memref<1x32xf32, #tpu.memory_space<vmem>>, %arg18: memref<2x32xf32, #tpu.memory_space<vmem>>) attributes {dimension_semantics = [#tpu.dimension_semantics<arbitrary>], iteration_bounds = array<i64: 1>, scalar_prefetch = 0 : i64, scratch_operands = 0 : i64, tpu.core_type = #tpu.core_type<tc>, window_params = [{pipeline_mode = #tpu.pipeline_mode<synchronous>, transform_indices = @transform_0, window_bounds = array<i64: 2, 16, 32>}, {pipeline_mode = #tpu.pipeline_mode<synchronous>, transform_indices = @transform_1, window_bounds = array<i64: 1, 16, 32>}, {pipeline_mode = #tpu.pipeline_mode<synchronous>, transform_indices = @transform_2, window_bounds = array<i64: 4, 32>}, {pipeline_mode = #tpu.pipeline_mode<synchronous>, transform_indices = @transform_3, window_bounds = array<i64: 2, 1, 32>}, {pipeline_mode = #tpu.pipeline_mode<synchronous>, transform_indices = @transform_4, window_bounds = array<i64: 2, 1, 32>}, {pipeline_mode = #tpu.pipeline_mode<synchronous>, transform_indices = @transform_5, window_bounds = array<i64: 2, 96, 32>}, {pipeline_mode = #tpu.pipeline_mode<synchronous>, transform_indices = @transform_6, window_bounds = array<i64: 2, 1, 96>}, {pipeline_mode = #tpu.pipeline_mode<synchronous>, transform_indices = @transform_7, window_bounds = array<i64: 2, 32, 32>}, {pipeline_mode = #tpu.pipeline_mode<synchronous>, transform_indices = @transform_8, window_bounds = array<i64: 2, 1, 32>}, {pipeline_mode = #tpu.pipeline_mode<synchronous>, transform_indices = @transform_9, window_bounds = array<i64: 2, 1, 32>}, {pipeline_mode = #tpu.pipeline_mode<synchronous>, transform_indices = @transform_10, window_bounds = array<i64: 2, 1, 32>}, {pipeline_mode = #tpu.pipeline_mode<synchronous>, transform_indices = @transform_11, window_bounds = array<i64: 2, 64, 32>}, {pipeline_mode = #tpu.pipeline_mode<synchronous>, transform_indices = @transform_12, window_bounds = array<i64: 2, 1, 64>}, {pipeline_mode = #tpu.pipeline_mode<synchronous>, transform_indices = @transform_13, window_bounds = array<i64: 2, 32, 64>}, {pipeline_mode = #tpu.pipeline_mode<synchronous>, transform_indices = @transform_14, window_bounds = array<i64: 2, 1, 32>}, {pipeline_mode = #tpu.pipeline_mode<synchronous>, transform_indices = @transform_15, window_bounds = array<i64: 1, 32>}, {pipeline_mode = #tpu.pipeline_mode<synchronous>, transform_indices = @transform_16, window_bounds = array<i64: 1, 32>}, {pipeline_mode = #tpu.pipeline_mode<synchronous>, transform_indices = @transform_17, window_bounds = array<i64: 2, 32>}]} {
    %c0 = arith.constant 0 : index
    %c0_0 = arith.constant 0 : index
    %c0_1 = arith.constant 0 : index
    %0 = vector.load %arg1[%c0, %c0_0, %c0_1] : memref<2x16x32xf32, #tpu.memory_space<vmem>>, vector<2x16x32xf32>
    %c0_2 = arith.constant 0 : index
    %c0_3 = arith.constant 0 : index
    %c0_4 = arith.constant 0 : index
    %1 = vector.load %arg2[%c0_2, %c0_3, %c0_4] : memref<1x16x32xf32, #tpu.memory_space<vmem>>, vector<1x16x32xf32>
    %2 = vector.broadcast %1 : vector<1x16x32xf32> to vector<2x16x32xf32>
    %3 = arith.addf %0, %2 : vector<2x16x32xf32>
    %4 = vector.shape_cast %3 : vector<2x16x32xf32> to vector<32x32xf32>
    %c0_5 = arith.constant 0 : index
    %c0_6 = arith.constant 0 : index
    %5 = vector.load %arg3[%c0_5, %c0_6] : memref<4x32xf32, #tpu.memory_space<vmem>>, vector<4x32xf32>
    %c0_7 = arith.constant 0 : index
    %c0_8 = arith.constant 0 : index
    %c0_9 = arith.constant 0 : index
    %6 = vector.load %arg4[%c0_7, %c0_8, %c0_9] : memref<2x1x32xf32, #tpu.memory_space<vmem>>, vector<1x1x32xf32>
    %7 = vector.shape_cast %6 : vector<1x1x32xf32> to vector<1x32xf32>
    %c0_10 = arith.constant 0 : index
    %c0_11 = arith.constant 0 : index
    %c0_12 = arith.constant 0 : index
    %8 = vector.load %arg5[%c0_10, %c0_11, %c0_12] : memref<2x1x32xf32, #tpu.memory_space<vmem>>, vector<1x1x32xf32>
    %9 = vector.shape_cast %8 : vector<1x1x32xf32> to vector<1x32xf32>
    %cst = arith.constant dense<0.000000e+00> : vector<32xf32>
    %10 = vector.multi_reduction <add>, %4, %cst [1] : vector<32x32xf32> to vector<32xf32>
    %11 = vector.shape_cast %10 : vector<32xf32> to vector<32x1xf32>
    %cst_13 = arith.constant 3.200000e+01 : f32
    %12 = vector.broadcast %cst_13 : f32 to vector<32x1xf32>
    %13 = arith.divf %11, %12 : vector<32x1xf32>
    %14 = arith.mulf %4, %4 : vector<32x32xf32>
    %cst_14 = arith.constant dense<0.000000e+00> : vector<32xf32>
    %15 = vector.multi_reduction <add>, %14, %cst_14 [1] : vector<32x32xf32> to vector<32xf32>
    %16 = vector.shape_cast %15 : vector<32xf32> to vector<32x1xf32>
    %cst_15 = arith.constant 3.200000e+01 : f32
    %17 = vector.broadcast %cst_15 : f32 to vector<32x1xf32>
    %18 = arith.divf %16, %17 : vector<32x1xf32>
    %19 = arith.mulf %13, %13 : vector<32x1xf32>
    %20 = arith.subf %18, %19 : vector<32x1xf32>
    %21 = vector.broadcast %13 : vector<32x1xf32> to vector<32x32xf32>
    %22 = arith.subf %4, %21 : vector<32x32xf32>
    %cst_16 = arith.constant 9.99999974E-6 : f32
    %23 = vector.broadcast %cst_16 : f32 to vector<32x1xf32>
    %24 = arith.addf %20, %23 : vector<32x1xf32>
    %25 = math.rsqrt %24 : vector<32x1xf32>
    %26 = vector.broadcast %25 : vector<32x1xf32> to vector<32x32xf32>
    %27 = arith.mulf %22, %26 : vector<32x32xf32>
    %28 = vector.broadcast %7 : vector<1x32xf32> to vector<32x32xf32>
    %29 = arith.mulf %27, %28 : vector<32x32xf32>
    %30 = vector.broadcast %9 : vector<1x32xf32> to vector<32x32xf32>
    %31 = arith.addf %29, %30 : vector<32x32xf32>
    %c0_17 = arith.constant 0 : index
    %c0_18 = arith.constant 0 : index
    %c0_19 = arith.constant 0 : index
    %32 = vector.load %arg6[%c0_17, %c0_18, %c0_19] : memref<2x96x32xf32, #tpu.memory_space<vmem>>, vector<1x96x32xf32>
    %33 = vector.shape_cast %32 : vector<1x96x32xf32> to vector<96x32xf32>
    %c0_20 = arith.constant 0 : index
    %c0_21 = arith.constant 0 : index
    %c0_22 = arith.constant 0 : index
    %34 = vector.load %arg7[%c0_20, %c0_21, %c0_22] : memref<2x1x96xf32, #tpu.memory_space<vmem>>, vector<1x1x96xf32>
    %35 = vector.shape_cast %34 : vector<1x1x96xf32> to vector<1x96xf32>
    %cst_23 = arith.constant dense<0.000000e+00> : vector<32x96xf32>
    %36 = tpu.matmul %31, %33, %cst_23 {dimension_numbers = #tpu.dot_dimension_numbers<[1], [1], [0], [0], [0, 0, 1, 0], [], []>} : vector<32x32xf32>, vector<96x32xf32>, vector<32x96xf32> -> vector<32x96xf32>
    %37 = vector.broadcast %35 : vector<1x96xf32> to vector<32x96xf32>
    %38 = arith.addf %36, %37 : vector<32x96xf32>
    %39 = vector.extract_strided_slice %38 {offsets = [0, 0], sizes = [32, 32], strides = [1, 1]} : vector<32x96xf32> to vector<32x32xf32>
    %40 = vector.shape_cast %39 : vector<32x32xf32> to vector<2x16x32xf32>
    %41 = vector.extract_strided_slice %38 {offsets = [0, 32], sizes = [32, 32], strides = [1, 1]} : vector<32x96xf32> to vector<32x32xf32>
    %42 = vector.shape_cast %41 : vector<32x32xf32> to vector<2x16x32xf32>
    %43 = vector.extract_strided_slice %38 {offsets = [0, 64], sizes = [32, 32], strides = [1, 1]} : vector<32x96xf32> to vector<32x32xf32>
    %44 = vector.shape_cast %43 : vector<32x32xf32> to vector<2x16x32xf32>
    %45 = vector.shape_cast %40 : vector<2x16x32xf32> to vector<2x1x16x32xf32>
    %46 = vector.shape_cast %5 : vector<4x32xf32> to vector<1x4x1x32xf32>
    %47 = vector.broadcast %45 : vector<2x1x16x32xf32> to vector<2x4x16x32xf32>
    %48 = vector.broadcast %46 : vector<1x4x1x32xf32> to vector<2x4x16x32xf32>
    %49 = arith.mulf %47, %48 : vector<2x4x16x32xf32>
    %50 = vector.shape_cast %49 : vector<2x4x16x32xf32> to vector<2x64x32xf32>
    %cst_24 = arith.constant dense<0.000000e+00> : vector<2x64x16xf32>
    %51 = tpu.matmul %50, %42, %cst_24 {dimension_numbers = #tpu.dot_dimension_numbers<[2], [2], [1], [1], [0, 0, 0, 1, 1, 1], [0], [0]>} : vector<2x64x32xf32>, vector<2x16x32xf32>, vector<2x64x16xf32> -> vector<2x64x16xf32>
    %cst_25 = arith.constant 0.353553385 : f32
    %52 = vector.broadcast %cst_25 : f32 to vector<2x64x16xf32>
    %53 = arith.mulf %51, %52 : vector<2x64x16xf32>
    %cst_26 = arith.constant dense<0xFF800000> : vector<2x64xf32>
    %54 = vector.multi_reduction <maximumf>, %53, %cst_26 [2] : vector<2x64x16xf32> to vector<2x64xf32>
    %55 = vector.shape_cast %54 : vector<2x64xf32> to vector<2x64x1xf32>
    %56 = vector.broadcast %55 : vector<2x64x1xf32> to vector<2x64x16xf32>
    %57 = arith.subf %53, %56 : vector<2x64x16xf32>
    %58 = math.exp %57 : vector<2x64x16xf32>
    %cst_27 = arith.constant dense<0.000000e+00> : vector<2x64xf32>
    %59 = vector.multi_reduction <add>, %58, %cst_27 [2] : vector<2x64x16xf32> to vector<2x64xf32>
    %60 = vector.shape_cast %59 : vector<2x64xf32> to vector<2x64x1xf32>
    %61 = tpu.reciprocal %60 {approx = true} : vector<2x64x1xf32> -> vector<2x64x1xf32>
    %62 = vector.broadcast %61 : vector<2x64x1xf32> to vector<2x64x16xf32>
    %63 = arith.mulf %58, %62 : vector<2x64x16xf32>
    %64 = vector.shape_cast %44 : vector<2x16x32xf32> to vector<2x1x16x32xf32>
    %65 = vector.shape_cast %5 : vector<4x32xf32> to vector<1x4x1x32xf32>
    %66 = vector.broadcast %64 : vector<2x1x16x32xf32> to vector<2x4x16x32xf32>
    %67 = vector.broadcast %65 : vector<1x4x1x32xf32> to vector<2x4x16x32xf32>
    %68 = arith.mulf %66, %67 : vector<2x4x16x32xf32>
    %69 = vector.shape_cast %68 : vector<2x4x16x32xf32> to vector<8x16x32xf32>
    %70 = vector.shape_cast %63 : vector<2x64x16xf32> to vector<8x16x16xf32>
    %cst_28 = arith.constant dense<0.000000e+00> : vector<8x16x32xf32>
    %71 = tpu.matmul %70, %69, %cst_28 {dimension_numbers = #tpu.dot_dimension_numbers<[2], [1], [1], [2], [0, 0, 0, 1, 1, 2], [0], [0]>} : vector<8x16x16xf32>, vector<8x16x32xf32>, vector<8x16x32xf32> -> vector<8x16x32xf32>
    %72 = vector.shape_cast %71 : vector<8x16x32xf32> to vector<2x4x16x32xf32>
    %73 = vector.extract_strided_slice %72 {offsets = [0, 0, 0, 0], sizes = [2, 1, 16, 32], strides = [1, 1, 1, 1]} : vector<2x4x16x32xf32> to vector<2x1x16x32xf32>
    %74 = vector.shape_cast %73 : vector<2x1x16x32xf32> to vector<2x16x32xf32>
    %75 = vector.extract_strided_slice %72 {offsets = [0, 1, 0, 0], sizes = [2, 1, 16, 32], strides = [1, 1, 1, 1]} : vector<2x4x16x32xf32> to vector<2x1x16x32xf32>
    %76 = vector.shape_cast %75 : vector<2x1x16x32xf32> to vector<2x16x32xf32>
    %77 = arith.addf %74, %76 : vector<2x16x32xf32>
    %78 = vector.extract_strided_slice %72 {offsets = [0, 2, 0, 0], sizes = [2, 1, 16, 32], strides = [1, 1, 1, 1]} : vector<2x4x16x32xf32> to vector<2x1x16x32xf32>
    %79 = vector.shape_cast %78 : vector<2x1x16x32xf32> to vector<2x16x32xf32>
    %80 = arith.addf %77, %79 : vector<2x16x32xf32>
    %81 = vector.extract_strided_slice %72 {offsets = [0, 3, 0, 0], sizes = [2, 1, 16, 32], strides = [1, 1, 1, 1]} : vector<2x4x16x32xf32> to vector<2x1x16x32xf32>
    %82 = vector.shape_cast %81 : vector<2x1x16x32xf32> to vector<2x16x32xf32>
    %83 = arith.addf %80, %82 : vector<2x16x32xf32>
    %84 = vector.shape_cast %83 : vector<2x16x32xf32> to vector<32x32xf32>
    %c0_29 = arith.constant 0 : index
    %c0_30 = arith.constant 0 : index
    %c0_31 = arith.constant 0 : index
    %85 = vector.load %arg8[%c0_29, %c0_30, %c0_31] : memref<2x32x32xf32, #tpu.memory_space<vmem>>, vector<1x32x32xf32>
    %86 = vector.shape_cast %85 : vector<1x32x32xf32> to vector<32x32xf32>
    %c0_32 = arith.constant 0 : index
    %c0_33 = arith.constant 0 : index
    %c0_34 = arith.constant 0 : index
    %87 = vector.load %arg9[%c0_32, %c0_33, %c0_34] : memref<2x1x32xf32, #tpu.memory_space<vmem>>, vector<1x1x32xf32>
    %88 = vector.shape_cast %87 : vector<1x1x32xf32> to vector<1x32xf32>
    %cst_35 = arith.constant dense<0.000000e+00> : vector<32x32xf32>
    %89 = tpu.matmul %84, %86, %cst_35 {dimension_numbers = #tpu.dot_dimension_numbers<[1], [1], [0], [0], [0, 0, 1, 0], [], []>} : vector<32x32xf32>, vector<32x32xf32>, vector<32x32xf32> -> vector<32x32xf32>
    %90 = vector.broadcast %88 : vector<1x32xf32> to vector<32x32xf32>
    %91 = arith.addf %89, %90 : vector<32x32xf32>
    %92 = arith.addf %4, %91 : vector<32x32xf32>
    %c0_36 = arith.constant 0 : index
    %c0_37 = arith.constant 0 : index
    %c0_38 = arith.constant 0 : index
    %93 = vector.load %arg10[%c0_36, %c0_37, %c0_38] : memref<2x1x32xf32, #tpu.memory_space<vmem>>, vector<1x1x32xf32>
    %94 = vector.shape_cast %93 : vector<1x1x32xf32> to vector<1x32xf32>
    %c0_39 = arith.constant 0 : index
    %c0_40 = arith.constant 0 : index
    %c0_41 = arith.constant 0 : index
    %95 = vector.load %arg11[%c0_39, %c0_40, %c0_41] : memref<2x1x32xf32, #tpu.memory_space<vmem>>, vector<1x1x32xf32>
    %96 = vector.shape_cast %95 : vector<1x1x32xf32> to vector<1x32xf32>
    %cst_42 = arith.constant dense<0.000000e+00> : vector<32xf32>
    %97 = vector.multi_reduction <add>, %92, %cst_42 [1] : vector<32x32xf32> to vector<32xf32>
    %98 = vector.shape_cast %97 : vector<32xf32> to vector<32x1xf32>
    %cst_43 = arith.constant 3.200000e+01 : f32
    %99 = vector.broadcast %cst_43 : f32 to vector<32x1xf32>
    %100 = arith.divf %98, %99 : vector<32x1xf32>
    %101 = arith.mulf %92, %92 : vector<32x32xf32>
    %cst_44 = arith.constant dense<0.000000e+00> : vector<32xf32>
    %102 = vector.multi_reduction <add>, %101, %cst_44 [1] : vector<32x32xf32> to vector<32xf32>
    %103 = vector.shape_cast %102 : vector<32xf32> to vector<32x1xf32>
    %cst_45 = arith.constant 3.200000e+01 : f32
    %104 = vector.broadcast %cst_45 : f32 to vector<32x1xf32>
    %105 = arith.divf %103, %104 : vector<32x1xf32>
    %106 = arith.mulf %100, %100 : vector<32x1xf32>
    %107 = arith.subf %105, %106 : vector<32x1xf32>
    %108 = vector.broadcast %100 : vector<32x1xf32> to vector<32x32xf32>
    %109 = arith.subf %92, %108 : vector<32x32xf32>
    %cst_46 = arith.constant 9.99999974E-6 : f32
    %110 = vector.broadcast %cst_46 : f32 to vector<32x1xf32>
    %111 = arith.addf %107, %110 : vector<32x1xf32>
    %112 = math.rsqrt %111 : vector<32x1xf32>
    %113 = vector.broadcast %112 : vector<32x1xf32> to vector<32x32xf32>
    %114 = arith.mulf %109, %113 : vector<32x32xf32>
    %115 = vector.broadcast %94 : vector<1x32xf32> to vector<32x32xf32>
    %116 = arith.mulf %114, %115 : vector<32x32xf32>
    %117 = vector.broadcast %96 : vector<1x32xf32> to vector<32x32xf32>
    %118 = arith.addf %116, %117 : vector<32x32xf32>
    %c0_47 = arith.constant 0 : index
    %c0_48 = arith.constant 0 : index
    %c0_49 = arith.constant 0 : index
    %119 = vector.load %arg12[%c0_47, %c0_48, %c0_49] : memref<2x64x32xf32, #tpu.memory_space<vmem>>, vector<1x64x32xf32>
    %120 = vector.shape_cast %119 : vector<1x64x32xf32> to vector<64x32xf32>
    %c0_50 = arith.constant 0 : index
    %c0_51 = arith.constant 0 : index
    %c0_52 = arith.constant 0 : index
    %121 = vector.load %arg13[%c0_50, %c0_51, %c0_52] : memref<2x1x64xf32, #tpu.memory_space<vmem>>, vector<1x1x64xf32>
    %122 = vector.shape_cast %121 : vector<1x1x64xf32> to vector<1x64xf32>
    %cst_53 = arith.constant dense<0.000000e+00> : vector<32x64xf32>
    %123 = tpu.matmul %118, %120, %cst_53 {dimension_numbers = #tpu.dot_dimension_numbers<[1], [1], [0], [0], [0, 0, 1, 0], [], []>} : vector<32x32xf32>, vector<64x32xf32>, vector<32x64xf32> -> vector<32x64xf32>
    %124 = vector.broadcast %122 : vector<1x64xf32> to vector<32x64xf32>
    %125 = arith.addf %123, %124 : vector<32x64xf32>
    %cst_54 = arith.constant 5.000000e-01 : f32
    %126 = vector.broadcast %cst_54 : f32 to vector<32x64xf32>
    %127 = arith.mulf %126, %125 : vector<32x64xf32>
    %cst_55 = arith.constant 4.471500e-02 : f32
    %128 = vector.broadcast %cst_55 : f32 to vector<32x64xf32>
    %129 = arith.mulf %128, %125 : vector<32x64xf32>
    %130 = arith.mulf %129, %125 : vector<32x64xf32>
    %131 = arith.mulf %130, %125 : vector<32x64xf32>
    %132 = arith.addf %125, %131 : vector<32x64xf32>
    %cst_56 = arith.constant 0.797884583 : f32
    %133 = vector.broadcast %cst_56 : f32 to vector<32x64xf32>
    %134 = arith.mulf %133, %132 : vector<32x64xf32>
    %135 = math.tanh %134 : vector<32x64xf32>
    %cst_57 = arith.constant 1.000000e+00 : f32
    %136 = vector.broadcast %cst_57 : f32 to vector<32x64xf32>
    %137 = arith.addf %136, %135 : vector<32x64xf32>
    %138 = arith.mulf %127, %137 : vector<32x64xf32>
    %c0_58 = arith.constant 0 : index
    %c0_59 = arith.constant 0 : index
    %c0_60 = arith.constant 0 : index
    %139 = vector.load %arg14[%c0_58, %c0_59, %c0_60] : memref<2x32x64xf32, #tpu.memory_space<vmem>>, vector<1x32x64xf32>
    %140 = vector.shape_cast %139 : vector<1x32x64xf32> to vector<32x64xf32>
    %c0_61 = arith.constant 0 : index
    %c0_62 = arith.constant 0 : index
    %c0_63 = arith.constant 0 : index
    %141 = vector.load %arg15[%c0_61, %c0_62, %c0_63] : memref<2x1x32xf32, #tpu.memory_space<vmem>>, vector<1x1x32xf32>
    %142 = vector.shape_cast %141 : vector<1x1x32xf32> to vector<1x32xf32>
    %cst_64 = arith.constant dense<0.000000e+00> : vector<32x32xf32>
    %143 = tpu.matmul %138, %140, %cst_64 {dimension_numbers = #tpu.dot_dimension_numbers<[1], [1], [0], [0], [0, 0, 1, 0], [], []>} : vector<32x64xf32>, vector<32x64xf32>, vector<32x32xf32> -> vector<32x32xf32>
    %144 = vector.broadcast %142 : vector<1x32xf32> to vector<32x32xf32>
    %145 = arith.addf %143, %144 : vector<32x32xf32>
    %146 = arith.addf %92, %145 : vector<32x32xf32>
    %c1 = arith.constant 1 : index
    %c0_65 = arith.constant 0 : index
    %c0_66 = arith.constant 0 : index
    %147 = vector.load %arg4[%c1, %c0_65, %c0_66] : memref<2x1x32xf32, #tpu.memory_space<vmem>>, vector<1x1x32xf32>
    %148 = vector.shape_cast %147 : vector<1x1x32xf32> to vector<1x32xf32>
    %c1_67 = arith.constant 1 : index
    %c0_68 = arith.constant 0 : index
    %c0_69 = arith.constant 0 : index
    %149 = vector.load %arg5[%c1_67, %c0_68, %c0_69] : memref<2x1x32xf32, #tpu.memory_space<vmem>>, vector<1x1x32xf32>
    %150 = vector.shape_cast %149 : vector<1x1x32xf32> to vector<1x32xf32>
    %cst_70 = arith.constant dense<0.000000e+00> : vector<32xf32>
    %151 = vector.multi_reduction <add>, %146, %cst_70 [1] : vector<32x32xf32> to vector<32xf32>
    %152 = vector.shape_cast %151 : vector<32xf32> to vector<32x1xf32>
    %cst_71 = arith.constant 3.200000e+01 : f32
    %153 = vector.broadcast %cst_71 : f32 to vector<32x1xf32>
    %154 = arith.divf %152, %153 : vector<32x1xf32>
    %155 = arith.mulf %146, %146 : vector<32x32xf32>
    %cst_72 = arith.constant dense<0.000000e+00> : vector<32xf32>
    %156 = vector.multi_reduction <add>, %155, %cst_72 [1] : vector<32x32xf32> to vector<32xf32>
    %157 = vector.shape_cast %156 : vector<32xf32> to vector<32x1xf32>
    %cst_73 = arith.constant 3.200000e+01 : f32
    %158 = vector.broadcast %cst_73 : f32 to vector<32x1xf32>
    %159 = arith.divf %157, %158 : vector<32x1xf32>
    %160 = arith.mulf %154, %154 : vector<32x1xf32>
    %161 = arith.subf %159, %160 : vector<32x1xf32>
    %162 = vector.broadcast %154 : vector<32x1xf32> to vector<32x32xf32>
    %163 = arith.subf %146, %162 : vector<32x32xf32>
    %cst_74 = arith.constant 9.99999974E-6 : f32
    %164 = vector.broadcast %cst_74 : f32 to vector<32x1xf32>
    %165 = arith.addf %161, %164 : vector<32x1xf32>
    %166 = math.rsqrt %165 : vector<32x1xf32>
    %167 = vector.broadcast %166 : vector<32x1xf32> to vector<32x32xf32>
    %168 = arith.mulf %163, %167 : vector<32x32xf32>
    %169 = vector.broadcast %148 : vector<1x32xf32> to vector<32x32xf32>
    %170 = arith.mulf %168, %169 : vector<32x32xf32>
    %171 = vector.broadcast %150 : vector<1x32xf32> to vector<32x32xf32>
    %172 = arith.addf %170, %171 : vector<32x32xf32>
    %c1_75 = arith.constant 1 : index
    %c0_76 = arith.constant 0 : index
    %c0_77 = arith.constant 0 : index
    %173 = vector.load %arg6[%c1_75, %c0_76, %c0_77] : memref<2x96x32xf32, #tpu.memory_space<vmem>>, vector<1x96x32xf32>
    %174 = vector.shape_cast %173 : vector<1x96x32xf32> to vector<96x32xf32>
    %c1_78 = arith.constant 1 : index
    %c0_79 = arith.constant 0 : index
    %c0_80 = arith.constant 0 : index
    %175 = vector.load %arg7[%c1_78, %c0_79, %c0_80] : memref<2x1x96xf32, #tpu.memory_space<vmem>>, vector<1x1x96xf32>
    %176 = vector.shape_cast %175 : vector<1x1x96xf32> to vector<1x96xf32>
    %cst_81 = arith.constant dense<0.000000e+00> : vector<32x96xf32>
    %177 = tpu.matmul %172, %174, %cst_81 {dimension_numbers = #tpu.dot_dimension_numbers<[1], [1], [0], [0], [0, 0, 1, 0], [], []>} : vector<32x32xf32>, vector<96x32xf32>, vector<32x96xf32> -> vector<32x96xf32>
    %178 = vector.broadcast %176 : vector<1x96xf32> to vector<32x96xf32>
    %179 = arith.addf %177, %178 : vector<32x96xf32>
    %180 = vector.extract_strided_slice %179 {offsets = [0, 0], sizes = [32, 32], strides = [1, 1]} : vector<32x96xf32> to vector<32x32xf32>
    %181 = vector.shape_cast %180 : vector<32x32xf32> to vector<2x16x32xf32>
    %182 = vector.extract_strided_slice %179 {offsets = [0, 32], sizes = [32, 32], strides = [1, 1]} : vector<32x96xf32> to vector<32x32xf32>
    %183 = vector.shape_cast %182 : vector<32x32xf32> to vector<2x16x32xf32>
    %184 = vector.extract_strided_slice %179 {offsets = [0, 64], sizes = [32, 32], strides = [1, 1]} : vector<32x96xf32> to vector<32x32xf32>
    %185 = vector.shape_cast %184 : vector<32x32xf32> to vector<2x16x32xf32>
    %186 = vector.shape_cast %181 : vector<2x16x32xf32> to vector<2x1x16x32xf32>
    %187 = vector.shape_cast %5 : vector<4x32xf32> to vector<1x4x1x32xf32>
    %188 = vector.broadcast %186 : vector<2x1x16x32xf32> to vector<2x4x16x32xf32>
    %189 = vector.broadcast %187 : vector<1x4x1x32xf32> to vector<2x4x16x32xf32>
    %190 = arith.mulf %188, %189 : vector<2x4x16x32xf32>
    %191 = vector.shape_cast %190 : vector<2x4x16x32xf32> to vector<2x64x32xf32>
    %cst_82 = arith.constant dense<0.000000e+00> : vector<2x64x16xf32>
    %192 = tpu.matmul %191, %183, %cst_82 {dimension_numbers = #tpu.dot_dimension_numbers<[2], [2], [1], [1], [0, 0, 0, 1, 1, 1], [0], [0]>} : vector<2x64x32xf32>, vector<2x16x32xf32>, vector<2x64x16xf32> -> vector<2x64x16xf32>
    %cst_83 = arith.constant 0.353553385 : f32
    %193 = vector.broadcast %cst_83 : f32 to vector<2x64x16xf32>
    %194 = arith.mulf %192, %193 : vector<2x64x16xf32>
    %cst_84 = arith.constant dense<0xFF800000> : vector<2x64xf32>
    %195 = vector.multi_reduction <maximumf>, %194, %cst_84 [2] : vector<2x64x16xf32> to vector<2x64xf32>
    %196 = vector.shape_cast %195 : vector<2x64xf32> to vector<2x64x1xf32>
    %197 = vector.broadcast %196 : vector<2x64x1xf32> to vector<2x64x16xf32>
    %198 = arith.subf %194, %197 : vector<2x64x16xf32>
    %199 = math.exp %198 : vector<2x64x16xf32>
    %cst_85 = arith.constant dense<0.000000e+00> : vector<2x64xf32>
    %200 = vector.multi_reduction <add>, %199, %cst_85 [2] : vector<2x64x16xf32> to vector<2x64xf32>
    %201 = vector.shape_cast %200 : vector<2x64xf32> to vector<2x64x1xf32>
    %202 = tpu.reciprocal %201 {approx = true} : vector<2x64x1xf32> -> vector<2x64x1xf32>
    %203 = vector.broadcast %202 : vector<2x64x1xf32> to vector<2x64x16xf32>
    %204 = arith.mulf %199, %203 : vector<2x64x16xf32>
    %205 = vector.shape_cast %185 : vector<2x16x32xf32> to vector<2x1x16x32xf32>
    %206 = vector.shape_cast %5 : vector<4x32xf32> to vector<1x4x1x32xf32>
    %207 = vector.broadcast %205 : vector<2x1x16x32xf32> to vector<2x4x16x32xf32>
    %208 = vector.broadcast %206 : vector<1x4x1x32xf32> to vector<2x4x16x32xf32>
    %209 = arith.mulf %207, %208 : vector<2x4x16x32xf32>
    %210 = vector.shape_cast %209 : vector<2x4x16x32xf32> to vector<8x16x32xf32>
    %211 = vector.shape_cast %204 : vector<2x64x16xf32> to vector<8x16x16xf32>
    %cst_86 = arith.constant dense<0.000000e+00> : vector<8x16x32xf32>
    %212 = tpu.matmul %211, %210, %cst_86 {dimension_numbers = #tpu.dot_dimension_numbers<[2], [1], [1], [2], [0, 0, 0, 1, 1, 2], [0], [0]>} : vector<8x16x16xf32>, vector<8x16x32xf32>, vector<8x16x32xf32> -> vector<8x16x32xf32>
    %213 = vector.shape_cast %212 : vector<8x16x32xf32> to vector<2x4x16x32xf32>
    %214 = vector.extract_strided_slice %213 {offsets = [0, 0, 0, 0], sizes = [2, 1, 16, 32], strides = [1, 1, 1, 1]} : vector<2x4x16x32xf32> to vector<2x1x16x32xf32>
    %215 = vector.shape_cast %214 : vector<2x1x16x32xf32> to vector<2x16x32xf32>
    %216 = vector.extract_strided_slice %213 {offsets = [0, 1, 0, 0], sizes = [2, 1, 16, 32], strides = [1, 1, 1, 1]} : vector<2x4x16x32xf32> to vector<2x1x16x32xf32>
    %217 = vector.shape_cast %216 : vector<2x1x16x32xf32> to vector<2x16x32xf32>
    %218 = arith.addf %215, %217 : vector<2x16x32xf32>
    %219 = vector.extract_strided_slice %213 {offsets = [0, 2, 0, 0], sizes = [2, 1, 16, 32], strides = [1, 1, 1, 1]} : vector<2x4x16x32xf32> to vector<2x1x16x32xf32>
    %220 = vector.shape_cast %219 : vector<2x1x16x32xf32> to vector<2x16x32xf32>
    %221 = arith.addf %218, %220 : vector<2x16x32xf32>
    %222 = vector.extract_strided_slice %213 {offsets = [0, 3, 0, 0], sizes = [2, 1, 16, 32], strides = [1, 1, 1, 1]} : vector<2x4x16x32xf32> to vector<2x1x16x32xf32>
    %223 = vector.shape_cast %222 : vector<2x1x16x32xf32> to vector<2x16x32xf32>
    %224 = arith.addf %221, %223 : vector<2x16x32xf32>
    %225 = vector.shape_cast %224 : vector<2x16x32xf32> to vector<32x32xf32>
    %c1_87 = arith.constant 1 : index
    %c0_88 = arith.constant 0 : index
    %c0_89 = arith.constant 0 : index
    %226 = vector.load %arg8[%c1_87, %c0_88, %c0_89] : memref<2x32x32xf32, #tpu.memory_space<vmem>>, vector<1x32x32xf32>
    %227 = vector.shape_cast %226 : vector<1x32x32xf32> to vector<32x32xf32>
    %c1_90 = arith.constant 1 : index
    %c0_91 = arith.constant 0 : index
    %c0_92 = arith.constant 0 : index
    %228 = vector.load %arg9[%c1_90, %c0_91, %c0_92] : memref<2x1x32xf32, #tpu.memory_space<vmem>>, vector<1x1x32xf32>
    %229 = vector.shape_cast %228 : vector<1x1x32xf32> to vector<1x32xf32>
    %cst_93 = arith.constant dense<0.000000e+00> : vector<32x32xf32>
    %230 = tpu.matmul %225, %227, %cst_93 {dimension_numbers = #tpu.dot_dimension_numbers<[1], [1], [0], [0], [0, 0, 1, 0], [], []>} : vector<32x32xf32>, vector<32x32xf32>, vector<32x32xf32> -> vector<32x32xf32>
    %231 = vector.broadcast %229 : vector<1x32xf32> to vector<32x32xf32>
    %232 = arith.addf %230, %231 : vector<32x32xf32>
    %233 = arith.addf %146, %232 : vector<32x32xf32>
    %c1_94 = arith.constant 1 : index
    %c0_95 = arith.constant 0 : index
    %c0_96 = arith.constant 0 : index
    %234 = vector.load %arg10[%c1_94, %c0_95, %c0_96] : memref<2x1x32xf32, #tpu.memory_space<vmem>>, vector<1x1x32xf32>
    %235 = vector.shape_cast %234 : vector<1x1x32xf32> to vector<1x32xf32>
    %c1_97 = arith.constant 1 : index
    %c0_98 = arith.constant 0 : index
    %c0_99 = arith.constant 0 : index
    %236 = vector.load %arg11[%c1_97, %c0_98, %c0_99] : memref<2x1x32xf32, #tpu.memory_space<vmem>>, vector<1x1x32xf32>
    %237 = vector.shape_cast %236 : vector<1x1x32xf32> to vector<1x32xf32>
    %cst_100 = arith.constant dense<0.000000e+00> : vector<32xf32>
    %238 = vector.multi_reduction <add>, %233, %cst_100 [1] : vector<32x32xf32> to vector<32xf32>
    %239 = vector.shape_cast %238 : vector<32xf32> to vector<32x1xf32>
    %cst_101 = arith.constant 3.200000e+01 : f32
    %240 = vector.broadcast %cst_101 : f32 to vector<32x1xf32>
    %241 = arith.divf %239, %240 : vector<32x1xf32>
    %242 = arith.mulf %233, %233 : vector<32x32xf32>
    %cst_102 = arith.constant dense<0.000000e+00> : vector<32xf32>
    %243 = vector.multi_reduction <add>, %242, %cst_102 [1] : vector<32x32xf32> to vector<32xf32>
    %244 = vector.shape_cast %243 : vector<32xf32> to vector<32x1xf32>
    %cst_103 = arith.constant 3.200000e+01 : f32
    %245 = vector.broadcast %cst_103 : f32 to vector<32x1xf32>
    %246 = arith.divf %244, %245 : vector<32x1xf32>
    %247 = arith.mulf %241, %241 : vector<32x1xf32>
    %248 = arith.subf %246, %247 : vector<32x1xf32>
    %249 = vector.broadcast %241 : vector<32x1xf32> to vector<32x32xf32>
    %250 = arith.subf %233, %249 : vector<32x32xf32>
    %cst_104 = arith.constant 9.99999974E-6 : f32
    %251 = vector.broadcast %cst_104 : f32 to vector<32x1xf32>
    %252 = arith.addf %248, %251 : vector<32x1xf32>
    %253 = math.rsqrt %252 : vector<32x1xf32>
    %254 = vector.broadcast %253 : vector<32x1xf32> to vector<32x32xf32>
    %255 = arith.mulf %250, %254 : vector<32x32xf32>
    %256 = vector.broadcast %235 : vector<1x32xf32> to vector<32x32xf32>
    %257 = arith.mulf %255, %256 : vector<32x32xf32>
    %258 = vector.broadcast %237 : vector<1x32xf32> to vector<32x32xf32>
    %259 = arith.addf %257, %258 : vector<32x32xf32>
    %c1_105 = arith.constant 1 : index
    %c0_106 = arith.constant 0 : index
    %c0_107 = arith.constant 0 : index
    %260 = vector.load %arg12[%c1_105, %c0_106, %c0_107] : memref<2x64x32xf32, #tpu.memory_space<vmem>>, vector<1x64x32xf32>
    %261 = vector.shape_cast %260 : vector<1x64x32xf32> to vector<64x32xf32>
    %c1_108 = arith.constant 1 : index
    %c0_109 = arith.constant 0 : index
    %c0_110 = arith.constant 0 : index
    %262 = vector.load %arg13[%c1_108, %c0_109, %c0_110] : memref<2x1x64xf32, #tpu.memory_space<vmem>>, vector<1x1x64xf32>
    %263 = vector.shape_cast %262 : vector<1x1x64xf32> to vector<1x64xf32>
    %cst_111 = arith.constant dense<0.000000e+00> : vector<32x64xf32>
    %264 = tpu.matmul %259, %261, %cst_111 {dimension_numbers = #tpu.dot_dimension_numbers<[1], [1], [0], [0], [0, 0, 1, 0], [], []>} : vector<32x32xf32>, vector<64x32xf32>, vector<32x64xf32> -> vector<32x64xf32>
    %265 = vector.broadcast %263 : vector<1x64xf32> to vector<32x64xf32>
    %266 = arith.addf %264, %265 : vector<32x64xf32>
    %cst_112 = arith.constant 5.000000e-01 : f32
    %267 = vector.broadcast %cst_112 : f32 to vector<32x64xf32>
    %268 = arith.mulf %267, %266 : vector<32x64xf32>
    %cst_113 = arith.constant 4.471500e-02 : f32
    %269 = vector.broadcast %cst_113 : f32 to vector<32x64xf32>
    %270 = arith.mulf %269, %266 : vector<32x64xf32>
    %271 = arith.mulf %270, %266 : vector<32x64xf32>
    %272 = arith.mulf %271, %266 : vector<32x64xf32>
    %273 = arith.addf %266, %272 : vector<32x64xf32>
    %cst_114 = arith.constant 0.797884583 : f32
    %274 = vector.broadcast %cst_114 : f32 to vector<32x64xf32>
    %275 = arith.mulf %274, %273 : vector<32x64xf32>
    %276 = math.tanh %275 : vector<32x64xf32>
    %cst_115 = arith.constant 1.000000e+00 : f32
    %277 = vector.broadcast %cst_115 : f32 to vector<32x64xf32>
    %278 = arith.addf %277, %276 : vector<32x64xf32>
    %279 = arith.mulf %268, %278 : vector<32x64xf32>
    %c1_116 = arith.constant 1 : index
    %c0_117 = arith.constant 0 : index
    %c0_118 = arith.constant 0 : index
    %280 = vector.load %arg14[%c1_116, %c0_117, %c0_118] : memref<2x32x64xf32, #tpu.memory_space<vmem>>, vector<1x32x64xf32>
    %281 = vector.shape_cast %280 : vector<1x32x64xf32> to vector<32x64xf32>
    %c1_119 = arith.constant 1 : index
    %c0_120 = arith.constant 0 : index
    %c0_121 = arith.constant 0 : index
    %282 = vector.load %arg15[%c1_119, %c0_120, %c0_121] : memref<2x1x32xf32, #tpu.memory_space<vmem>>, vector<1x1x32xf32>
    %283 = vector.shape_cast %282 : vector<1x1x32xf32> to vector<1x32xf32>
    %cst_122 = arith.constant dense<0.000000e+00> : vector<32x32xf32>
    %284 = tpu.matmul %279, %281, %cst_122 {dimension_numbers = #tpu.dot_dimension_numbers<[1], [1], [0], [0], [0, 0, 1, 0], [], []>} : vector<32x64xf32>, vector<32x64xf32>, vector<32x32xf32> -> vector<32x32xf32>
    %285 = vector.broadcast %283 : vector<1x32xf32> to vector<32x32xf32>
    %286 = arith.addf %284, %285 : vector<32x32xf32>
    %287 = arith.addf %233, %286 : vector<32x32xf32>
    %288 = vector.shape_cast %287 : vector<32x32xf32> to vector<2x16x32xf32>
    %289 = vector.extract_strided_slice %288 {offsets = [0, 0, 0], sizes = [2, 1, 32], strides = [1, 1, 1]} : vector<2x16x32xf32> to vector<2x1x32xf32>
    %290 = vector.shape_cast %289 : vector<2x1x32xf32> to vector<2x32xf32>
    %c0_123 = arith.constant 0 : index
    %c0_124 = arith.constant 0 : index
    %291 = vector.load %arg16[%c0_123, %c0_124] : memref<1x32xf32, #tpu.memory_space<vmem>>, vector<1x32xf32>
    %c0_125 = arith.constant 0 : index
    %c0_126 = arith.constant 0 : index
    %292 = vector.load %arg17[%c0_125, %c0_126] : memref<1x32xf32, #tpu.memory_space<vmem>>, vector<1x32xf32>
    %cst_127 = arith.constant dense<0.000000e+00> : vector<2xf32>
    %293 = vector.multi_reduction <add>, %290, %cst_127 [1] : vector<2x32xf32> to vector<2xf32>
    %294 = vector.shape_cast %293 : vector<2xf32> to vector<2x1xf32>
    %cst_128 = arith.constant 3.200000e+01 : f32
    %295 = vector.broadcast %cst_128 : f32 to vector<2x1xf32>
    %296 = arith.divf %294, %295 : vector<2x1xf32>
    %297 = arith.mulf %290, %290 : vector<2x32xf32>
    %cst_129 = arith.constant dense<0.000000e+00> : vector<2xf32>
    %298 = vector.multi_reduction <add>, %297, %cst_129 [1] : vector<2x32xf32> to vector<2xf32>
    %299 = vector.shape_cast %298 : vector<2xf32> to vector<2x1xf32>
    %cst_130 = arith.constant 3.200000e+01 : f32
    %300 = vector.broadcast %cst_130 : f32 to vector<2x1xf32>
    %301 = arith.divf %299, %300 : vector<2x1xf32>
    %302 = arith.mulf %296, %296 : vector<2x1xf32>
    %303 = arith.subf %301, %302 : vector<2x1xf32>
    %304 = vector.broadcast %296 : vector<2x1xf32> to vector<2x32xf32>
    %305 = arith.subf %290, %304 : vector<2x32xf32>
    %cst_131 = arith.constant 9.99999974E-6 : f32
    %306 = vector.broadcast %cst_131 : f32 to vector<2x1xf32>
    %307 = arith.addf %303, %306 : vector<2x1xf32>
    %308 = math.rsqrt %307 : vector<2x1xf32>
    %309 = vector.broadcast %308 : vector<2x1xf32> to vector<2x32xf32>
    %310 = arith.mulf %305, %309 : vector<2x32xf32>
    %311 = vector.broadcast %291 : vector<1x32xf32> to vector<2x32xf32>
    %312 = arith.mulf %310, %311 : vector<2x32xf32>
    %313 = vector.broadcast %292 : vector<1x32xf32> to vector<2x32xf32>
    %314 = arith.addf %312, %313 : vector<2x32xf32>
    %c0_132 = arith.constant 0 : index
    %c0_133 = arith.constant 0 : index
    %315 = vector.load %arg18[%c0_132, %c0_133] : memref<2x32xf32, #tpu.memory_space<vmem>>, vector<2x32xf32>
    tpu.vector_store %arg18[%c0_132, %c0_133], %314 {strides = array<i32>} : memref<2x32xf32, #tpu.memory_space<vmem>>, vector<2x32xf32>,
    return
  }
  func.func @transform_0(%arg0: i32) -> (i32, i32, i32) {
    %c0_i32 = arith.constant 0 : i32
    %c0_i32_0 = arith.constant 0 : i32
    %c0_i32_1 = arith.constant 0 : i32
    %c0_i32_2 = arith.constant 0 : i32
    return %c0_i32, %c0_i32_0, %c0_i32_1 : i32, i32, i32
  }
  func.func @transform_1(%arg0: i32) -> (i32, i32, i32) {
    %c0_i32 = arith.constant 0 : i32
    %c0_i32_0 = arith.constant 0 : i32
    %c0_i32_1 = arith.constant 0 : i32
    %c0_i32_2 = arith.constant 0 : i32
    return %c0_i32, %c0_i32_0, %c0_i32_1 : i32, i32, i32
  }
  func.func @transform_2(%arg0: i32) -> (i32, i32) {
    %c0_i32 = arith.constant 0 : i32
    %c0_i32_0 = arith.constant 0 : i32
    %c0_i32_1 = arith.constant 0 : i32
    return %c0_i32, %c0_i32_0 : i32, i32
  }
  func.func @transform_3(%arg0: i32) -> (i32, i32, i32) {
    %c0_i32 = arith.constant 0 : i32
    %c0_i32_0 = arith.constant 0 : i32
    %c0_i32_1 = arith.constant 0 : i32
    %c0_i32_2 = arith.constant 0 : i32
    return %c0_i32, %c0_i32_0, %c0_i32_1 : i32, i32, i32
  }
  func.func @transform_4(%arg0: i32) -> (i32, i32, i32) {
    %c0_i32 = arith.constant 0 : i32
    %c0_i32_0 = arith.constant 0 : i32
    %c0_i32_1 = arith.constant 0 : i32
    %c0_i32_2 = arith.constant 0 : i32
    return %c0_i32, %c0_i32_0, %c0_i32_1 : i32, i32, i32
  }
  func.func @transform_5(%arg0: i32) -> (i32, i32, i32) {
    %c0_i32 = arith.constant 0 : i32
    %c0_i32_0 = arith.constant 0 : i32
    %c0_i32_1 = arith.constant 0 : i32
    %c0_i32_2 = arith.constant 0 : i32
    return %c0_i32, %c0_i32_0, %c0_i32_1 : i32, i32, i32
  }
  func.func @transform_6(%arg0: i32) -> (i32, i32, i32) {
    %c0_i32 = arith.constant 0 : i32
    %c0_i32_0 = arith.constant 0 : i32
    %c0_i32_1 = arith.constant 0 : i32
    %c0_i32_2 = arith.constant 0 : i32
    return %c0_i32, %c0_i32_0, %c0_i32_1 : i32, i32, i32
  }
  func.func @transform_7(%arg0: i32) -> (i32, i32, i32) {
    %c0_i32 = arith.constant 0 : i32
    %c0_i32_0 = arith.constant 0 : i32
    %c0_i32_1 = arith.constant 0 : i32
    %c0_i32_2 = arith.constant 0 : i32
    return %c0_i32, %c0_i32_0, %c0_i32_1 : i32, i32, i32
  }
  func.func @transform_8(%arg0: i32) -> (i32, i32, i32) {
    %c0_i32 = arith.constant 0 : i32
    %c0_i32_0 = arith.constant 0 : i32
    %c0_i32_1 = arith.constant 0 : i32
    %c0_i32_2 = arith.constant 0 : i32
    return %c0_i32, %c0_i32_0, %c0_i32_1 : i32, i32, i32
  }
  func.func @transform_9(%arg0: i32) -> (i32, i32, i32) {
    %c0_i32 = arith.constant 0 : i32
    %c0_i32_0 = arith.constant 0 : i32
    %c0_i32_1 = arith.constant 0 : i32
    %c0_i32_2 = arith.constant 0 : i32
    return %c0_i32, %c0_i32_0, %c0_i32_1 : i32, i32, i32
  }
  func.func @transform_10(%arg0: i32) -> (i32, i32, i32) {
    %c0_i32 = arith.constant 0 : i32
    %c0_i32_0 = arith.constant 0 : i32
    %c0_i32_1 = arith.constant 0 : i32
    %c0_i32_2 = arith.constant 0 : i32
    return %c0_i32, %c0_i32_0, %c0_i32_1 : i32, i32, i32
  }
  func.func @transform_11(%arg0: i32) -> (i32, i32, i32) {
    %c0_i32 = arith.constant 0 : i32
    %c0_i32_0 = arith.constant 0 : i32
    %c0_i32_1 = arith.constant 0 : i32
    %c0_i32_2 = arith.constant 0 : i32
    return %c0_i32, %c0_i32_0, %c0_i32_1 : i32, i32, i32
  }
  func.func @transform_12(%arg0: i32) -> (i32, i32, i32) {
    %c0_i32 = arith.constant 0 : i32
    %c0_i32_0 = arith.constant 0 : i32
    %c0_i32_1 = arith.constant 0 : i32
    %c0_i32_2 = arith.constant 0 : i32
    return %c0_i32, %c0_i32_0, %c0_i32_1 : i32, i32, i32
  }
  func.func @transform_13(%arg0: i32) -> (i32, i32, i32) {
    %c0_i32 = arith.constant 0 : i32
    %c0_i32_0 = arith.constant 0 : i32
    %c0_i32_1 = arith.constant 0 : i32
    %c0_i32_2 = arith.constant 0 : i32
    return %c0_i32, %c0_i32_0, %c0_i32_1 : i32, i32, i32
  }
  func.func @transform_14(%arg0: i32) -> (i32, i32, i32) {
    %c0_i32 = arith.constant 0 : i32
    %c0_i32_0 = arith.constant 0 : i32
    %c0_i32_1 = arith.constant 0 : i32
    %c0_i32_2 = arith.constant 0 : i32
    return %c0_i32, %c0_i32_0, %c0_i32_1 : i32, i32, i32
  }
  func.func @transform_15(%arg0: i32) -> (i32, i32) {
    %c0_i32 = arith.constant 0 : i32
    %c0_i32_0 = arith.constant 0 : i32
    %c0_i32_1 = arith.constant 0 : i32
    return %c0_i32, %c0_i32_0 : i32, i32
  }
  func.func @transform_16(%arg0: i32) -> (i32, i32) {
    %c0_i32 = arith.constant 0 : i32
    %c0_i32_0 = arith.constant 0 : i32
    %c0_i32_1 = arith.constant 0 : i32
    return %c0_i32, %c0_i32_0 : i32, i32
  }
  func.func @transform_17(%arg0: i32) -> (i32, i32) {
    %c0_i32 = arith.constant 0 : i32
    %c0_i32_0 = arith.constant 0 : i32
    %c0_i32_1 = arith.constant 0 : i32
    return %c0_i32, %c0_i32_0 : i32, i32
  }
}

</mosaic_0001>

<llo_original>
// kernel: tpu_custom_call.1
$region0: #{tpu_custom_call.1}
  #allocation0 [shape = 'u32[]', space=smem, size = 0x4, offset = 0x4, fixed_abs, tag = 'smem constant byte address 0x4 - core index']
  #allocation1 [shape = 'u32[144,128]{1,0:T(1,128)}', space=vmem, size = 0x12000, scoped, tag = 'internal scratch']
  %s0 = inlined_call_operand.vmem [shape: f32[2,16,32], index: 0, kind: input, shape index: {}]
  %s1 = inlined_call_operand.vmem [shape: f32[1,16,32], index: 1, kind: input, shape index: {}]
  %s2 = inlined_call_operand.vmem [shape: f32[4,32], index: 2, kind: input, shape index: {}]
  %s3 = inlined_call_operand.vmem [shape: f32[2,1,32], index: 3, kind: input, shape index: {}]
  %s4 = inlined_call_operand.vmem [shape: f32[2,1,32], index: 4, kind: input, shape index: {}]
  %s5 = inlined_call_operand.vmem [shape: f32[2,96,32], index: 5, kind: input, shape index: {}]
  %s6 = inlined_call_operand.vmem [shape: f32[2,1,96], index: 6, kind: input, shape index: {}]
  %s7 = inlined_call_operand.vmem [shape: f32[2,32,32], index: 7, kind: input, shape index: {}]
  %s8 = inlined_call_operand.vmem [shape: f32[2,1,32], index: 8, kind: input, shape index: {}]
  %s9 = inlined_call_operand.vmem [shape: f32[2,1,32], index: 9, kind: input, shape index: {}]
  %s10 = inlined_call_operand.vmem [shape: f32[2,1,32], index: 10, kind: input, shape index: {}]
  %s11 = inlined_call_operand.vmem [shape: f32[2,64,32], index: 11, kind: input, shape index: {}]
  %s12 = inlined_call_operand.vmem [shape: f32[2,1,64], index: 12, kind: input, shape index: {}]
  %s13 = inlined_call_operand.vmem [shape: f32[2,32,64], index: 13, kind: input, shape index: {}]
  %s14 = inlined_call_operand.vmem [shape: f32[2,1,32], index: 14, kind: input, shape index: {}]
  %s15 = inlined_call_operand.vmem [shape: f32[1,32], index: 15, kind: input, shape index: {}]
  %s16 = inlined_call_operand.vmem [shape: f32[1,32], index: 16, kind: input, shape index: {}]
  %s17 = inlined_call_operand.hbm [shape: f32[2,32], index: 17, kind: output, shape index: {}]
  %s18 = sld [smem:[#allocation0]]
  $region78: #{tpu_custom_call.1} parent=0
    _
  %s20 = ssub.s32 1, %s18
  %s21 = scalar_select 0, %s20, %s18
  $region1: #{tpu_custom_call.1} parent=0
    #allocation2 [shape = 'u8[1024]{0}', space=vmem, size = 0x400, scoped, tag = 'output window, operand 0, single buffered']
    #allocation3 [shape = 's32[1]{0}', space=sflag, size = 0x4, scoped, tag = 'scoped memory for tpu_custom_call.1']
    %22 = vsyncpa [#allocation3], 0
    // Predicated region
    $region2: #{tpu_custom_call.1} parent=1 // pred_check
      _
    $region3: #{tpu_custom_call.1} parent=1 // pred_check_branch
      %24 = sbr.rel (0) target = $region5
    $region4: #{tpu_custom_call.1} parent=1 // pred_region
      _
    $region5: #{tpu_custom_call.1} parent=1 // pred_fallthru
      _
    // Predicated region
    $region6: #{tpu_custom_call.1} parent=1 // pred_check
      _
    $region7: #{tpu_custom_call.1} parent=1 // pred_check_branch
      %26 = sbr.rel (0) target = $region9
    $region8: #{tpu_custom_call.1} parent=1 // pred_region
      _
    $region9: #{tpu_custom_call.1} parent=1 // pred_fallthru
      _
    // Predicated region
    $region10: #{tpu_custom_call.1} parent=1 // pred_check
      _
    $region11: #{tpu_custom_call.1} parent=1 // pred_check_branch
      %28 = sbr.rel (0) target = $region13
    $region12: #{tpu_custom_call.1} parent=1 // pred_region
      _
    $region13: #{tpu_custom_call.1} parent=1 // pred_fallthru
      _
    // Predicated region
    $region14: #{tpu_custom_call.1} parent=1 // pred_check
      _
    $region15: #{tpu_custom_call.1} parent=1 // pred_check_branch
      %30 = sbr.rel (0) target = $region17
    $region16: #{tpu_custom_call.1} parent=1 // pred_region
      _
    $region17: #{tpu_custom_call.1} parent=1 // pred_fallthru
      _
    // Predicated region
    $region18: #{tpu_custom_call.1} parent=1 // pred_check
      _
    $region19: #{tpu_custom_call.1} parent=1 // pred_check_branch
      %32 = sbr.rel (0) target = $region21
    $region20: #{tpu_custom_call.1} parent=1 // pred_region
      _
    $region21: #{tpu_custom_call.1} parent=1 // pred_fallthru
      _
    // Predicated region
    $region22: #{tpu_custom_call.1} parent=1 // pred_check
      _
    $region23: #{tpu_custom_call.1} parent=1 // pred_check_branch
      %34 = sbr.rel (0) target = $region25
    $region24: #{tpu_custom_call.1} parent=1 // pred_region
      _
    $region25: #{tpu_custom_call.1} parent=1 // pred_fallthru
      _
    // Predicated region
    $region26: #{tpu_custom_call.1} parent=1 // pred_check
      _
    $region27: #{tpu_custom_call.1} parent=1 // pred_check_branch
      %36 = sbr.rel (0) target = $region29
    $region28: #{tpu_custom_call.1} parent=1 // pred_region
      _
    $region29: #{tpu_custom_call.1} parent=1 // pred_fallthru
      _
    // Predicated region
    $region30: #{tpu_custom_call.1} parent=1 // pred_check
      _
    $region31: #{tpu_custom_call.1} parent=1 // pred_check_branch
      %38 = sbr.rel (0) target = $region33
    $region32: #{tpu_custom_call.1} parent=1 // pred_region
      _
    $region33: #{tpu_custom_call.1} parent=1 // pred_fallthru
      _
    // Predicated region
    $region34: #{tpu_custom_call.1} parent=1 // pred_check
      _
    $region35: #{tpu_custom_call.1} parent=1 // pred_check_branch
      %40 = sbr.rel (0) target = $region37
    $region36: #{tpu_custom_call.1} parent=1 // pred_region
      _
    $region37: #{tpu_custom_call.1} parent=1 // pred_fallthru
      _
    // Predicated region
    $region38: #{tpu_custom_call.1} parent=1 // pred_check
      _
    $region39: #{tpu_custom_call.1} parent=1 // pred_check_branch
      %42 = sbr.rel (0) target = $region41
    $region40: #{tpu_custom_call.1} parent=1 // pred_region
      _
    $region41: #{tpu_custom_call.1} parent=1 // pred_fallthru
      _
    // Predicated region
    $region42: #{tpu_custom_call.1} parent=1 // pred_check
      _
    $region43: #{tpu_custom_call.1} parent=1 // pred_check_branch
      %44 = sbr.rel (0) target = $region45
    $region44: #{tpu_custom_call.1} parent=1 // pred_region
      _
    $region45: #{tpu_custom_call.1} parent=1 // pred_fallthru
      _
    // Predicated region
    $region46: #{tpu_custom_call.1} parent=1 // pred_check
      _
    $region47: #{tpu_custom_call.1} parent=1 // pred_check_branch
      %46 = sbr.rel (0) target = $region49
    $region48: #{tpu_custom_call.1} parent=1 // pred_region
      _
    $region49: #{tpu_custom_call.1} parent=1 // pred_fallthru
      _
    // Predicated region
    $region50: #{tpu_custom_call.1} parent=1 // pred_check
      _
    $region51: #{tpu_custom_call.1} parent=1 // pred_check_branch
      %48 = sbr.rel (0) target = $region53
    $region52: #{tpu_custom_call.1} parent=1 // pred_region
      _
    $region53: #{tpu_custom_call.1} parent=1 // pred_fallthru
      _
    // Predicated region
    $region54: #{tpu_custom_call.1} parent=1 // pred_check
      _
    $region55: #{tpu_custom_call.1} parent=1 // pred_check_branch
      %50 = sbr.rel (0) target = $region57
    $region56: #{tpu_custom_call.1} parent=1 // pred_region
      _
    $region57: #{tpu_custom_call.1} parent=1 // pred_fallthru
      _
    // Predicated region
    $region58: #{tpu_custom_call.1} parent=1 // pred_check
      _
    $region59: #{tpu_custom_call.1} parent=1 // pred_check_branch
      %52 = sbr.rel (0) target = $region61
    $region60: #{tpu_custom_call.1} parent=1 // pred_region
      _
    $region61: #{tpu_custom_call.1} parent=1 // pred_fallthru
      _
    // Predicated region
    $region62: #{tpu_custom_call.1} parent=1 // pred_check
      _
    $region63: #{tpu_custom_call.1} parent=1 // pred_check_branch
      %54 = sbr.rel (0) target = $region65
    $region64: #{tpu_custom_call.1} parent=1 // pred_region
      _
    $region65: #{tpu_custom_call.1} parent=1 // pred_fallthru
      _
    // Predicated region
    $region66: #{tpu_custom_call.1} parent=1 // pred_check
      _
    $region67: #{tpu_custom_call.1} parent=1 // pred_check_branch
      %56 = sbr.rel (0) target = $region69
    $region68: #{tpu_custom_call.1} parent=1 // pred_region
      _
    $region69: #{tpu_custom_call.1} parent=1 // pred_fallthru
      _
    %v57 = vld [vmem:[%s0] sm:$0xff]
    %v58 = vld [vmem:[%s0 + $0x8] sm:$0xff]
    %v59 = vld [vmem:[%s0 + $0x10] sm:$0xff]
    %v60 = vld [vmem:[%s0 + $0x18] sm:$0xff]
    %v61 = vld [vmem:[%s1] sm:$0xff]
    %v62 = vld [vmem:[%s1 + $0x8] sm:$0xff]
    %v63 = vadd.f32 %v57, %v61
    %v64 = vadd.f32 %v58, %v62
    %v65 = vadd.f32 %v59, %v61
    %v66 = vadd.f32 %v60, %v62
    %v67 = vld [vmem:[%s2] sm:$0xf]
    %v68 = vld [vmem:[%s3] sm:$0x1]
    %v69 = vld [vmem:[%s4] sm:$0x1]
    %vm70 = vcmask 261120
    %v71 = vsel %vm70, %v63, 0.0
    %72 = vadd.xlane.f32.xlu0 %v71
    %v73 = vpop.xlane.xlu0 %72
    %v74 = vsel %vm70, %v64, 0.0
    %75 = vadd.xlane.f32.xlu0 %v74
    %v76 = vpop.xlane.xlu0 %75
    %v77 = vsel %vm70, %v65, 0.0
    %78 = vadd.xlane.f32.xlu0 %v77
    %v79 = vpop.xlane.xlu0 %78
    %v80 = vsel %vm70, %v66, 0.0
    %81 = vadd.xlane.f32.xlu0 %v80
    %v82 = vpop.xlane.xlu0 %81
    %v83 = vrcp.pop 32.0
    %v84 = vmul.f32 %v73, %v83
    %v85 = vmul.f32 %v76, %v83
    %v86 = vmul.f32 %v79, %v83
    %v87 = vmul.f32 %v82, %v83
    %v88 = vmul.f32 %v63, %v63
    %v89 = vmul.f32 %v64, %v64
    %v90 = vmul.f32 %v65, %v65
    %v91 = vmul.f32 %v66, %v66
    %v92 = vsel %vm70, %v88, 0.0
    %93 = vadd.xlane.f32.xlu0 %v92
    %v94 = vpop.xlane.xlu0 %93
    %v95 = vsel %vm70, %v89, 0.0
    %96 = vadd.xlane.f32.xlu0 %v95
    %v97 = vpop.xlane.xlu0 %96
    %v98 = vsel %vm70, %v90, 0.0
    %99 = vadd.xlane.f32.xlu0 %v98
    %v100 = vpop.xlane.xlu0 %99
    %v101 = vsel %vm70, %v91, 0.0
    %102 = vadd.xlane.f32.xlu0 %v101
    %v103 = vpop.xlane.xlu0 %102
    %v104 = vmul.f32 %v94, %v83
    %v105 = vmul.f32 %v97, %v83
    %v106 = vmul.f32 %v100, %v83
    %v107 = vmul.f32 %v103, %v83
    %v108 = vmul.f32 %v84, %v84
    %v109 = vmul.f32 %v85, %v85
    %v110 = vmul.f32 %v86, %v86
    %v111 = vmul.f32 %v87, %v87
    %v112 = vsub.f32 %v104, %v108
    %v113 = vsub.f32 %v105, %v109
    %v114 = vsub.f32 %v106, %v110
    %v115 = vsub.f32 %v107, %v111
    %v116 = vsub.f32 %v63, %v84
    %v117 = vsub.f32 %v64, %v85
    %v118 = vsub.f32 %v65, %v86
    %v119 = vsub.f32 %v66, %v87
    %v120 = vadd.f32 %v112, 1e-05
    %v121 = vadd.f32 %v113, 1e-05
    %v122 = vadd.f32 %v114, 1e-05
    %v123 = vadd.f32 %v115, 1e-05
    %v124 = vrsqrt.pop %v120
    %v125 = vrsqrt.pop %v121
    %v126 = vrsqrt.pop %v122
    %v127 = vrsqrt.pop %v123
    %v128 = vmul.f32 %v116, %v124
    %v129 = vmul.f32 %v117, %v125
    %v130 = vmul.f32 %v118, %v126
    %v131 = vmul.f32 %v119, %v127
    %v133 = vlaneseq
    %v134 = vshrl.u32 %v133, 7
    %v135 = vsub.s32 0, %v134
    %v136 = vrot.slane %v68, %v135
    %v138 = vmul.f32 %v128, %v136
    %v139 = vmul.f32 %v129, %v136
    %v140 = vmul.f32 %v130, %v136
    %v141 = vmul.f32 %v131, %v136
    %v143 = vlaneseq
    %v144 = vshrl.u32 %v143, 7
    %v145 = vsub.s32 0, %v144
    %v146 = vrot.slane %v69, %v145
    %v148 = vadd.f32 %v138, %v146
    %v149 = vadd.f32 %v139, %v146
    %v150 = vadd.f32 %v140, %v146
    %v151 = vadd.f32 %v141, %v146
    %v152 = vld [vmem:[%s5] sm:$0xff]
    %v153 = vld [vmem:[%s5 + $0x8] sm:$0xff]
    %v154 = vld [vmem:[%s5 + $0x10] sm:$0xff]
    %v155 = vld [vmem:[%s5 + $0x18] sm:$0xff]
    %v156 = vld [vmem:[%s5 + $0x20] sm:$0xff]
    %v157 = vld [vmem:[%s5 + $0x28] sm:$0xff]
    %v158 = vld [vmem:[%s5 + $0x30] sm:$0xff]
    %v159 = vld [vmem:[%s5 + $0x38] sm:$0xff]
    %v160 = vld [vmem:[%s5 + $0x40] sm:$0xff]
    %v161 = vld [vmem:[%s5 + $0x48] sm:$0xff]
    %v162 = vld [vmem:[%s5 + $0x50] sm:$0xff]
    %v163 = vld [vmem:[%s5 + $0x58] sm:$0xff]
    %v164 = vld [vmem:[%s6] sm:$0x1]
    %v166 = vlaneseq
    %v167 = vshrl.u32 %v166, 7
    %v168 = vsub.s32 0, %v167
    %v169 = vrot.slane %v164, %v168
    %v172 = vsel %vm70, %v148, 0
    %v175 = vsel %vm70, %v149, 0
    %v178 = vsel %vm70, %v150, 0
    %v181 = vsel %vm70, %v151, 0
    %v184 = vsel %vm70, %v152, 0
    %v187 = vsel %vm70, %v153, 0
    %v190 = vsel %vm70, %v154, 0
    %v193 = vsel %vm70, %v155, 0
    %v196 = vsel %vm70, %v156, 0
    %v199 = vsel %vm70, %v157, 0
    %v202 = vsel %vm70, %v158, 0
    %v205 = vsel %vm70, %v159, 0
    %v208 = vsel %vm70, %v160, 0
    %v211 = vsel %vm70, %v161, 0
    %v214 = vsel %vm70, %v162, 0
    %v217 = vsel %vm70, %v163, 0
    %219 = vmatprep.subr.mxu0 0.0
    %220 = vmatpush1.xpose.msra.mxu0 %v184
    %221 = vmatprep.subr.mxu0 0.0
    %222 = vmatpush1.xpose.msra.mxu0 %v187
    %223 = vmatprep.subr.mxu0 0.0
    %224 = vmatpush1.xpose.msra.mxu0 %v190
    %225 = vmatprep.subr.mxu0 0.0
    %226 = vmatpush1.xpose.msra.mxu0 %v193
    %227 = vmatprep.subr.mxu0 0.0
    %228 = vmatpush1.xpose.msra.mxu0 %v196
    %229 = vmatprep.subr.mxu0 0.0
    %230 = vmatpush1.xpose.msra.mxu0 %v199
    %231 = vmatprep.subr.mxu0 0.0
    %232 = vmatpush1.xpose.msra.mxu0 %v202
    %233 = vmatprep.subr.mxu0 0.0
    %234 = vmatpush1.xpose.msra.mxu0 %v205
    %235 = vmatprep.subr.mxu0 0.0
    %236 = vmatpush1.xpose.msra.mxu0 %v208
    %237 = vmatprep.subr.mxu0 0.0
    %238 = vmatpush1.xpose.msra.mxu0 %v211
    %239 = vmatprep.subr.mxu0 0.0
    %240 = vmatpush1.xpose.msra.mxu0 %v214
    %241 = vmatprep.subr.mxu0 0.0
    %242 = vmatpush1.xpose.msra.mxu0 %v217
    %243 = vmatprep.subr.mxu0 0.0
    %244 = vmatpush1.xpose.msra.mxu0 0.0
    %245 = vmatprep.subr.mxu0 0.0
    %246 = vmatpush1.xpose.msra.mxu0 0.0
    %247 = vmatprep.subr.mxu0 0.0
    %248 = vmatpush1.xpose.msra.mxu0 0.0
    %249 = vmatprep.subr.mxu0 0.0
    %250 = vmatpush1.xpose.msra.mxu0 0.0
    %251 = vmatprep.subr.mxu0 0.0
    %252 = vmatpush1.xpose.msra.mxu0 0.0
    %253 = vmatprep.subr.mxu0 0.0
    %254 = vmatpush1.xpose.msra.mxu0 0.0
    %255 = vmatprep.subr.mxu0 0.0
    %256 = vmatpush1.xpose.msra.mxu0 0.0
    %257 = vmatprep.subr.mxu0 0.0
    %258 = vmatpush1.xpose.msra.mxu0 0.0
    %259 = vmatprep.subr.mxu0 0.0
    %260 = vmatpush1.xpose.msra.mxu0 0.0
    %261 = vmatprep.subr.mxu0 0.0
    %262 = vmatpush1.xpose.msra.mxu0 0.0
    %263 = vmatprep.subr.mxu0 0.0
    %264 = vmatpush1.xpose.msra.mxu0 0.0
    %265 = vmatprep.subr.mxu0 0.0
    %266 = vmatpush1.xpose.msra.mxu0 0.0
    %267 = vmatprep.subr.mxu0 0.0
    %268 = vmatpush1.xpose.msra.mxu0 0.0
    %269 = vmatprep.subr.mxu0 0.0
    %270 = vmatpush1.xpose.msra.mxu0 0.0
    %271 = vmatprep.subr.mxu0 0.0
    %272 = vmatpush1.xpose.msra.mxu0 0.0
    %273 = vmatprep.subr.mxu0 0.0
    %274 = vmatpush1.xpose.msra.mxu0 0.0
    %275 = vmatprep.subr.mxu0 0.0
    %276 = vmatpush1.xpose.msra.mxu0 0.0
    %277 = vmatprep.subr.mxu0 0.0
    %278 = vmatpush1.xpose.msra.mxu0 0.0
    %279 = vmatprep.subr.mxu0 0.0
    %280 = vmatpush1.xpose.msra.mxu0 0.0
    %281 = vmatprep.subr.mxu0 0.0
    %282 = vmatpush1.xpose.msra.mxu0 0.0
    %283 = vmatprep.mubr.f32.mxu0 0.0
    %284 = vmatmul.mubr.f32.gmra.mrb[0].mxu0 %v172
    %v285 = vpop.f32.mrb[0].mxu0
    %v286 = vadd.f32 %v169, %v285
    %v287 = vpop.f32.mrb[0].mxu0
    %288 = vmatprep.mubr.f32.mxu0 0.0
    %289 = vmatmul.mubr.f32.gmra.mrb[0].mxu0 %v175
    %v290 = vpop.f32.mrb[0].mxu0
    %v291 = vadd.f32 %v169, %v290
    %v292 = vpop.f32.mrb[0].mxu0
    %293 = vmatprep.mubr.f32.mxu0 0.0
    %294 = vmatmul.mubr.f32.gmra.mrb[0].mxu0 %v178
    %v295 = vpop.f32.mrb[0].mxu0
    %v296 = vadd.f32 %v169, %v295
    %v297 = vpop.f32.mrb[0].mxu0
    %298 = vmatprep.mubr.f32.mxu0 0.0
    %299 = vmatmul.mubr.f32.gmra.mrb[0].mxu0 %v181
    %v300 = vpop.f32.mrb[0].mxu0
    %v301 = vadd.f32 %v169, %v300
    %v302 = vpop.f32.mrb[0].mxu0
    %303 = vdwg.mxu0
    %v306 = vunpack.c.l.s4 1966171168
    %v307 = vunpack.c.0.s8 %v306
    %v308 = vlaneseq
    %v309 = vshrl.u32 %v308, 7
    %v310 = vsub.s32 %v307, %v309
    %v311 = vrot.slane %v67, %v310
    %v312 = vcombine.high %v311, %v311
    %v314 = vunpack.c.l.s4 1966171168
    %v315 = vunpack.c.0.s8 %v314
    %v316 = vlaneseq
    %v317 = vshrl.u32 %v316, 7
    %v318 = vsub.s32 %v315, %v317
    %v319 = vrot.slane %v311, %v318
    %v321 = vunpack.c.l.s4 1966171168
    %v322 = vunpack.c.0.s8 %v321
    %v323 = vlaneseq
    %v324 = vshrl.u32 %v323, 7
    %v325 = vsub.s32 %v322, %v324
    %v326 = vrot.slane %v312, %v325
    %v327 = vcombine.high %v319, %v319
    %v328 = vcombine.high %v326, %v326
    %v329 = vlaneseq
    %v330 = vshrl.u32 %v329, 7
    %v331 = vsub.s32 0, %v330
    %v332 = vrot.slane %v319, %v331
    %v333 = vlaneseq
    %v334 = vshrl.u32 %v333, 7
    %v335 = vsub.s32 0, %v334
    %v336 = vrot.slane %v326, %v335
    %v337 = vlaneseq
    %v338 = vshrl.u32 %v337, 7
    %v339 = vsub.s32 0, %v338
    %v340 = vrot.slane %v327, %v339
    %v341 = vlaneseq
    %v342 = vshrl.u32 %v341, 7
    %v343 = vsub.s32 0, %v342
    %v344 = vrot.slane %v328, %v343
    %v349 = vmul.f32 %v286, %v332
    %v350 = vmul.f32 %v291, %v332
    %v351 = vmul.f32 %v286, %v336
    %v352 = vmul.f32 %v291, %v336
    %v353 = vmul.f32 %v286, %v340
    %v354 = vmul.f32 %v291, %v340
    %v355 = vmul.f32 %v286, %v344
    %v356 = vmul.f32 %v291, %v344
    %v357 = vmul.f32 %v296, %v332
    %v358 = vmul.f32 %v301, %v332
    %v359 = vmul.f32 %v296, %v336
    %v360 = vmul.f32 %v301, %v336
    %v361 = vmul.f32 %v296, %v340
    %v362 = vmul.f32 %v301, %v340
    %v363 = vmul.f32 %v296, %v344
    %v364 = vmul.f32 %v301, %v344
    %367 = vrot.lane.b32.xlu0 %v286, 96
    %v368 = vpop.permute.xlu0 %367
    %369 = vrot.lane.b32.xlu0 %v291, 96
    %v370 = vpop.permute.xlu0 %369
    %v372 = vsel %vm70, %v349, 0
    %v375 = vsel %vm70, %v350, 0
    %v378 = vsel %vm70, %v351, 0
    %v381 = vsel %vm70, %v352, 0
    %v384 = vsel %vm70, %v353, 0
    %v387 = vsel %vm70, %v354, 0
    %v390 = vsel %vm70, %v355, 0
    %v393 = vsel %vm70, %v356, 0
    %v395 = vsel %vm70, %v368, 0
    %v397 = vsel %vm70, %v370, 0
    %399 = vmatprep.subr.mxu0 0.0
    %400 = vmatpush1.xpose.msra.mxu0 %v395
    %401 = vmatprep.subr.mxu0 0.0
    %402 = vmatpush1.xpose.msra.mxu0 %v397
    %403 = vmatprep.subr.mxu0 0.0
    %404 = vmatpush1.xpose.msra.mxu0 0.0
    %405 = vmatprep.subr.mxu0 0.0
    %406 = vmatpush1.xpose.msra.mxu0 0.0
    %407 = vmatprep.subr.mxu0 0.0
    %408 = vmatpush1.xpose.msra.mxu0 0.0
    %409 = vmatprep.subr.mxu0 0.0
    %410 = vmatpush1.xpose.msra.mxu0 0.0
    %411 = vmatprep.subr.mxu0 0.0
    %412 = vmatpush1.xpose.msra.mxu0 0.0
    %413 = vmatprep.subr.mxu0 0.0
    %414 = vmatpush1.xpose.msra.mxu0 0.0
    %415 = vmatprep.subr.mxu0 0.0
    %416 = vmatpush1.xpose.msra.mxu0 0.0
    %417 = vmatprep.subr.mxu0 0.0
    %418 = vmatpush1.xpose.msra.mxu0 0.0
    %419 = vmatprep.subr.mxu0 0.0
    %420 = vmatpush1.xpose.msra.mxu0 0.0
    %421 = vmatprep.subr.mxu0 0.0
    %422 = vmatpush1.xpose.msra.mxu0 0.0
    %423 = vmatprep.subr.mxu0 0.0
    %424 = vmatpush1.xpose.msra.mxu0 0.0
    %425 = vmatprep.subr.mxu0 0.0
    %426 = vmatpush1.xpose.msra.mxu0 0.0
    %427 = vmatprep.subr.mxu0 0.0
    %428 = vmatpush1.xpose.msra.mxu0 0.0
    %429 = vmatprep.subr.mxu0 0.0
    %430 = vmatpush1.xpose.msra.mxu0 0.0
    %431 = vmatprep.subr.mxu0 0.0
    %432 = vmatpush1.xpose.msra.mxu0 0.0
    %433 = vmatprep.subr.mxu0 0.0
    %434 = vmatpush1.xpose.msra.mxu0 0.0
    %435 = vmatprep.subr.mxu0 0.0
    %436 = vmatpush1.xpose.msra.mxu0 0.0
    %437 = vmatprep.subr.mxu0 0.0
    %438 = vmatpush1.xpose.msra.mxu0 0.0
    %439 = vmatprep.subr.mxu0 0.0
    %440 = vmatpush1.xpose.msra.mxu0 0.0
    %441 = vmatprep.subr.mxu0 0.0
    %442 = vmatpush1.xpose.msra.mxu0 0.0
    %443 = vmatprep.subr.mxu0 0.0
    %444 = vmatpush1.xpose.msra.mxu0 0.0
    %445 = vmatprep.subr.mxu0 0.0
    %446 = vmatpush1.xpose.msra.mxu0 0.0
    %447 = vmatprep.subr.mxu0 0.0
    %448 = vmatpush1.xpose.msra.mxu0 0.0
    %449 = vmatprep.subr.mxu0 0.0
    %450 = vmatpush1.xpose.msra.mxu0 0.0
    %451 = vmatprep.subr.mxu0 0.0
    %452 = vmatpush1.xpose.msra.mxu0 0.0
    %453 = vmatprep.subr.mxu0 0.0
    %454 = vmatpush1.xpose.msra.mxu0 0.0
    %455 = vmatprep.subr.mxu0 0.0
    %456 = vmatpush1.xpose.msra.mxu0 0.0
    %457 = vmatprep.subr.mxu0 0.0
    %458 = vmatpush1.xpose.msra.mxu0 0.0
    %459 = vmatprep.subr.mxu0 0.0
    %460 = vmatpush1.xpose.msra.mxu0 0.0
    %461 = vmatprep.subr.mxu0 0.0
    %462 = vmatpush1.xpose.msra.mxu0 0.0
    %463 = vmatprep.mubr.f32.mxu0 0.0
    %464 = vmatmul.mubr.f32.gmra.mrb[0].mxu0 %v372
    %v465 = vpop.f32.mrb[0].mxu0
    %v466 = vadd.f32 0.0, %v465
    %v467 = vpop.f32.mrb[0].mxu0
    %468 = vmatprep.mubr.f32.mxu0 0.0
    %469 = vmatmul.mubr.f32.gmra.mrb[0].mxu0 %v375
    %v470 = vpop.f32.mrb[0].mxu0
    %v471 = vadd.f32 0.0, %v470
    %v472 = vpop.f32.mrb[0].mxu0
    %473 = vmatprep.mubr.f32.mxu0 0.0
    %474 = vmatmul.mubr.f32.gmra.mrb[0].mxu0 %v378
    %v475 = vpop.f32.mrb[0].mxu0
    %v476 = vadd.f32 0.0, %v475
    %v477 = vpop.f32.mrb[0].mxu0
    %478 = vmatprep.mubr.f32.mxu0 0.0
    %479 = vmatmul.mubr.f32.gmra.mrb[0].mxu0 %v381
    %v480 = vpop.f32.mrb[0].mxu0
    %v481 = vadd.f32 0.0, %v480
    %v482 = vpop.f32.mrb[0].mxu0
    %483 = vmatprep.mubr.f32.mxu0 0.0
    %484 = vmatmul.mubr.f32.gmra.mrb[0].mxu0 %v384
    %v485 = vpop.f32.mrb[0].mxu0
    %v486 = vadd.f32 0.0, %v485
    %v487 = vpop.f32.mrb[0].mxu0
    %488 = vmatprep.mubr.f32.mxu0 0.0
    %489 = vmatmul.mubr.f32.gmra.mrb[0].mxu0 %v387
    %v490 = vpop.f32.mrb[0].mxu0
    %v491 = vadd.f32 0.0, %v490
    %v492 = vpop.f32.mrb[0].mxu0
    %493 = vmatprep.mubr.f32.mxu0 0.0
    %494 = vmatmul.mubr.f32.gmra.mrb[0].mxu0 %v390
    %v495 = vpop.f32.mrb[0].mxu0
    %v496 = vadd.f32 0.0, %v495
    %v497 = vpop.f32.mrb[0].mxu0
    %498 = vmatprep.mubr.f32.mxu0 0.0
    %499 = vmatmul.mubr.f32.gmra.mrb[0].mxu0 %v393
    %v500 = vpop.f32.mrb[0].mxu0
    %v501 = vadd.f32 0.0, %v500
    %v502 = vpop.f32.mrb[0].mxu0
    %503 = vdwg.mxu0
    %506 = vrot.lane.b32.xlu0 %v296, 96
    %v507 = vpop.permute.xlu0 %506
    %508 = vrot.lane.b32.xlu0 %v301, 96
    %v509 = vpop.permute.xlu0 %508
    %v511 = vsel %vm70, %v357, 0
    %v514 = vsel %vm70, %v358, 0
    %v517 = vsel %vm70, %v359, 0
    %v520 = vsel %vm70, %v360, 0
    %v523 = vsel %vm70, %v361, 0
    %v526 = vsel %vm70, %v362, 0
    %v529 = vsel %vm70, %v363, 0
    %v532 = vsel %vm70, %v364, 0
    %v534 = vsel %vm70, %v507, 0
    %v536 = vsel %vm70, %v509, 0
    %538 = vmatprep.subr.mxu0 0.0
    %539 = vmatpush1.xpose.msra.mxu0 %v534
    %540 = vmatprep.subr.mxu0 0.0
    %541 = vmatpush1.xpose.msra.mxu0 %v536
    %542 = vmatprep.subr.mxu0 0.0
    %543 = vmatpush1.xpose.msra.mxu0 0.0
    %544 = vmatprep.subr.mxu0 0.0
    %545 = vmatpush1.xpose.msra.mxu0 0.0
    %546 = vmatprep.subr.mxu0 0.0
    %547 = vmatpush1.xpose.msra.mxu0 0.0
    %548 = vmatprep.subr.mxu0 0.0
    %549 = vmatpush1.xpose.msra.mxu0 0.0
    %550 = vmatprep.subr.mxu0 0.0
    %551 = vmatpush1.xpose.msra.mxu0 0.0
    %552 = vmatprep.subr.mxu0 0.0
    %553 = vmatpush1.xpose.msra.mxu0 0.0
    %554 = vmatprep.subr.mxu0 0.0
    %555 = vmatpush1.xpose.msra.mxu0 0.0
    %556 = vmatprep.subr.mxu0 0.0
    %557 = vmatpush1.xpose.msra.mxu0 0.0
    %558 = vmatprep.subr.mxu0 0.0
    %559 = vmatpush1.xpose.msra.mxu0 0.0
    %560 = vmatprep.subr.mxu0 0.0
    %561 = vmatpush1.xpose.msra.mxu0 0.0
    %562 = vmatprep.subr.mxu0 0.0
    %563 = vmatpush1.xpose.msra.mxu0 0.0
    %564 = vmatprep.subr.mxu0 0.0
    %565 = vmatpush1.xpose.msra.mxu0 0.0
    %566 = vmatprep.subr.mxu0 0.0
    %567 = vmatpush1.xpose.msra.mxu0 0.0
    %568 = vmatprep.subr.mxu0 0.0
    %569 = vmatpush1.xpose.msra.mxu0 0.0
    %570 = vmatprep.subr.mxu0 0.0
    %571 = vmatpush1.xpose.msra.mxu0 0.0
    %572 = vmatprep.subr.mxu0 0.0
    %573 = vmatpush1.xpose.msra.mxu0 0.0
    %574 = vmatprep.subr.mxu0 0.0
    %575 = vmatpush1.xpose.msra.mxu0 0.0
    %576 = vmatprep.subr.mxu0 0.0
    %577 = vmatpush1.xpose.msra.mxu0 0.0
    %578 = vmatprep.subr.mxu0 0.0
    %579 = vmatpush1.xpose.msra.mxu0 0.0
    %580 = vmatprep.subr.mxu0 0.0
    %581 = vmatpush1.xpose.msra.mxu0 0.0
    %582 = vmatprep.subr.mxu0 0.0
    %583 = vmatpush1.xpose.msra.mxu0 0.0
    %584 = vmatprep.subr.mxu0 0.0
    %585 = vmatpush1.xpose.msra.mxu0 0.0
    %586 = vmatprep.subr.mxu0 0.0
    %587 = vmatpush1.xpose.msra.mxu0 0.0
    %588 = vmatprep.subr.mxu0 0.0
    %589 = vmatpush1.xpose.msra.mxu0 0.0
    %590 = vmatprep.subr.mxu0 0.0
    %591 = vmatpush1.xpose.msra.mxu0 0.0
    %592 = vmatprep.subr.mxu0 0.0
    %593 = vmatpush1.xpose.msra.mxu0 0.0
    %594 = vmatprep.subr.mxu0 0.0
    %595 = vmatpush1.xpose.msra.mxu0 0.0
    %596 = vmatprep.subr.mxu0 0.0
    %597 = vmatpush1.xpose.msra.mxu0 0.0
    %598 = vmatprep.subr.mxu0 0.0
    %599 = vmatpush1.xpose.msra.mxu0 0.0
    %600 = vmatprep.subr.mxu0 0.0
    %601 = vmatpush1.xpose.msra.mxu0 0.0
    %602 = vmatprep.mubr.f32.mxu0 0.0
    %603 = vmatmul.mubr.f32.gmra.mrb[0].mxu0 %v511
    %v604 = vpop.f32.mrb[0].mxu0
    %v605 = vadd.f32 0.0, %v604
    %v606 = vpop.f32.mrb[0].mxu0
    %607 = vmatprep.mubr.f32.mxu0 0.0
    %608 = vmatmul.mubr.f32.gmra.mrb[0].mxu0 %v514
    %v609 = vpop.f32.mrb[0].mxu0
    %v610 = vadd.f32 0.0, %v609
    %v611 = vpop.f32.mrb[0].mxu0
    %612 = vmatprep.mubr.f32.mxu0 0.0
    %613 = vmatmul.mubr.f32.gmra.mrb[0].mxu0 %v517
    %v614 = vpop.f32.mrb[0].mxu0
    %v615 = vadd.f32 0.0, %v614
    %v616 = vpop.f32.mrb[0].mxu0
    %617 = vmatprep.mubr.f32.mxu0 0.0
    %618 = vmatmul.mubr.f32.gmra.mrb[0].mxu0 %v520
    %v619 = vpop.f32.mrb[0].mxu0
    %v620 = vadd.f32 0.0, %v619
    %v621 = vpop.f32.mrb[0].mxu0
    %622 = vmatprep.mubr.f32.mxu0 0.0
    %623 = vmatmul.mubr.f32.gmra.mrb[0].mxu0 %v523
    %v624 = vpop.f32.mrb[0].mxu0
    %v625 = vadd.f32 0.0, %v624
    %v626 = vpop.f32.mrb[0].mxu0
    %627 = vmatprep.mubr.f32.mxu0 0.0
    %628 = vmatmul.mubr.f32.gmra.mrb[0].mxu0 %v526
    %v629 = vpop.f32.mrb[0].mxu0
    %v630 = vadd.f32 0.0, %v629
    %v631 = vpop.f32.mrb[0].mxu0
    %632 = vmatprep.mubr.f32.mxu0 0.0
    %633 = vmatmul.mubr.f32.gmra.mrb[0].mxu0 %v529
    %v634 = vpop.f32.mrb[0].mxu0
    %v635 = vadd.f32 0.0, %v634
    %v636 = vpop.f32.mrb[0].mxu0
    %637 = vmatprep.mubr.f32.mxu0 0.0
    %638 = vmatmul.mubr.f32.gmra.mrb[0].mxu0 %v532
    %v639 = vpop.f32.mrb[0].mxu0
    %v640 = vadd.f32 0.0, %v639
    %v641 = vpop.f32.mrb[0].mxu0
    %642 = vdwg.mxu0
    %v643 = vmul.f32 %v466, 0.35355338
    %v644 = vmul.f32 %v471, 0.35355338
    %v645 = vmul.f32 %v476, 0.35355338
    %v646 = vmul.f32 %v481, 0.35355338
    %v647 = vmul.f32 %v486, 0.35355338
    %v648 = vmul.f32 %v491, 0.35355338
    %v649 = vmul.f32 %v496, 0.35355338
    %v650 = vmul.f32 %v501, 0.35355338
    %v651 = vmul.f32 %v605, 0.35355338
    %v652 = vmul.f32 %v610, 0.35355338
    %v653 = vmul.f32 %v615, 0.35355338
    %v654 = vmul.f32 %v620, 0.35355338
    %v655 = vmul.f32 %v625, 0.35355338
    %v656 = vmul.f32 %v630, 0.35355338
    %v657 = vmul.f32 %v635, 0.35355338
    %v658 = vmul.f32 %v640, 0.35355338
    %vm659 = vcmask 130048
    %v660 = vsel %vm659, %v643, -inf
    %661 = vmax.xlane.f32.xlu0 %v660
    %v662 = vpop.xlane.xlu0 %661
    %v663 = vsel %vm659, %v644, -inf
    %664 = vmax.xlane.f32.xlu0 %v663
    %v665 = vpop.xlane.xlu0 %664
    %v666 = vsel %vm659, %v645, -inf
    %667 = vmax.xlane.f32.xlu0 %v666
    %v668 = vpop.xlane.xlu0 %667
    %v669 = vsel %vm659, %v646, -inf
    %670 = vmax.xlane.f32.xlu0 %v669
    %v671 = vpop.xlane.xlu0 %670
    %v672 = vsel %vm659, %v647, -inf
    %673 = vmax.xlane.f32.xlu0 %v672
    %v674 = vpop.xlane.xlu0 %673
    %v675 = vsel %vm659, %v648, -inf
    %676 = vmax.xlane.f32.xlu0 %v675
    %v677 = vpop.xlane.xlu0 %676
    %v678 = vsel %vm659, %v649, -inf
    %679 = vmax.xlane.f32.xlu0 %v678
    %v680 = vpop.xlane.xlu0 %679
    %v681 = vsel %vm659, %v650, -inf
    %682 = vmax.xlane.f32.xlu0 %v681
    %v683 = vpop.xlane.xlu0 %682
    %v684 = vsel %vm659, %v651, -inf
    %685 = vmax.xlane.f32.xlu0 %v684
    %v686 = vpop.xlane.xlu0 %685
    %v687 = vsel %vm659, %v652, -inf
    %688 = vmax.xlane.f32.xlu0 %v687
    %v689 = vpop.xlane.xlu0 %688
    %v690 = vsel %vm659, %v653, -inf
    %691 = vmax.xlane.f32.xlu0 %v690
    %v692 = vpop.xlane.xlu0 %691
    %v693 = vsel %vm659, %v654, -inf
    %694 = vmax.xlane.f32.xlu0 %v693
    %v695 = vpop.xlane.xlu0 %694
    %v696 = vsel %vm659, %v655, -inf
    %697 = vmax.xlane.f32.xlu0 %v696
    %v698 = vpop.xlane.xlu0 %697
    %v699 = vsel %vm659, %v656, -inf
    %700 = vmax.xlane.f32.xlu0 %v699
    %v701 = vpop.xlane.xlu0 %700
    %v702 = vsel %vm659, %v657, -inf
    %703 = vmax.xlane.f32.xlu0 %v702
    %v704 = vpop.xlane.xlu0 %703
    %v705 = vsel %vm659, %v658, -inf
    %706 = vmax.xlane.f32.xlu0 %v705
    %v707 = vpop.xlane.xlu0 %706
    %v708 = vsub.f32 %v643, %v662
    %v709 = vsub.f32 %v644, %v665
    %v710 = vsub.f32 %v645, %v668
    %v711 = vsub.f32 %v646, %v671
    %v712 = vsub.f32 %v647, %v674
    %v713 = vsub.f32 %v648, %v677
    %v714 = vsub.f32 %v649, %v680
    %v715 = vsub.f32 %v650, %v683
    %v716 = vsub.f32 %v651, %v686
    %v717 = vsub.f32 %v652, %v689
    %v718 = vsub.f32 %v653, %v692
    %v719 = vsub.f32 %v654, %v695
    %v720 = vsub.f32 %v655, %v698
    %v721 = vsub.f32 %v656, %v701
    %v722 = vsub.f32 %v657, %v704
    %v723 = vsub.f32 %v658, %v707
    %v724 = vmul.f32 %v708, 1.442695
    %v725 = vpow.pop %v724
    %v726 = vmul.f32 %v709, 1.442695
    %v727 = vpow.pop %v726
    %v728 = vmul.f32 %v710, 1.442695
    %v729 = vpow.pop %v728
    %v730 = vmul.f32 %v711, 1.442695
    %v731 = vpow.pop %v730
    %v732 = vmul.f32 %v712, 1.442695
    %v733 = vpow.pop %v732
    %v734 = vmul.f32 %v713, 1.442695
    %v735 = vpow.pop %v734
    %v736 = vmul.f32 %v714, 1.442695
    %v737 = vpow.pop %v736
    %v738 = vmul.f32 %v715, 1.442695
    %v739 = vpow.pop %v738
    %v740 = vmul.f32 %v716, 1.442695
    %v741 = vpow.pop %v740
    %v742 = vmul.f32 %v717, 1.442695
    %v743 = vpow.pop %v742
    %v744 = vmul.f32 %v718, 1.442695
    %v745 = vpow.pop %v744
    %v746 = vmul.f32 %v719, 1.442695
    %v747 = vpow.pop %v746
    %v748 = vmul.f32 %v720, 1.442695
    %v749 = vpow.pop %v748
    %v750 = vmul.f32 %v721, 1.442695
    %v751 = vpow.pop %v750
    %v752 = vmul.f32 %v722, 1.442695
    %v753 = vpow.pop %v752
    %v754 = vmul.f32 %v723, 1.442695
    %v755 = vpow.pop %v754
    %v756 = vsel %vm659, %v725, 0.0
    %757 = vadd.xlane.f32.xlu0 %v756
    %v758 = vpop.xlane.xlu0 %757
    %v759 = vsel %vm659, %v727, 0.0
    %760 = vadd.xlane.f32.xlu0 %v759
    %v761 = vpop.xlane.xlu0 %760
    %v762 = vsel %vm659, %v729, 0.0
    %763 = vadd.xlane.f32.xlu0 %v762
    %v764 = vpop.xlane.xlu0 %763
    %v765 = vsel %vm659, %v731, 0.0
    %766 = vadd.xlane.f32.xlu0 %v765
    %v767 = vpop.xlane.xlu0 %766
    %v768 = vsel %vm659, %v733, 0.0
    %769 = vadd.xlane.f32.xlu0 %v768
    %v770 = vpop.xlane.xlu0 %769
    %v771 = vsel %vm659, %v735, 0.0
    %772 = vadd.xlane.f32.xlu0 %v771
    %v773 = vpop.xlane.xlu0 %772
    %v774 = vsel %vm659, %v737, 0.0
    %775 = vadd.xlane.f32.xlu0 %v774
    %v776 = vpop.xlane.xlu0 %775
    %v777 = vsel %vm659, %v739, 0.0
    %778 = vadd.xlane.f32.xlu0 %v777
    %v779 = vpop.xlane.xlu0 %778
    %v780 = vsel %vm659, %v741, 0.0
    %781 = vadd.xlane.f32.xlu0 %v780
    %v782 = vpop.xlane.xlu0 %781
    %v783 = vsel %vm659, %v743, 0.0
    %784 = vadd.xlane.f32.xlu0 %v783
    %v785 = vpop.xlane.xlu0 %784
    %v786 = vsel %vm659, %v745, 0.0
    %787 = vadd.xlane.f32.xlu0 %v786
    %v788 = vpop.xlane.xlu0 %787
    %v789 = vsel %vm659, %v747, 0.0
    %790 = vadd.xlane.f32.xlu0 %v789
    %v791 = vpop.xlane.xlu0 %790
    %v792 = vsel %vm659, %v749, 0.0
    %793 = vadd.xlane.f32.xlu0 %v792
    %v794 = vpop.xlane.xlu0 %793
    %v795 = vsel %vm659, %v751, 0.0
    %796 = vadd.xlane.f32.xlu0 %v795
    %v797 = vpop.xlane.xlu0 %796
    %v798 = vsel %vm659, %v753, 0.0
    %799 = vadd.xlane.f32.xlu0 %v798
    %v800 = vpop.xlane.xlu0 %799
    %v801 = vsel %vm659, %v755, 0.0
    %802 = vadd.xlane.f32.xlu0 %v801
    %v803 = vpop.xlane.xlu0 %802
    %v804 = vrcp.pop %v758
    %v805 = vrcp.pop %v761
    %v806 = vrcp.pop %v764
    %v807 = vrcp.pop %v767
    %v808 = vrcp.pop %v770
    %v809 = vrcp.pop %v773
    %v810 = vrcp.pop %v776
    %v811 = vrcp.pop %v779
    %v812 = vrcp.pop %v782
    %v813 = vrcp.pop %v785
    %v814 = vrcp.pop %v788
    %v815 = vrcp.pop %v791
    %v816 = vrcp.pop %v794
    %v817 = vrcp.pop %v797
    %v818 = vrcp.pop %v800
    %v819 = vrcp.pop %v803
    %v820 = vmul.f32 %v725, %v804
    %v821 = vmul.f32 %v727, %v805
    %v822 = vmul.f32 %v729, %v806
    %v823 = vmul.f32 %v731, %v807
    %v824 = vmul.f32 %v733, %v808
    %v825 = vmul.f32 %v735, %v809
    %v826 = vmul.f32 %v737, %v810
    %v827 = vmul.f32 %v739, %v811
    %v828 = vmul.f32 %v741, %v812
    %v829 = vmul.f32 %v743, %v813
    %v830 = vmul.f32 %v745, %v814
    %v831 = vmul.f32 %v747, %v815
    %v832 = vmul.f32 %v749, %v816
    %v833 = vmul.f32 %v751, %v817
    %v834 = vmul.f32 %v753, %v818
    %v835 = vmul.f32 %v755, %v819
    %836 = vrot.lane.b32.xlu0 %v332, 64
    %v837 = vpop.permute.xlu0 %836
    %838 = vrot.lane.b32.xlu0 %v336, 64
    %v839 = vpop.permute.xlu0 %838
    %840 = vrot.lane.b32.xlu0 %v340, 64
    %v841 = vpop.permute.xlu0 %840
    %842 = vrot.lane.b32.xlu0 %v344, 64
    %v843 = vpop.permute.xlu0 %842
    %v848 = vmul.f32 %v286, %v837
    %v849 = vmul.f32 %v291, %v837
    %v850 = vmul.f32 %v286, %v839
    %v851 = vmul.f32 %v291, %v839
    %v852 = vmul.f32 %v286, %v841
    %v853 = vmul.f32 %v291, %v841
    %v854 = vmul.f32 %v286, %v843
    %v855 = vmul.f32 %v291, %v843
    %v856 = vmul.f32 %v296, %v837
    %v857 = vmul.f32 %v301, %v837
    %v858 = vmul.f32 %v296, %v839
    %v859 = vmul.f32 %v301, %v839
    %v860 = vmul.f32 %v296, %v841
    %v861 = vmul.f32 %v301, %v841
    %v862 = vmul.f32 %v296, %v843
    %v863 = vmul.f32 %v301, %v843
    %866 = vrot.lane.b32.xlu0 %v848, 64
    %v867 = vpop.permute.xlu0 %866
    %868 = vrot.lane.b32.xlu0 %v849, 64
    %v869 = vpop.permute.xlu0 %868
    %v873 = vsel %vm659, %v820, 0
    %v876 = vsel %vm659, %v821, 0
    %878 = vmatprep.subr.mxu0 0.0
    %879 = vmatpush1.msra.mxu0 %v867
    %880 = vmatprep.subr.mxu0 0.0
    %881 = vmatpush1.msra.mxu0 %v869
    %882 = vmatprep.subr.mxu0 0.0
    %883 = vmatpush1.msra.mxu0 0.0
    %884 = vmatprep.subr.mxu0 0.0
    %885 = vmatpush1.msra.mxu0 0.0
    %886 = vmatprep.subr.mxu0 0.0
    %887 = vmatpush1.msra.mxu0 0.0
    %888 = vmatprep.subr.mxu0 0.0
    %889 = vmatpush1.msra.mxu0 0.0
    %890 = vmatprep.subr.mxu0 0.0
    %891 = vmatpush1.msra.mxu0 0.0
    %892 = vmatprep.subr.mxu0 0.0
    %893 = vmatpush1.msra.mxu0 0.0
    %894 = vmatprep.subr.mxu0 0.0
    %895 = vmatpush1.msra.mxu0 0.0
    %896 = vmatprep.subr.mxu0 0.0
    %897 = vmatpush1.msra.mxu0 0.0
    %898 = vmatprep.subr.mxu0 0.0
    %899 = vmatpush1.msra.mxu0 0.0
    %900 = vmatprep.subr.mxu0 0.0
    %901 = vmatpush1.msra.mxu0 0.0
    %902 = vmatprep.subr.mxu0 0.0
    %903 = vmatpush1.msra.mxu0 0.0
    %904 = vmatprep.subr.mxu0 0.0
    %905 = vmatpush1.msra.mxu0 0.0
    %906 = vmatprep.subr.mxu0 0.0
    %907 = vmatpush1.msra.mxu0 0.0
    %908 = vmatprep.subr.mxu0 0.0
    %909 = vmatpush1.msra.mxu0 0.0
    %910 = vmatprep.subr.mxu0 0.0
    %911 = vmatpush1.msra.mxu0 0.0
    %912 = vmatprep.subr.mxu0 0.0
    %913 = vmatpush1.msra.mxu0 0.0
    %914 = vmatprep.subr.mxu0 0.0
    %915 = vmatpush1.msra.mxu0 0.0
    %916 = vmatprep.subr.mxu0 0.0
    %917 = vmatpush1.msra.mxu0 0.0
    %918 = vmatprep.subr.mxu0 0.0
    %919 = vmatpush1.msra.mxu0 0.0
    %920 = vmatprep.subr.mxu0 0.0
    %921 = vmatpush1.msra.mxu0 0.0
    %922 = vmatprep.subr.mxu0 0.0
    %923 = vmatpush1.msra.mxu0 0.0
    %924 = vmatprep.subr.mxu0 0.0
    %925 = vmatpush1.msra.mxu0 0.0
    %926 = vmatprep.subr.mxu0 0.0
    %927 = vmatpush1.msra.mxu0 0.0
    %928 = vmatprep.subr.mxu0 0.0
    %929 = vmatpush1.msra.mxu0 0.0
    %930 = vmatprep.subr.mxu0 0.0
    %931 = vmatpush1.msra.mxu0 0.0
    %932 = vmatprep.subr.mxu0 0.0
    %933 = vmatpush1.msra.mxu0 0.0
    %934 = vmatprep.subr.mxu0 0.0
    %935 = vmatpush1.msra.mxu0 0.0
    %936 = vmatprep.subr.mxu0 0.0
    %937 = vmatpush1.msra.mxu0 0.0
    %938 = vmatprep.subr.mxu0 0.0
    %939 = vmatpush1.msra.mxu0 0.0
    %940 = vmatprep.subr.mxu0 0.0
    %941 = vmatpush1.msra.mxu0 0.0
    %942 = vmatprep.mubr.f32.mxu0 0.0
    %943 = vmatmul.mubr.f32.gmra.mrb[0].mxu0 %v873
    %v944 = vpop.f32.mrb[0].mxu0
    %v945 = vadd.f32 0.0, %v944
    %v946 = vpop.f32.mrb[0].mxu0
    %947 = vmatprep.mubr.f32.mxu0 0.0
    %948 = vmatmul.mubr.f32.gmra.mrb[0].mxu0 %v876
    %v949 = vpop.f32.mrb[0].mxu0
    %v950 = vadd.f32 0.0, %v949
    %v951 = vpop.f32.mrb[0].mxu0
    %952 = vdwg.mxu0
    %955 = vrot.lane.b32.xlu0 %v850, 64
    %v956 = vpop.permute.xlu0 %955
    %957 = vrot.lane.b32.xlu0 %v851, 64
    %v958 = vpop.permute.xlu0 %957
    %v962 = vsel %vm659, %v822, 0
    %v965 = vsel %vm659, %v823, 0
    %967 = vmatprep.subr.mxu0 0.0
    %968 = vmatpush1.msra.mxu0 %v956
    %969 = vmatprep.subr.mxu0 0.0
    %970 = vmatpush1.msra.mxu0 %v958
    %971 = vmatprep.subr.mxu0 0.0
    %972 = vmatpush1.msra.mxu0 0.0
    %973 = vmatprep.subr.mxu0 0.0
    %974 = vmatpush1.msra.mxu0 0.0
    %975 = vmatprep.subr.mxu0 0.0
    %976 = vmatpush1.msra.mxu0 0.0
    %977 = vmatprep.subr.mxu0 0.0
    %978 = vmatpush1.msra.mxu0 0.0
    %979 = vmatprep.subr.mxu0 0.0
    %980 = vmatpush1.msra.mxu0 0.0
    %981 = vmatprep.subr.mxu0 0.0
    %982 = vmatpush1.msra.mxu0 0.0
    %983 = vmatprep.subr.mxu0 0.0
    %984 = vmatpush1.msra.mxu0 0.0
    %985 = vmatprep.subr.mxu0 0.0
    %986 = vmatpush1.msra.mxu0 0.0
    %987 = vmatprep.subr.mxu0 0.0
    %988 = vmatpush1.msra.mxu0 0.0
    %989 = vmatprep.subr.mxu0 0.0
    %990 = vmatpush1.msra.mxu0 0.0
    %991 = vmatprep.subr.mxu0 0.0
    %992 = vmatpush1.msra.mxu0 0.0
    %993 = vmatprep.subr.mxu0 0.0
    %994 = vmatpush1.msra.mxu0 0.0
    %995 = vmatprep.subr.mxu0 0.0
    %996 = vmatpush1.msra.mxu0 0.0
    %997 = vmatprep.subr.mxu0 0.0
    %998 = vmatpush1.msra.mxu0 0.0
    %999 = vmatprep.subr.mxu0 0.0
    %1000 = vmatpush1.msra.mxu0 0.0
    %1001 = vmatprep.subr.mxu0 0.0
    %1002 = vmatpush1.msra.mxu0 0.0
    %1003 = vmatprep.subr.mxu0 0.0
    %1004 = vmatpush1.msra.mxu0 0.0
    %1005 = vmatprep.subr.mxu0 0.0
    %1006 = vmatpush1.msra.mxu0 0.0
    %1007 = vmatprep.subr.mxu0 0.0
    %1008 = vmatpush1.msra.mxu0 0.0
    %1009 = vmatprep.subr.mxu0 0.0
    %1010 = vmatpush1.msra.mxu0 0.0
    %1011 = vmatprep.subr.mxu0 0.0
    %1012 = vmatpush1.msra.mxu0 0.0
    %1013 = vmatprep.subr.mxu0 0.0
    %1014 = vmatpush1.msra.mxu0 0.0
    %1015 = vmatprep.subr.mxu0 0.0
    %1016 = vmatpush1.msra.mxu0 0.0
    %1017 = vmatprep.subr.mxu0 0.0
    %1018 = vmatpush1.msra.mxu0 0.0
    %1019 = vmatprep.subr.mxu0 0.0
    %1020 = vmatpush1.msra.mxu0 0.0
    %1021 = vmatprep.subr.mxu0 0.0
    %1022 = vmatpush1.msra.mxu0 0.0
    %1023 = vmatprep.subr.mxu0 0.0
    %1024 = vmatpush1.msra.mxu0 0.0
    %1025 = vmatprep.subr.mxu0 0.0
    %1026 = vmatpush1.msra.mxu0 0.0
    %1027 = vmatprep.subr.mxu0 0.0
    %1028 = vmatpush1.msra.mxu0 0.0
    %1029 = vmatprep.subr.mxu0 0.0
    %1030 = vmatpush1.msra.mxu0 0.0
    %1031 = vmatprep.mubr.f32.mxu0 0.0
    %1032 = vmatmul.mubr.f32.gmra.mrb[0].mxu0 %v962
    %v1033 = vpop.f32.mrb[0].mxu0
    %v1034 = vadd.f32 0.0, %v1033
    %v1035 = vpop.f32.mrb[0].mxu0
    %1036 = vmatprep.mubr.f32.mxu0 0.0
    %1037 = vmatmul.mubr.f32.gmra.mrb[0].mxu0 %v965
    %v1038 = vpop.f32.mrb[0].mxu0
    %v1039 = vadd.f32 0.0, %v1038
    %v1040 = vpop.f32.mrb[0].mxu0
    %1041 = vdwg.mxu0
    %1044 = vrot.lane.b32.xlu0 %v852, 64
    %v1045 = vpop.permute.xlu0 %1044
    %1046 = vrot.lane.b32.xlu0 %v853, 64
    %v1047 = vpop.permute.xlu0 %1046
    %v1051 = vsel %vm659, %v824, 0
    %v1054 = vsel %vm659, %v825, 0
    %1056 = vmatprep.subr.mxu0 0.0
    %1057 = vmatpush1.msra.mxu0 %v1045
    %1058 = vmatprep.subr.mxu0 0.0
    %1059 = vmatpush1.msra.mxu0 %v1047
    %1060 = vmatprep.subr.mxu0 0.0
    %1061 = vmatpush1.msra.mxu0 0.0
    %1062 = vmatprep.subr.mxu0 0.0
    %1063 = vmatpush1.msra.mxu0 0.0
    %1064 = vmatprep.subr.mxu0 0.0
    %1065 = vmatpush1.msra.mxu0 0.0
    %1066 = vmatprep.subr.mxu0 0.0
    %1067 = vmatpush1.msra.mxu0 0.0
    %1068 = vmatprep.subr.mxu0 0.0
    %1069 = vmatpush1.msra.mxu0 0.0
    %1070 = vmatprep.subr.mxu0 0.0
    %1071 = vmatpush1.msra.mxu0 0.0
    %1072 = vmatprep.subr.mxu0 0.0
    %1073 = vmatpush1.msra.mxu0 0.0
    %1074 = vmatprep.subr.mxu0 0.0
    %1075 = vmatpush1.msra.mxu0 0.0
    %1076 = vmatprep.subr.mxu0 0.0
    %1077 = vmatpush1.msra.mxu0 0.0
    %1078 = vmatprep.subr.mxu0 0.0
    %1079 = vmatpush1.msra.mxu0 0.0
    %1080 = vmatprep.subr.mxu0 0.0
    %1081 = vmatpush1.msra.mxu0 0.0
    %1082 = vmatprep.subr.mxu0 0.0
    %1083 = vmatpush1.msra.mxu0 0.0
    %1084 = vmatprep.subr.mxu0 0.0
    %1085 = vmatpush1.msra.mxu0 0.0
    %1086 = vmatprep.subr.mxu0 0.0
    %1087 = vmatpush1.msra.mxu0 0.0
    %1088 = vmatprep.subr.mxu0 0.0
    %1089 = vmatpush1.msra.mxu0 0.0
    %1090 = vmatprep.subr.mxu0 0.0
    %1091 = vmatpush1.msra.mxu0 0.0
    %1092 = vmatprep.subr.mxu0 0.0
    %1093 = vmatpush1.msra.mxu0 0.0
    %1094 = vmatprep.subr.mxu0 0.0
    %1095 = vmatpush1.msra.mxu0 0.0
    %1096 = vmatprep.subr.mxu0 0.0
    %1097 = vmatpush1.msra.mxu0 0.0
    %1098 = vmatprep.subr.mxu0 0.0
    %1099 = vmatpush1.msra.mxu0 0.0
    %1100 = vmatprep.subr.mxu0 0.0
    %1101 = vmatpush1.msra.mxu0 0.0
    %1102 = vmatprep.subr.mxu0 0.0
    %1103 = vmatpush1.msra.mxu0 0.0
    %1104 = vmatprep.subr.mxu0 0.0
    %1105 = vmatpush1.msra.mxu0 0.0
    %1106 = vmatprep.subr.mxu0 0.0
    %1107 = vmatpush1.msra.mxu0 0.0
    %1108 = vmatprep.subr.mxu0 0.0
    %1109 = vmatpush1.msra.mxu0 0.0
    %1110 = vmatprep.subr.mxu0 0.0
    %1111 = vmatpush1.msra.mxu0 0.0
    %1112 = vmatprep.subr.mxu0 0.0
    %1113 = vmatpush1.msra.mxu0 0.0
    %1114 = vmatprep.subr.mxu0 0.0
    %1115 = vmatpush1.msra.mxu0 0.0
    %1116 = vmatprep.subr.mxu0 0.0
    %1117 = vmatpush1.msra.mxu0 0.0
    %1118 = vmatprep.subr.mxu0 0.0
    %1119 = vmatpush1.msra.mxu0 0.0
    %1120 = vmatprep.mubr.f32.mxu0 0.0
    %1121 = vmatmul.mubr.f32.gmra.mrb[0].mxu0 %v1051
    %v1122 = vpop.f32.mrb[0].mxu0
    %v1123 = vadd.f32 0.0, %v1122
    %v1124 = vpop.f32.mrb[0].mxu0
    %1125 = vmatprep.mubr.f32.mxu0 0.0
    %1126 = vmatmul.mubr.f32.gmra.mrb[0].mxu0 %v1054
    %v1127 = vpop.f32.mrb[0].mxu0
    %v1128 = vadd.f32 0.0, %v1127
    %v1129 = vpop.f32.mrb[0].mxu0
    %1130 = vdwg.mxu0
    %1133 = vrot.lane.b32.xlu0 %v854, 64
    %v1134 = vpop.permute.xlu0 %1133
    %1135 = vrot.lane.b32.xlu0 %v855, 64
    %v1136 = vpop.permute.xlu0 %1135
    %v1140 = vsel %vm659, %v826, 0
    %v1143 = vsel %vm659, %v827, 0
    %1145 = vmatprep.subr.mxu0 0.0
    %1146 = vmatpush1.msra.mxu0 %v1134
    %1147 = vmatprep.subr.mxu0 0.0
    %1148 = vmatpush1.msra.mxu0 %v1136
    %1149 = vmatprep.subr.mxu0 0.0
    %1150 = vmatpush1.msra.mxu0 0.0
    %1151 = vmatprep.subr.mxu0 0.0
    %1152 = vmatpush1.msra.mxu0 0.0
    %1153 = vmatprep.subr.mxu0 0.0
    %1154 = vmatpush1.msra.mxu0 0.0
    %1155 = vmatprep.subr.mxu0 0.0
    %1156 = vmatpush1.msra.mxu0 0.0
    %1157 = vmatprep.subr.mxu0 0.0
    %1158 = vmatpush1.msra.mxu0 0.0
    %1159 = vmatprep.subr.mxu0 0.0
    %1160 = vmatpush1.msra.mxu0 0.0
    %1161 = vmatprep.subr.mxu0 0.0
    %1162 = vmatpush1.msra.mxu0 0.0
    %1163 = vmatprep.subr.mxu0 0.0
    %1164 = vmatpush1.msra.mxu0 0.0
    %1165 = vmatprep.subr.mxu0 0.0
    %1166 = vmatpush1.msra.mxu0 0.0
    %1167 = vmatprep.subr.mxu0 0.0
    %1168 = vmatpush1.msra.mxu0 0.0
    %1169 = vmatprep.subr.mxu0 0.0
    %1170 = vmatpush1.msra.mxu0 0.0
    %1171 = vmatprep.subr.mxu0 0.0
    %1172 = vmatpush1.msra.mxu0 0.0
    %1173 = vmatprep.subr.mxu0 0.0
    %1174 = vmatpush1.msra.mxu0 0.0
    %1175 = vmatprep.subr.mxu0 0.0
    %1176 = vmatpush1.msra.mxu0 0.0
    %1177 = vmatprep.subr.mxu0 0.0
    %1178 = vmatpush1.msra.mxu0 0.0
    %1179 = vmatprep.subr.mxu0 0.0
    %1180 = vmatpush1.msra.mxu0 0.0
    %1181 = vmatprep.subr.mxu0 0.0
    %1182 = vmatpush1.msra.mxu0 0.0
    %1183 = vmatprep.subr.mxu0 0.0
    %1184 = vmatpush1.msra.mxu0 0.0
    %1185 = vmatprep.subr.mxu0 0.0
    %1186 = vmatpush1.msra.mxu0 0.0
    %1187 = vmatprep.subr.mxu0 0.0
    %1188 = vmatpush1.msra.mxu0 0.0
    %1189 = vmatprep.subr.mxu0 0.0
    %1190 = vmatpush1.msra.mxu0 0.0
    %1191 = vmatprep.subr.mxu0 0.0
    %1192 = vmatpush1.msra.mxu0 0.0
    %1193 = vmatprep.subr.mxu0 0.0
    %1194 = vmatpush1.msra.mxu0 0.0
    %1195 = vmatprep.subr.mxu0 0.0
    %1196 = vmatpush1.msra.mxu0 0.0
    %1197 = vmatprep.subr.mxu0 0.0
    %1198 = vmatpush1.msra.mxu0 0.0
    %1199 = vmatprep.subr.mxu0 0.0
    %1200 = vmatpush1.msra.mxu0 0.0
    %1201 = vmatprep.subr.mxu0 0.0
    %1202 = vmatpush1.msra.mxu0 0.0
    %1203 = vmatprep.subr.mxu0 0.0
    %1204 = vmatpush1.msra.mxu0 0.0
    %1205 = vmatprep.subr.mxu0 0.0
    %1206 = vmatpush1.msra.mxu0 0.0
    %1207 = vmatprep.subr.mxu0 0.0
    %1208 = vmatpush1.msra.mxu0 0.0
    %1209 = vmatprep.mubr.f32.mxu0 0.0
    %1210 = vmatmul.mubr.f32.gmra.mrb[0].mxu0 %v1140
    %v1211 = vpop.f32.mrb[0].mxu0
    %v1212 = vadd.f32 0.0, %v1211
    %v1213 = vpop.f32.mrb[0].mxu0
    %1214 = vmatprep.mubr.f32.mxu0 0.0
    %1215 = vmatmul.mubr.f32.gmra.mrb[0].mxu0 %v1143
    %v1216 = vpop.f32.mrb[0].mxu0
    %v1217 = vadd.f32 0.0, %v1216
    %v1218 = vpop.f32.mrb[0].mxu0
    %1219 = vdwg.mxu0
    %1222 = vrot.lane.b32.xlu0 %v856, 64
    %v1223 = vpop.permute.xlu0 %1222
    %1224 = vrot.lane.b32.xlu0 %v857, 64
    %v1225 = vpop.permute.xlu0 %1224
    %v1229 = vsel %vm659, %v828, 0
    %v1232 = vsel %vm659, %v829, 0
    %1234 = vmatprep.subr.mxu0 0.0
    %1235 = vmatpush1.msra.mxu0 %v1223
    %1236 = vmatprep.subr.mxu0 0.0
    %1237 = vmatpush1.msra.mxu0 %v1225
    %1238 = vmatprep.subr.mxu0 0.0
    %1239 = vmatpush1.msra.mxu0 0.0
    %1240 = vmatprep.subr.mxu0 0.0
    %1241 = vmatpush1.msra.mxu0 0.0
    %1242 = vmatprep.subr.mxu0 0.0
    %1243 = vmatpush1.msra.mxu0 0.0
    %1244 = vmatprep.subr.mxu0 0.0
    %1245 = vmatpush1.msra.mxu0 0.0
    %1246 = vmatprep.subr.mxu0 0.0
    %1247 = vmatpush1.msra.mxu0 0.0
    %1248 = vmatprep.subr.mxu0 0.0
    %1249 = vmatpush1.msra.mxu0 0.0
    %1250 = vmatprep.subr.mxu0 0.0
    %1251 = vmatpush1.msra.mxu0 0.0
    %1252 = vmatprep.subr.mxu0 0.0
    %1253 = vmatpush1.msra.mxu0 0.0
    %1254 = vmatprep.subr.mxu0 0.0
    %1255 = vmatpush1.msra.mxu0 0.0
    %1256 = vmatprep.subr.mxu0 0.0
    %1257 = vmatpush1.msra.mxu0 0.0
    %1258 = vmatprep.subr.mxu0 0.0
    %1259 = vmatpush1.msra.mxu0 0.0
    %1260 = vmatprep.subr.mxu0 0.0
    %1261 = vmatpush1.msra.mxu0 0.0
    %1262 = vmatprep.subr.mxu0 0.0
    %1263 = vmatpush1.msra.mxu0 0.0
    %1264 = vmatprep.subr.mxu0 0.0
    %1265 = vmatpush1.msra.mxu0 0.0
    %1266 = vmatprep.subr.mxu0 0.0
    %1267 = vmatpush1.msra.mxu0 0.0
    %1268 = vmatprep.subr.mxu0 0.0
    %1269 = vmatpush1.msra.mxu0 0.0
    %1270 = vmatprep.subr.mxu0 0.0
    %1271 = vmatpush1.msra.mxu0 0.0
    %1272 = vmatprep.subr.mxu0 0.0
    %1273 = vmatpush1.msra.mxu0 0.0
    %1274 = vmatprep.subr.mxu0 0.0
    %1275 = vmatpush1.msra.mxu0 0.0
    %1276 = vmatprep.subr.mxu0 0.0
    %1277 = vmatpush1.msra.mxu0 0.0
    %1278 = vmatprep.subr.mxu0 0.0
    %1279 = vmatpush1.msra.mxu0 0.0
    %1280 = vmatprep.subr.mxu0 0.0
    %1281 = vmatpush1.msra.mxu0 0.0
    %1282 = vmatprep.subr.mxu0 0.0
    %1283 = vmatpush1.msra.mxu0 0.0
    %1284 = vmatprep.subr.mxu0 0.0
    %1285 = vmatpush1.msra.mxu0 0.0
    %1286 = vmatprep.subr.mxu0 0.0
    %1287 = vmatpush1.msra.mxu0 0.0
    %1288 = vmatprep.subr.mxu0 0.0
    %1289 = vmatpush1.msra.mxu0 0.0
    %1290 = vmatprep.subr.mxu0 0.0
    %1291 = vmatpush1.msra.mxu0 0.0
    %1292 = vmatprep.subr.mxu0 0.0
    %1293 = vmatpush1.msra.mxu0 0.0
    %1294 = vmatprep.subr.mxu0 0.0
    %1295 = vmatpush1.msra.mxu0 0.0
    %1296 = vmatprep.subr.mxu0 0.0
    %1297 = vmatpush1.msra.mxu0 0.0
    %1298 = vmatprep.mubr.f32.mxu0 0.0
    %1299 = vmatmul.mubr.f32.gmra.mrb[0].mxu0 %v1229
    %v1300 = vpop.f32.mrb[0].mxu0
    %v1301 = vadd.f32 0.0, %v1300
    %v1302 = vpop.f32.mrb[0].mxu0
    %1303 = vmatprep.mubr.f32.mxu0 0.0
    %1304 = vmatmul.mubr.f32.gmra.mrb[0].mxu0 %v1232
    %v1305 = vpop.f32.mrb[0].mxu0
    %v1306 = vadd.f32 0.0, %v1305
    %v1307 = vpop.f32.mrb[0].mxu0
    %1308 = vdwg.mxu0
    %1311 = vrot.lane.b32.xlu0 %v858, 64
    %v1312 = vpop.permute.xlu0 %1311
    %1313 = vrot.lane.b32.xlu0 %v859, 64
    %v1314 = vpop.permute.xlu0 %1313
    %v1318 = vsel %vm659, %v830, 0
    %v1321 = vsel %vm659, %v831, 0
    %1323 = vmatprep.subr.mxu0 0.0
    %1324 = vmatpush1.msra.mxu0 %v1312
    %1325 = vmatprep.subr.mxu0 0.0
    %1326 = vmatpush1.msra.mxu0 %v1314
    %1327 = vmatprep.subr.mxu0 0.0
    %1328 = vmatpush1.msra.mxu0 0.0
    %1329 = vmatprep.subr.mxu0 0.0
    %1330 = vmatpush1.msra.mxu0 0.0
    %1331 = vmatprep.subr.mxu0 0.0
    %1332 = vmatpush1.msra.mxu0 0.0
    %1333 = vmatprep.subr.mxu0 0.0
    %1334 = vmatpush1.msra.mxu0 0.0
    %1335 = vmatprep.subr.mxu0 0.0
    %1336 = vmatpush1.msra.mxu0 0.0
    %1337 = vmatprep.subr.mxu0 0.0
    %1338 = vmatpush1.msra.mxu0 0.0
    %1339 = vmatprep.subr.mxu0 0.0
    %1340 = vmatpush1.msra.mxu0 0.0
    %1341 = vmatprep.subr.mxu0 0.0
    %1342 = vmatpush1.msra.mxu0 0.0
    %1343 = vmatprep.subr.mxu0 0.0
    %1344 = vmatpush1.msra.mxu0 0.0
    %1345 = vmatprep.subr.mxu0 0.0
    %1346 = vmatpush1.msra.mxu0 0.0
    %1347 = vmatprep.subr.mxu0 0.0
    %1348 = vmatpush1.msra.mxu0 0.0
    %1349 = vmatprep.subr.mxu0 0.0
    %1350 = vmatpush1.msra.mxu0 0.0
    %1351 = vmatprep.subr.mxu0 0.0
    %1352 = vmatpush1.msra.mxu0 0.0
    %1353 = vmatprep.subr.mxu0 0.0
    %1354 = vmatpush1.msra.mxu0 0.0
    %1355 = vmatprep.subr.mxu0 0.0
    %1356 = vmatpush1.msra.mxu0 0.0
    %1357 = vmatprep.subr.mxu0 0.0
    %1358 = vmatpush1.msra.mxu0 0.0
    %1359 = vmatprep.subr.mxu0 0.0
    %1360 = vmatpush1.msra.mxu0 0.0
    %1361 = vmatprep.subr.mxu0 0.0
    %1362 = vmatpush1.msra.mxu0 0.0
    %1363 = vmatprep.subr.mxu0 0.0
    %1364 = vmatpush1.msra.mxu0 0.0
    %1365 = vmatprep.subr.mxu0 0.0
    %1366 = vmatpush1.msra.mxu0 0.0
    %1367 = vmatprep.subr.mxu0 0.0
    %1368 = vmatpush1.msra.mxu0 0.0
    %1369 = vmatprep.subr.mxu0 0.0
    %1370 = vmatpush1.msra.mxu0 0.0
    %1371 = vmatprep.subr.mxu0 0.0
    %1372 = vmatpush1.msra.mxu0 0.0
    %1373 = vmatprep.subr.mxu0 0.0
    %1374 = vmatpush1.msra.mxu0 0.0
    %1375 = vmatprep.subr.mxu0 0.0
    %1376 = vmatpush1.msra.mxu0 0.0
    %1377 = vmatprep.subr.mxu0 0.0
    %1378 = vmatpush1.msra.mxu0 0.0
    %1379 = vmatprep.subr.mxu0 0.0
    %1380 = vmatpush1.msra.mxu0 0.0
    %1381 = vmatprep.subr.mxu0 0.0
    %1382 = vmatpush1.msra.mxu0 0.0
    %1383 = vmatprep.subr.mxu0 0.0
    %1384 = vmatpush1.msra.mxu0 0.0
    %1385 = vmatprep.subr.mxu0 0.0
    %1386 = vmatpush1.msra.mxu0 0.0
    %1387 = vmatprep.mubr.f32.mxu0 0.0
    %1388 = vmatmul.mubr.f32.gmra.mrb[0].mxu0 %v1318
    %v1389 = vpop.f32.mrb[0].mxu0
    %v1390 = vadd.f32 0.0, %v1389
    %v1391 = vpop.f32.mrb[0].mxu0
    %1392 = vmatprep.mubr.f32.mxu0 0.0
    %1393 = vmatmul.mubr.f32.gmra.mrb[0].mxu0 %v1321
    %v1394 = vpop.f32.mrb[0].mxu0
    %v1395 = vadd.f32 0.0, %v1394
    %v1396 = vpop.f32.mrb[0].mxu0
    %1397 = vdwg.mxu0
    %1400 = vrot.lane.b32.xlu0 %v860, 64
    %v1401 = vpop.permute.xlu0 %1400
    %1402 = vrot.lane.b32.xlu0 %v861, 64
    %v1403 = vpop.permute.xlu0 %1402
    %v1407 = vsel %vm659, %v832, 0
    %v1410 = vsel %vm659, %v833, 0
    %1412 = vmatprep.subr.mxu0 0.0
    %1413 = vmatpush1.msra.mxu0 %v1401
    %1414 = vmatprep.subr.mxu0 0.0
    %1415 = vmatpush1.msra.mxu0 %v1403
    %1416 = vmatprep.subr.mxu0 0.0
    %1417 = vmatpush1.msra.mxu0 0.0
    %1418 = vmatprep.subr.mxu0 0.0
    %1419 = vmatpush1.msra.mxu0 0.0
    %1420 = vmatprep.subr.mxu0 0.0
    %1421 = vmatpush1.msra.mxu0 0.0
    %1422 = vmatprep.subr.mxu0 0.0
    %1423 = vmatpush1.msra.mxu0 0.0
    %1424 = vmatprep.subr.mxu0 0.0
    %1425 = vmatpush1.msra.mxu0 0.0
    %1426 = vmatprep.subr.mxu0 0.0
    %1427 = vmatpush1.msra.mxu0 0.0
    %1428 = vmatprep.subr.mxu0 0.0
    %1429 = vmatpush1.msra.mxu0 0.0
    %1430 = vmatprep.subr.mxu0 0.0
    %1431 = vmatpush1.msra.mxu0 0.0
    %1432 = vmatprep.subr.mxu0 0.0
    %1433 = vmatpush1.msra.mxu0 0.0
    %1434 = vmatprep.subr.mxu0 0.0
    %1435 = vmatpush1.msra.mxu0 0.0
    %1436 = vmatprep.subr.mxu0 0.0
    %1437 = vmatpush1.msra.mxu0 0.0
    %1438 = vmatprep.subr.mxu0 0.0
    %1439 = vmatpush1.msra.mxu0 0.0
    %1440 = vmatprep.subr.mxu0 0.0
    %1441 = vmatpush1.msra.mxu0 0.0
    %1442 = vmatprep.subr.mxu0 0.0
    %1443 = vmatpush1.msra.mxu0 0.0
    %1444 = vmatprep.subr.mxu0 0.0
    %1445 = vmatpush1.msra.mxu0 0.0
    %1446 = vmatprep.subr.mxu0 0.0
    %1447 = vmatpush1.msra.mxu0 0.0
    %1448 = vmatprep.subr.mxu0 0.0
    %1449 = vmatpush1.msra.mxu0 0.0
    %1450 = vmatprep.subr.mxu0 0.0
    %1451 = vmatpush1.msra.mxu0 0.0
    %1452 = vmatprep.subr.mxu0 0.0
    %1453 = vmatpush1.msra.mxu0 0.0
    %1454 = vmatprep.subr.mxu0 0.0
    %1455 = vmatpush1.msra.mxu0 0.0
    %1456 = vmatprep.subr.mxu0 0.0
    %1457 = vmatpush1.msra.mxu0 0.0
    %1458 = vmatprep.subr.mxu0 0.0
    %1459 = vmatpush1.msra.mxu0 0.0
    %1460 = vmatprep.subr.mxu0 0.0
    %1461 = vmatpush1.msra.mxu0 0.0
    %1462 = vmatprep.subr.mxu0 0.0
    %1463 = vmatpush1.msra.mxu0 0.0
    %1464 = vmatprep.subr.mxu0 0.0
    %1465 = vmatpush1.msra.mxu0 0.0
    %1466 = vmatprep.subr.mxu0 0.0
    %1467 = vmatpush1.msra.mxu0 0.0
    %1468 = vmatprep.subr.mxu0 0.0
    %1469 = vmatpush1.msra.mxu0 0.0
    %1470 = vmatprep.subr.mxu0 0.0
    %1471 = vmatpush1.msra.mxu0 0.0
    %1472 = vmatprep.subr.mxu0 0.0
    %1473 = vmatpush1.msra.mxu0 0.0
    %1474 = vmatprep.subr.mxu0 0.0
    %1475 = vmatpush1.msra.mxu0 0.0
    %1476 = vmatprep.mubr.f32.mxu0 0.0
    %1477 = vmatmul.mubr.f32.gmra.mrb[0].mxu0 %v1407
    %v1478 = vpop.f32.mrb[0].mxu0
    %v1479 = vadd.f32 0.0, %v1478
    %v1480 = vpop.f32.mrb[0].mxu0
    %1481 = vmatprep.mubr.f32.mxu0 0.0
    %1482 = vmatmul.mubr.f32.gmra.mrb[0].mxu0 %v1410
    %v1483 = vpop.f32.mrb[0].mxu0
    %v1484 = vadd.f32 0.0, %v1483
    %v1485 = vpop.f32.mrb[0].mxu0
    %1486 = vdwg.mxu0
    %1489 = vrot.lane.b32.xlu0 %v862, 64
    %v1490 = vpop.permute.xlu0 %1489
    %1491 = vrot.lane.b32.xlu0 %v863, 64
    %v1492 = vpop.permute.xlu0 %1491
    %v1496 = vsel %vm659, %v834, 0
    %v1499 = vsel %vm659, %v835, 0
    %1501 = vmatprep.subr.mxu0 0.0
    %1502 = vmatpush1.msra.mxu0 %v1490
    %1503 = vmatprep.subr.mxu0 0.0
    %1504 = vmatpush1.msra.mxu0 %v1492
    %1505 = vmatprep.subr.mxu0 0.0
    %1506 = vmatpush1.msra.mxu0 0.0
    %1507 = vmatprep.subr.mxu0 0.0
    %1508 = vmatpush1.msra.mxu0 0.0
    %1509 = vmatprep.subr.mxu0 0.0
    %1510 = vmatpush1.msra.mxu0 0.0
    %1511 = vmatprep.subr.mxu0 0.0
    %1512 = vmatpush1.msra.mxu0 0.0
    %1513 = vmatprep.subr.mxu0 0.0
    %1514 = vmatpush1.msra.mxu0 0.0
    %1515 = vmatprep.subr.mxu0 0.0
    %1516 = vmatpush1.msra.mxu0 0.0
    %1517 = vmatprep.subr.mxu0 0.0
    %1518 = vmatpush1.msra.mxu0 0.0
    %1519 = vmatprep.subr.mxu0 0.0
    %1520 = vmatpush1.msra.mxu0 0.0
    %1521 = vmatprep.subr.mxu0 0.0
    %1522 = vmatpush1.msra.mxu0 0.0
    %1523 = vmatprep.subr.mxu0 0.0
    %1524 = vmatpush1.msra.mxu0 0.0
    %1525 = vmatprep.subr.mxu0 0.0
    %1526 = vmatpush1.msra.mxu0 0.0
    %1527 = vmatprep.subr.mxu0 0.0
    %1528 = vmatpush1.msra.mxu0 0.0
    %1529 = vmatprep.subr.mxu0 0.0
    %1530 = vmatpush1.msra.mxu0 0.0
    %1531 = vmatprep.subr.mxu0 0.0
    %1532 = vmatpush1.msra.mxu0 0.0
    %1533 = vmatprep.subr.mxu0 0.0
    %1534 = vmatpush1.msra.mxu0 0.0
    %1535 = vmatprep.subr.mxu0 0.0
    %1536 = vmatpush1.msra.mxu0 0.0
    %1537 = vmatprep.subr.mxu0 0.0
    %1538 = vmatpush1.msra.mxu0 0.0
    %1539 = vmatprep.subr.mxu0 0.0
    %1540 = vmatpush1.msra.mxu0 0.0
    %1541 = vmatprep.subr.mxu0 0.0
    %1542 = vmatpush1.msra.mxu0 0.0
    %1543 = vmatprep.subr.mxu0 0.0
    %1544 = vmatpush1.msra.mxu0 0.0
    %1545 = vmatprep.subr.mxu0 0.0
    %1546 = vmatpush1.msra.mxu0 0.0
    %1547 = vmatprep.subr.mxu0 0.0
    %1548 = vmatpush1.msra.mxu0 0.0
    %1549 = vmatprep.subr.mxu0 0.0
    %1550 = vmatpush1.msra.mxu0 0.0
    %1551 = vmatprep.subr.mxu0 0.0
    %1552 = vmatpush1.msra.mxu0 0.0
    %1553 = vmatprep.subr.mxu0 0.0
    %1554 = vmatpush1.msra.mxu0 0.0
    %1555 = vmatprep.subr.mxu0 0.0
    %1556 = vmatpush1.msra.mxu0 0.0
    %1557 = vmatprep.subr.mxu0 0.0
    %1558 = vmatpush1.msra.mxu0 0.0
    %1559 = vmatprep.subr.mxu0 0.0
    %1560 = vmatpush1.msra.mxu0 0.0
    %1561 = vmatprep.subr.mxu0 0.0
    %1562 = vmatpush1.msra.mxu0 0.0
    %1563 = vmatprep.subr.mxu0 0.0
    %1564 = vmatpush1.msra.mxu0 0.0
    %1565 = vmatprep.mubr.f32.mxu0 0.0
    %1566 = vmatmul.mubr.f32.gmra.mrb[0].mxu0 %v1496
    %v1567 = vpop.f32.mrb[0].mxu0
    %v1568 = vadd.f32 0.0, %v1567
    %v1569 = vpop.f32.mrb[0].mxu0
    %1570 = vmatprep.mubr.f32.mxu0 0.0
    %1571 = vmatmul.mubr.f32.gmra.mrb[0].mxu0 %v1499
    %v1572 = vpop.f32.mrb[0].mxu0
    %v1573 = vadd.f32 0.0, %v1572
    %v1574 = vpop.f32.mrb[0].mxu0
    %1575 = vdwg.mxu0
    %v1576 = vadd.f32 %v945, %v1034
    %v1577 = vadd.f32 %v950, %v1039
    %v1578 = vadd.f32 %v1301, %v1390
    %v1579 = vadd.f32 %v1306, %v1395
    %v1580 = vadd.f32 %v1576, %v1123
    %v1581 = vadd.f32 %v1577, %v1128
    %v1582 = vadd.f32 %v1578, %v1479
    %v1583 = vadd.f32 %v1579, %v1484
    %v1584 = vadd.f32 %v1580, %v1212
    %v1585 = vadd.f32 %v1581, %v1217
    %v1586 = vadd.f32 %v1582, %v1568
    %v1587 = vadd.f32 %v1583, %v1573
    %v1588 = vld [vmem:[%s7] sm:$0xff]
    %v1589 = vld [vmem:[%s7 + $0x8] sm:$0xff]
    %v1590 = vld [vmem:[%s7 + $0x10] sm:$0xff]
    %v1591 = vld [vmem:[%s7 + $0x18] sm:$0xff]
    %v1592 = vld [vmem:[%s8] sm:$0x1]
    %v1594 = vlaneseq
    %v1595 = vshrl.u32 %v1594, 7
    %v1596 = vsub.s32 0, %v1595
    %v1597 = vrot.slane %v1592, %v1596
    %v1600 = vsel %vm70, %v1584, 0
    %v1603 = vsel %vm70, %v1585, 0
    %v1606 = vsel %vm70, %v1586, 0
    %v1609 = vsel %vm70, %v1587, 0
    %v1612 = vsel %vm70, %v1588, 0
    %v1615 = vsel %vm70, %v1589, 0
    %v1618 = vsel %vm70, %v1590, 0
    %v1621 = vsel %vm70, %v1591, 0
    %1623 = vmatprep.subr.mxu0 0.0
    %1624 = vmatpush1.xpose.msra.mxu0 %v1612
    %1625 = vmatprep.subr.mxu0 0.0
    %1626 = vmatpush1.xpose.msra.mxu0 %v1615
    %1627 = vmatprep.subr.mxu0 0.0
    %1628 = vmatpush1.xpose.msra.mxu0 %v1618
    %1629 = vmatprep.subr.mxu0 0.0
    %1630 = vmatpush1.xpose.msra.mxu0 %v1621
    %1631 = vmatprep.subr.mxu0 0.0
    %1632 = vmatpush1.xpose.msra.mxu0 0.0
    %1633 = vmatprep.subr.mxu0 0.0
    %1634 = vmatpush1.xpose.msra.mxu0 0.0
    %1635 = vmatprep.subr.mxu0 0.0
    %1636 = vmatpush1.xpose.msra.mxu0 0.0
    %1637 = vmatprep.subr.mxu0 0.0
    %1638 = vmatpush1.xpose.msra.mxu0 0.0
    %1639 = vmatprep.subr.mxu0 0.0
    %1640 = vmatpush1.xpose.msra.mxu0 0.0
    %1641 = vmatprep.subr.mxu0 0.0
    %1642 = vmatpush1.xpose.msra.mxu0 0.0
    %1643 = vmatprep.subr.mxu0 0.0
    %1644 = vmatpush1.xpose.msra.mxu0 0.0
    %1645 = vmatprep.subr.mxu0 0.0
    %1646 = vmatpush1.xpose.msra.mxu0 0.0
    %1647 = vmatprep.subr.mxu0 0.0
    %1648 = vmatpush1.xpose.msra.mxu0 0.0
    %1649 = vmatprep.subr.mxu0 0.0
    %1650 = vmatpush1.xpose.msra.mxu0 0.0
    %1651 = vmatprep.subr.mxu0 0.0
    %1652 = vmatpush1.xpose.msra.mxu0 0.0
    %1653 = vmatprep.subr.mxu0 0.0
    %1654 = vmatpush1.xpose.msra.mxu0 0.0
    %1655 = vmatprep.subr.mxu0 0.0
    %1656 = vmatpush1.xpose.msra.mxu0 0.0
    %1657 = vmatprep.subr.mxu0 0.0
    %1658 = vmatpush1.xpose.msra.mxu0 0.0
    %1659 = vmatprep.subr.mxu0 0.0
    %1660 = vmatpush1.xpose.msra.mxu0 0.0
    %1661 = vmatprep.subr.mxu0 0.0
    %1662 = vmatpush1.xpose.msra.mxu0 0.0
    %1663 = vmatprep.subr.mxu0 0.0
    %1664 = vmatpush1.xpose.msra.mxu0 0.0
    %1665 = vmatprep.subr.mxu0 0.0
    %1666 = vmatpush1.xpose.msra.mxu0 0.0
    %1667 = vmatprep.subr.mxu0 0.0
    %1668 = vmatpush1.xpose.msra.mxu0 0.0
    %1669 = vmatprep.subr.mxu0 0.0
    %1670 = vmatpush1.xpose.msra.mxu0 0.0
    %1671 = vmatprep.subr.mxu0 0.0
    %1672 = vmatpush1.xpose.msra.mxu0 0.0
    %1673 = vmatprep.subr.mxu0 0.0
    %1674 = vmatpush1.xpose.msra.mxu0 0.0
    %1675 = vmatprep.subr.mxu0 0.0
    %1676 = vmatpush1.xpose.msra.mxu0 0.0
    %1677 = vmatprep.subr.mxu0 0.0
    %1678 = vmatpush1.xpose.msra.mxu0 0.0
    %1679 = vmatprep.subr.mxu0 0.0
    %1680 = vmatpush1.xpose.msra.mxu0 0.0
    %1681 = vmatprep.subr.mxu0 0.0
    %1682 = vmatpush1.xpose.msra.mxu0 0.0
    %1683 = vmatprep.subr.mxu0 0.0
    %1684 = vmatpush1.xpose.msra.mxu0 0.0
    %1685 = vmatprep.subr.mxu0 0.0
    %1686 = vmatpush1.xpose.msra.mxu0 0.0
    %1687 = vmatprep.mubr.f32.mxu0 0.0
    %1688 = vmatmul.mubr.f32.gmra.mrb[0].mxu0 %v1600
    %v1689 = vpop.f32.mrb[0].mxu0
    %v1690 = vadd.f32 %v1597, %v1689
    %v1691 = vpop.f32.mrb[0].mxu0
    %1692 = vmatprep.mubr.f32.mxu0 0.0
    %1693 = vmatmul.mubr.f32.gmra.mrb[0].mxu0 %v1603
    %v1694 = vpop.f32.mrb[0].mxu0
    %v1695 = vadd.f32 %v1597, %v1694
    %v1696 = vpop.f32.mrb[0].mxu0
    %1697 = vmatprep.mubr.f32.mxu0 0.0
    %1698 = vmatmul.mubr.f32.gmra.mrb[0].mxu0 %v1606
    %v1699 = vpop.f32.mrb[0].mxu0
    %v1700 = vadd.f32 %v1597, %v1699
    %v1701 = vpop.f32.mrb[0].mxu0
    %1702 = vmatprep.mubr.f32.mxu0 0.0
    %1703 = vmatmul.mubr.f32.gmra.mrb[0].mxu0 %v1609
    %v1704 = vpop.f32.mrb[0].mxu0
    %v1705 = vadd.f32 %v1597, %v1704
    %v1706 = vpop.f32.mrb[0].mxu0
    %1707 = vdwg.mxu0
    %v1708 = vadd.f32 %v63, %v1690
    %v1709 = vadd.f32 %v64, %v1695
    %v1710 = vadd.f32 %v65, %v1700
    %v1711 = vadd.f32 %v66, %v1705
    %v1712 = vld [vmem:[%s9] sm:$0x1]
    %v1713 = vld [vmem:[%s10] sm:$0x1]
    %v1714 = vsel %vm70, %v1708, 0.0
    %1715 = vadd.xlane.f32.xlu0 %v1714
    %v1716 = vpop.xlane.xlu0 %1715
    %v1717 = vsel %vm70, %v1709, 0.0
    %1718 = vadd.xlane.f32.xlu0 %v1717
    %v1719 = vpop.xlane.xlu0 %1718
    %v1720 = vsel %vm70, %v1710, 0.0
    %1721 = vadd.xlane.f32.xlu0 %v1720
    %v1722 = vpop.xlane.xlu0 %1721
    %v1723 = vsel %vm70, %v1711, 0.0
    %1724 = vadd.xlane.f32.xlu0 %v1723
    %v1725 = vpop.xlane.xlu0 %1724
    %v1726 = vmul.f32 %v1716, %v83
    %v1727 = vmul.f32 %v1719, %v83
    %v1728 = vmul.f32 %v1722, %v83
    %v1729 = vmul.f32 %v1725, %v83
    %v1730 = vmul.f32 %v1708, %v1708
    %v1731 = vmul.f32 %v1709, %v1709
    %v1732 = vmul.f32 %v1710, %v1710
    %v1733 = vmul.f32 %v1711, %v1711
    %v1734 = vsel %vm70, %v1730, 0.0
    %1735 = vadd.xlane.f32.xlu0 %v1734
    %v1736 = vpop.xlane.xlu0 %1735
    %v1737 = vsel %vm70, %v1731, 0.0
    %1738 = vadd.xlane.f32.xlu0 %v1737
    %v1739 = vpop.xlane.xlu0 %1738
    %v1740 = vsel %vm70, %v1732, 0.0
    %1741 = vadd.xlane.f32.xlu0 %v1740
    %v1742 = vpop.xlane.xlu0 %1741
    %v1743 = vsel %vm70, %v1733, 0.0
    %1744 = vadd.xlane.f32.xlu0 %v1743
    %v1745 = vpop.xlane.xlu0 %1744
    %v1746 = vmul.f32 %v1736, %v83
    %v1747 = vmul.f32 %v1739, %v83
    %v1748 = vmul.f32 %v1742, %v83
    %v1749 = vmul.f32 %v1745, %v83
    %v1750 = vmul.f32 %v1726, %v1726
    %v1751 = vmul.f32 %v1727, %v1727
    %v1752 = vmul.f32 %v1728, %v1728
    %v1753 = vmul.f32 %v1729, %v1729
    %v1754 = vsub.f32 %v1746, %v1750
    %v1755 = vsub.f32 %v1747, %v1751
    %v1756 = vsub.f32 %v1748, %v1752
    %v1757 = vsub.f32 %v1749, %v1753
    %v1758 = vsub.f32 %v1708, %v1726
    %v1759 = vsub.f32 %v1709, %v1727
    %v1760 = vsub.f32 %v1710, %v1728
    %v1761 = vsub.f32 %v1711, %v1729
    %v1762 = vadd.f32 %v1754, 1e-05
    %v1763 = vadd.f32 %v1755, 1e-05
    %v1764 = vadd.f32 %v1756, 1e-05
    %v1765 = vadd.f32 %v1757, 1e-05
    %v1766 = vrsqrt.pop %v1762
    %v1767 = vrsqrt.pop %v1763
    %v1768 = vrsqrt.pop %v1764
    %v1769 = vrsqrt.pop %v1765
    %v1770 = vmul.f32 %v1758, %v1766
    %v1771 = vmul.f32 %v1759, %v1767
    %v1772 = vmul.f32 %v1760, %v1768
    %v1773 = vmul.f32 %v1761, %v1769
    %v1775 = vlaneseq
    %v1776 = vshrl.u32 %v1775, 7
    %v1777 = vsub.s32 0, %v1776
    %v1778 = vrot.slane %v1712, %v1777
    %v1780 = vmul.f32 %v1770, %v1778
    %v1781 = vmul.f32 %v1771, %v1778
    %v1782 = vmul.f32 %v1772, %v1778
    %v1783 = vmul.f32 %v1773, %v1778
    %v1785 = vlaneseq
    %v1786 = vshrl.u32 %v1785, 7
    %v1787 = vsub.s32 0, %v1786
    %v1788 = vrot.slane %v1713, %v1787
    %v1790 = vadd.f32 %v1780, %v1788
    %v1791 = vadd.f32 %v1781, %v1788
    %v1792 = vadd.f32 %v1782, %v1788
    %v1793 = vadd.f32 %v1783, %v1788
    %v1794 = vld [vmem:[%s11] sm:$0xff]
    %v1795 = vld [vmem:[%s11 + $0x8] sm:$0xff]
    %v1796 = vld [vmem:[%s11 + $0x10] sm:$0xff]
    %v1797 = vld [vmem:[%s11 + $0x18] sm:$0xff]
    %v1798 = vld [vmem:[%s11 + $0x20] sm:$0xff]
    %v1799 = vld [vmem:[%s11 + $0x28] sm:$0xff]
    %v1800 = vld [vmem:[%s11 + $0x30] sm:$0xff]
    %v1801 = vld [vmem:[%s11 + $0x38] sm:$0xff]
    %v1802 = vld [vmem:[%s12] sm:$0x1]
    %v1804 = vlaneseq
    %v1805 = vshrl.u32 %v1804, 7
    %v1806 = vsub.s32 0, %v1805
    %v1807 = vrot.slane %v1802, %v1806
    %v1810 = vsel %vm70, %v1790, 0
    %v1813 = vsel %vm70, %v1791, 0
    %v1816 = vsel %vm70, %v1792, 0
    %v1819 = vsel %vm70, %v1793, 0
    %v1822 = vsel %vm70, %v1794, 0
    %v1825 = vsel %vm70, %v1795, 0
    %v1828 = vsel %vm70, %v1796, 0
    %v1831 = vsel %vm70, %v1797, 0
    %v1834 = vsel %vm70, %v1798, 0
    %v1837 = vsel %vm70, %v1799, 0
    %v1840 = vsel %vm70, %v1800, 0
    %v1843 = vsel %vm70, %v1801, 0
    %1845 = vmatprep.subr.mxu0 0.0
    %1846 = vmatpush1.xpose.msra.mxu0 %v1822
    %1847 = vmatprep.subr.mxu0 0.0
    %1848 = vmatpush1.xpose.msra.mxu0 %v1825
    %1849 = vmatprep.subr.mxu0 0.0
    %1850 = vmatpush1.xpose.msra.mxu0 %v1828
    %1851 = vmatprep.subr.mxu0 0.0
    %1852 = vmatpush1.xpose.msra.mxu0 %v1831
    %1853 = vmatprep.subr.mxu0 0.0
    %1854 = vmatpush1.xpose.msra.mxu0 %v1834
    %1855 = vmatprep.subr.mxu0 0.0
    %1856 = vmatpush1.xpose.msra.mxu0 %v1837
    %1857 = vmatprep.subr.mxu0 0.0
    %1858 = vmatpush1.xpose.msra.mxu0 %v1840
    %1859 = vmatprep.subr.mxu0 0.0
    %1860 = vmatpush1.xpose.msra.mxu0 %v1843
    %1861 = vmatprep.subr.mxu0 0.0
    %1862 = vmatpush1.xpose.msra.mxu0 0.0
    %1863 = vmatprep.subr.mxu0 0.0
    %1864 = vmatpush1.xpose.msra.mxu0 0.0
    %1865 = vmatprep.subr.mxu0 0.0
    %1866 = vmatpush1.xpose.msra.mxu0 0.0
    %1867 = vmatprep.subr.mxu0 0.0
    %1868 = vmatpush1.xpose.msra.mxu0 0.0
    %1869 = vmatprep.subr.mxu0 0.0
    %1870 = vmatpush1.xpose.msra.mxu0 0.0
    %1871 = vmatprep.subr.mxu0 0.0
    %1872 = vmatpush1.xpose.msra.mxu0 0.0
    %1873 = vmatprep.subr.mxu0 0.0
    %1874 = vmatpush1.xpose.msra.mxu0 0.0
    %1875 = vmatprep.subr.mxu0 0.0
    %1876 = vmatpush1.xpose.msra.mxu0 0.0
    %1877 = vmatprep.subr.mxu0 0.0
    %1878 = vmatpush1.xpose.msra.mxu0 0.0
    %1879 = vmatprep.subr.mxu0 0.0
    %1880 = vmatpush1.xpose.msra.mxu0 0.0
    %1881 = vmatprep.subr.mxu0 0.0
    %1882 = vmatpush1.xpose.msra.mxu0 0.0
    %1883 = vmatprep.subr.mxu0 0.0
    %1884 = vmatpush1.xpose.msra.mxu0 0.0
    %1885 = vmatprep.subr.mxu0 0.0
    %1886 = vmatpush1.xpose.msra.mxu0 0.0
    %1887 = vmatprep.subr.mxu0 0.0
    %1888 = vmatpush1.xpose.msra.mxu0 0.0
    %1889 = vmatprep.subr.mxu0 0.0
    %1890 = vmatpush1.xpose.msra.mxu0 0.0
    %1891 = vmatprep.subr.mxu0 0.0
    %1892 = vmatpush1.xpose.msra.mxu0 0.0
    %1893 = vmatprep.subr.mxu0 0.0
    %1894 = vmatpush1.xpose.msra.mxu0 0.0
    %1895 = vmatprep.subr.mxu0 0.0
    %1896 = vmatpush1.xpose.msra.mxu0 0.0
    %1897 = vmatprep.subr.mxu0 0.0
    %1898 = vmatpush1.xpose.msra.mxu0 0.0
    %1899 = vmatprep.subr.mxu0 0.0
    %1900 = vmatpush1.xpose.msra.mxu0 0.0
    %1901 = vmatprep.subr.mxu0 0.0
    %1902 = vmatpush1.xpose.msra.mxu0 0.0
    %1903 = vmatprep.subr.mxu0 0.0
    %1904 = vmatpush1.xpose.msra.mxu0 0.0
    %1905 = vmatprep.subr.mxu0 0.0
    %1906 = vmatpush1.xpose.msra.mxu0 0.0
    %1907 = vmatprep.subr.mxu0 0.0
    %1908 = vmatpush1.xpose.msra.mxu0 0.0
    %1909 = vmatprep.mubr.f32.mxu0 0.0
    %1910 = vmatmul.mubr.f32.gmra.mrb[0].mxu0 %v1810
    %v1911 = vpop.f32.mrb[0].mxu0
    %v1912 = vadd.f32 %v1807, %v1911
    %v1913 = vpop.f32.mrb[0].mxu0
    %1914 = vmatprep.mubr.f32.mxu0 0.0
    %1915 = vmatmul.mubr.f32.gmra.mrb[0].mxu0 %v1813
    %v1916 = vpop.f32.mrb[0].mxu0
    %v1917 = vadd.f32 %v1807, %v1916
    %v1918 = vpop.f32.mrb[0].mxu0
    %1919 = vmatprep.mubr.f32.mxu0 0.0
    %1920 = vmatmul.mubr.f32.gmra.mrb[0].mxu0 %v1816
    %v1921 = vpop.f32.mrb[0].mxu0
    %v1922 = vadd.f32 %v1807, %v1921
    %v1923 = vpop.f32.mrb[0].mxu0
    %1924 = vmatprep.mubr.f32.mxu0 0.0
    %1925 = vmatmul.mubr.f32.gmra.mrb[0].mxu0 %v1819
    %v1926 = vpop.f32.mrb[0].mxu0
    %v1927 = vadd.f32 %v1807, %v1926
    %v1928 = vpop.f32.mrb[0].mxu0
    %1929 = vdwg.mxu0
    %v1930 = vmul.f32 %v1912, 0.5
    %v1931 = vmul.f32 %v1917, 0.5
    %v1932 = vmul.f32 %v1922, 0.5
    %v1933 = vmul.f32 %v1927, 0.5
    %v1934 = vmul.f32 %v1912, 0.044715
    %v1935 = vmul.f32 %v1917, 0.044715
    %v1936 = vmul.f32 %v1922, 0.044715
    %v1937 = vmul.f32 %v1927, 0.044715
    %v1938 = vmul.f32 %v1934, %v1912
    %v1939 = vmul.f32 %v1935, %v1917
    %v1940 = vmul.f32 %v1936, %v1922
    %v1941 = vmul.f32 %v1937, %v1927
    %v1942 = vmul.f32 %v1938, %v1912
    %v1943 = vmul.f32 %v1939, %v1917
    %v1944 = vmul.f32 %v1940, %v1922
    %v1945 = vmul.f32 %v1941, %v1927
    %v1946 = vadd.f32 %v1912, %v1942
    %v1947 = vadd.f32 %v1917, %v1943
    %v1948 = vadd.f32 %v1922, %v1944
    %v1949 = vadd.f32 %v1927, %v1945
    %v1950 = vmul.f32 %v1946, 0.7978846
    %v1951 = vmul.f32 %v1947, 0.7978846
    %v1952 = vmul.f32 %v1948, 0.7978846
    %v1953 = vmul.f32 %v1949, 0.7978846
    %v1954 = vtanh.pop %v1950
    %v1955 = vtanh.pop %v1951
    %v1956 = vtanh.pop %v1952
    %v1957 = vtanh.pop %v1953
    %v1958 = vadd.f32 %v1954, 1.0
    %v1959 = vadd.f32 %v1955, 1.0
    %v1960 = vadd.f32 %v1956, 1.0
    %v1961 = vadd.f32 %v1957, 1.0
    %v1962 = vmul.f32 %v1930, %v1958
    %v1963 = vmul.f32 %v1931, %v1959
    %v1964 = vmul.f32 %v1932, %v1960
    %v1965 = vmul.f32 %v1933, %v1961
    %v1966 = vld [vmem:[%s13] sm:$0xff]
    %v1967 = vld [vmem:[%s13 + $0x8] sm:$0xff]
    %v1968 = vld [vmem:[%s13 + $0x10] sm:$0xff]
    %v1969 = vld [vmem:[%s13 + $0x18] sm:$0xff]
    %v1970 = vld [vmem:[%s14] sm:$0x1]
    %v1972 = vlaneseq
    %v1973 = vshrl.u32 %v1972, 7
    %v1974 = vsub.s32 0, %v1973
    %v1975 = vrot.slane %v1970, %v1974
    %vm1977 = vcmask 523264
    %v1979 = vsel %vm1977, %v1962, 0
    %v1982 = vsel %vm1977, %v1963, 0
    %v1985 = vsel %vm1977, %v1964, 0
    %v1988 = vsel %vm1977, %v1965, 0
    %v1991 = vsel %vm1977, %v1966, 0
    %v1994 = vsel %vm1977, %v1967, 0
    %v1997 = vsel %vm1977, %v1968, 0
    %v2000 = vsel %vm1977, %v1969, 0
    %2002 = vmatprep.subr.mxu0 0.0
    %2003 = vmatpush1.xpose.msra.mxu0 %v1991
    %2004 = vmatprep.subr.mxu0 0.0
    %2005 = vmatpush1.xpose.msra.mxu0 %v1994
    %2006 = vmatprep.subr.mxu0 0.0
    %2007 = vmatpush1.xpose.msra.mxu0 %v1997
    %2008 = vmatprep.subr.mxu0 0.0
    %2009 = vmatpush1.xpose.msra.mxu0 %v2000
    %2010 = vmatprep.subr.mxu0 0.0
    %2011 = vmatpush1.xpose.msra.mxu0 0.0
    %2012 = vmatprep.subr.mxu0 0.0
    %2013 = vmatpush1.xpose.msra.mxu0 0.0
    %2014 = vmatprep.subr.mxu0 0.0
    %2015 = vmatpush1.xpose.msra.mxu0 0.0
    %2016 = vmatprep.subr.mxu0 0.0
    %2017 = vmatpush1.xpose.msra.mxu0 0.0
    %2018 = vmatprep.subr.mxu0 0.0
    %2019 = vmatpush1.xpose.msra.mxu0 0.0
    %2020 = vmatprep.subr.mxu0 0.0
    %2021 = vmatpush1.xpose.msra.mxu0 0.0
    %2022 = vmatprep.subr.mxu0 0.0
    %2023 = vmatpush1.xpose.msra.mxu0 0.0
    %2024 = vmatprep.subr.mxu0 0.0
    %2025 = vmatpush1.xpose.msra.mxu0 0.0
    %2026 = vmatprep.subr.mxu0 0.0
    %2027 = vmatpush1.xpose.msra.mxu0 0.0
    %2028 = vmatprep.subr.mxu0 0.0
    %2029 = vmatpush1.xpose.msra.mxu0 0.0
    %2030 = vmatprep.subr.mxu0 0.0
    %2031 = vmatpush1.xpose.msra.mxu0 0.0
    %2032 = vmatprep.subr.mxu0 0.0
    %2033 = vmatpush1.xpose.msra.mxu0 0.0
    %2034 = vmatprep.subr.mxu0 0.0
    %2035 = vmatpush1.xpose.msra.mxu0 0.0
    %2036 = vmatprep.subr.mxu0 0.0
    %2037 = vmatpush1.xpose.msra.mxu0 0.0
    %2038 = vmatprep.subr.mxu0 0.0
    %2039 = vmatpush1.xpose.msra.mxu0 0.0
    %2040 = vmatprep.subr.mxu0 0.0
    %2041 = vmatpush1.xpose.msra.mxu0 0.0
    %2042 = vmatprep.subr.mxu0 0.0
    %2043 = vmatpush1.xpose.msra.mxu0 0.0
    %2044 = vmatprep.subr.mxu0 0.0
    %2045 = vmatpush1.xpose.msra.mxu0 0.0
    %2046 = vmatprep.subr.mxu0 0.0
    %2047 = vmatpush1.xpose.msra.mxu0 0.0
    %2048 = vmatprep.subr.mxu0 0.0
    %2049 = vmatpush1.xpose.msra.mxu0 0.0
    %2050 = vmatprep.subr.mxu0 0.0
    %2051 = vmatpush1.xpose.msra.mxu0 0.0
    %2052 = vmatprep.subr.mxu0 0.0
    %2053 = vmatpush1.xpose.msra.mxu0 0.0
    %2054 = vmatprep.subr.mxu0 0.0
    %2055 = vmatpush1.xpose.msra.mxu0 0.0
    %2056 = vmatprep.subr.mxu0 0.0
    %2057 = vmatpush1.xpose.msra.mxu0 0.0
    %2058 = vmatprep.subr.mxu0 0.0
    %2059 = vmatpush1.xpose.msra.mxu0 0.0
    %2060 = vmatprep.subr.mxu0 0.0
    %2061 = vmatpush1.xpose.msra.mxu0 0.0
    %2062 = vmatprep.subr.mxu0 0.0
    %2063 = vmatpush1.xpose.msra.mxu0 0.0
    %2064 = vmatprep.subr.mxu0 0.0
    %2065 = vmatpush1.xpose.msra.mxu0 0.0
    %2066 = vmatprep.mubr.f32.mxu0 0.0
    %2067 = vmatmul.mubr.f32.gmra.mrb[0].mxu0 %v1979
    %v2068 = vpop.f32.mrb[0].mxu0
    %v2069 = vadd.f32 %v1975, %v2068
    %v2070 = vpop.f32.mrb[0].mxu0
    %2071 = vmatprep.mubr.f32.mxu0 0.0
    %2072 = vmatmul.mubr.f32.gmra.mrb[0].mxu0 %v1982
    %v2073 = vpop.f32.mrb[0].mxu0
    %v2074 = vadd.f32 %v1975, %v2073
    %v2075 = vpop.f32.mrb[0].mxu0
    %2076 = vmatprep.mubr.f32.mxu0 0.0
    %2077 = vmatmul.mubr.f32.gmra.mrb[0].mxu0 %v1985
    %v2078 = vpop.f32.mrb[0].mxu0
    %v2079 = vadd.f32 %v1975, %v2078
    %v2080 = vpop.f32.mrb[0].mxu0
    %2081 = vmatprep.mubr.f32.mxu0 0.0
    %2082 = vmatmul.mubr.f32.gmra.mrb[0].mxu0 %v1988
    %v2083 = vpop.f32.mrb[0].mxu0
    %v2084 = vadd.f32 %v1975, %v2083
    %v2085 = vpop.f32.mrb[0].mxu0
    %2086 = vdwg.mxu0
    %v2087 = vadd.f32 %v1708, %v2069
    %v2088 = vadd.f32 %v1709, %v2074
    %v2089 = vadd.f32 %v1710, %v2079
    %v2090 = vadd.f32 %v1711, %v2084
    %s2091 = scalar_lea.vmem %s3, 1
    %v2092 = vld [vmem:[%s2091] sm:$0x1]
    %s2093 = scalar_lea.vmem %s4, 1
    %v2094 = vld [vmem:[%s2093] sm:$0x1]
    %v2095 = vsel %vm70, %v2087, 0.0
    %2096 = vadd.xlane.f32.xlu0 %v2095
    %v2097 = vpop.xlane.xlu0 %2096
    %v2098 = vsel %vm70, %v2088, 0.0
    %2099 = vadd.xlane.f32.xlu0 %v2098
    %v2100 = vpop.xlane.xlu0 %2099
    %v2101 = vsel %vm70, %v2089, 0.0
    %2102 = vadd.xlane.f32.xlu0 %v2101
    %v2103 = vpop.xlane.xlu0 %2102
    %v2104 = vsel %vm70, %v2090, 0.0
    %2105 = vadd.xlane.f32.xlu0 %v2104
    %v2106 = vpop.xlane.xlu0 %2105
    %v2107 = vmul.f32 %v2097, %v83
    %v2108 = vmul.f32 %v2100, %v83
    %v2109 = vmul.f32 %v2103, %v83
    %v2110 = vmul.f32 %v2106, %v83
    %v2111 = vmul.f32 %v2087, %v2087
    %v2112 = vmul.f32 %v2088, %v2088
    %v2113 = vmul.f32 %v2089, %v2089
    %v2114 = vmul.f32 %v2090, %v2090
    %v2115 = vsel %vm70, %v2111, 0.0
    %2116 = vadd.xlane.f32.xlu0 %v2115
    %v2117 = vpop.xlane.xlu0 %2116
    %v2118 = vsel %vm70, %v2112, 0.0
    %2119 = vadd.xlane.f32.xlu0 %v2118
    %v2120 = vpop.xlane.xlu0 %2119
    %v2121 = vsel %vm70, %v2113, 0.0
    %2122 = vadd.xlane.f32.xlu0 %v2121
    %v2123 = vpop.xlane.xlu0 %2122
    %v2124 = vsel %vm70, %v2114, 0.0
    %2125 = vadd.xlane.f32.xlu0 %v2124
    %v2126 = vpop.xlane.xlu0 %2125
    %v2127 = vmul.f32 %v2117, %v83
    %v2128 = vmul.f32 %v2120, %v83
    %v2129 = vmul.f32 %v2123, %v83
    %v2130 = vmul.f32 %v2126, %v83
    %v2131 = vmul.f32 %v2107, %v2107
    %v2132 = vmul.f32 %v2108, %v2108
    %v2133 = vmul.f32 %v2109, %v2109
    %v2134 = vmul.f32 %v2110, %v2110
    %v2135 = vsub.f32 %v2127, %v2131
    %v2136 = vsub.f32 %v2128, %v2132
    %v2137 = vsub.f32 %v2129, %v2133
    %v2138 = vsub.f32 %v2130, %v2134
    %v2139 = vsub.f32 %v2087, %v2107
    %v2140 = vsub.f32 %v2088, %v2108
    %v2141 = vsub.f32 %v2089, %v2109
    %v2142 = vsub.f32 %v2090, %v2110
    %v2143 = vadd.f32 %v2135, 1e-05
    %v2144 = vadd.f32 %v2136, 1e-05
    %v2145 = vadd.f32 %v2137, 1e-05
    %v2146 = vadd.f32 %v2138, 1e-05
    %v2147 = vrsqrt.pop %v2143
    %v2148 = vrsqrt.pop %v2144
    %v2149 = vrsqrt.pop %v2145
    %v2150 = vrsqrt.pop %v2146
    %v2151 = vmul.f32 %v2139, %v2147
    %v2152 = vmul.f32 %v2140, %v2148
    %v2153 = vmul.f32 %v2141, %v2149
    %v2154 = vmul.f32 %v2142, %v2150
    %v2156 = vlaneseq
    %v2157 = vshrl.u32 %v2156, 7
    %v2158 = vsub.s32 0, %v2157
    %v2159 = vrot.slane %v2092, %v2158
    %v2161 = vmul.f32 %v2151, %v2159
    %v2162 = vmul.f32 %v2152, %v2159
    %v2163 = vmul.f32 %v2153, %v2159
    %v2164 = vmul.f32 %v2154, %v2159
    %v2166 = vlaneseq
    %v2167 = vshrl.u32 %v2166, 7
    %v2168 = vsub.s32 0, %v2167
    %v2169 = vrot.slane %v2094, %v2168
    %v2171 = vadd.f32 %v2161, %v2169
    %v2172 = vadd.f32 %v2162, %v2169
    %v2173 = vadd.f32 %v2163, %v2169
    %v2174 = vadd.f32 %v2164, %v2169
    %s2175 = scalar_lea.vmem %s5, 96
    %v2176 = vld [vmem:[%s2175] sm:$0xff]
    %v2177 = vld [vmem:[%s2175 + $0x8] sm:$0xff]
    %v2178 = vld [vmem:[%s2175 + $0x10] sm:$0xff]
    %v2179 = vld [vmem:[%s2175 + $0x18] sm:$0xff]
    %v2180 = vld [vmem:[%s2175 + $0x20] sm:$0xff]
    %v2181 = vld [vmem:[%s2175 + $0x28] sm:$0xff]
    %v2182 = vld [vmem:[%s2175 + $0x30] sm:$0xff]
    %v2183 = vld [vmem:[%s2175 + $0x38] sm:$0xff]
    %v2184 = vld [vmem:[%s2175 + $0x40] sm:$0xff]
    %v2185 = vld [vmem:[%s2175 + $0x48] sm:$0xff]
    %v2186 = vld [vmem:[%s2175 + $0x50] sm:$0xff]
    %v2187 = vld [vmem:[%s2175 + $0x58] sm:$0xff]
    %s2188 = scalar_lea.vmem %s6, 1
    %v2189 = vld [vmem:[%s2188] sm:$0x1]
    %v2191 = vlaneseq
    %v2192 = vshrl.u32 %v2191, 7
    %v2193 = vsub.s32 0, %v2192
    %v2194 = vrot.slane %v2189, %v2193
    %v2197 = vsel %vm70, %v2171, 0
    %v2200 = vsel %vm70, %v2172, 0
    %v2203 = vsel %vm70, %v2173, 0
    %v2206 = vsel %vm70, %v2174, 0
    %v2209 = vsel %vm70, %v2176, 0
    %v2212 = vsel %vm70, %v2177, 0
    %v2215 = vsel %vm70, %v2178, 0
    %v2218 = vsel %vm70, %v2179, 0
    %v2221 = vsel %vm70, %v2180, 0
    %v2224 = vsel %vm70, %v2181, 0
    %v2227 = vsel %vm70, %v2182, 0
    %v2230 = vsel %vm70, %v2183, 0
    %v2233 = vsel %vm70, %v2184, 0
    %v2236 = vsel %vm70, %v2185, 0
    %v2239 = vsel %vm70, %v2186, 0
    %v2242 = vsel %vm70, %v2187, 0
    %2244 = vmatprep.subr.mxu0 0.0
    %2245 = vmatpush1.xpose.msra.mxu0 %v2209
    %2246 = vmatprep.subr.mxu0 0.0
    %2247 = vmatpush1.xpose.msra.mxu0 %v2212
    %2248 = vmatprep.subr.mxu0 0.0
    %2249 = vmatpush1.xpose.msra.mxu0 %v2215
    %2250 = vmatprep.subr.mxu0 0.0
    %2251 = vmatpush1.xpose.msra.mxu0 %v2218
    %2252 = vmatprep.subr.mxu0 0.0
    %2253 = vmatpush1.xpose.msra.mxu0 %v2221
    %2254 = vmatprep.subr.mxu0 0.0
    %2255 = vmatpush1.xpose.msra.mxu0 %v2224
    %2256 = vmatprep.subr.mxu0 0.0
    %2257 = vmatpush1.xpose.msra.mxu0 %v2227
    %2258 = vmatprep.subr.mxu0 0.0
    %2259 = vmatpush1.xpose.msra.mxu0 %v2230
    %2260 = vmatprep.subr.mxu0 0.0
    %2261 = vmatpush1.xpose.msra.mxu0 %v2233
    %2262 = vmatprep.subr.mxu0 0.0
    %2263 = vmatpush1.xpose.msra.mxu0 %v2236
    %2264 = vmatprep.subr.mxu0 0.0
    %2265 = vmatpush1.xpose.msra.mxu0 %v2239
    %2266 = vmatprep.subr.mxu0 0.0
    %2267 = vmatpush1.xpose.msra.mxu0 %v2242
    %2268 = vmatprep.subr.mxu0 0.0
    %2269 = vmatpush1.xpose.msra.mxu0 0.0
    %2270 = vmatprep.subr.mxu0 0.0
    %2271 = vmatpush1.xpose.msra.mxu0 0.0
    %2272 = vmatprep.subr.mxu0 0.0
    %2273 = vmatpush1.xpose.msra.mxu0 0.0
    %2274 = vmatprep.subr.mxu0 0.0
    %2275 = vmatpush1.xpose.msra.mxu0 0.0
    %2276 = vmatprep.subr.mxu0 0.0
    %2277 = vmatpush1.xpose.msra.mxu0 0.0
    %2278 = vmatprep.subr.mxu0 0.0
    %2279 = vmatpush1.xpose.msra.mxu0 0.0
    %2280 = vmatprep.subr.mxu0 0.0
    %2281 = vmatpush1.xpose.msra.mxu0 0.0
    %2282 = vmatprep.subr.mxu0 0.0
    %2283 = vmatpush1.xpose.msra.mxu0 0.0
    %2284 = vmatprep.subr.mxu0 0.0
    %2285 = vmatpush1.xpose.msra.mxu0 0.0
    %2286 = vmatprep.subr.mxu0 0.0
    %2287 = vmatpush1.xpose.msra.mxu0 0.0
    %2288 = vmatprep.subr.mxu0 0.0
    %2289 = vmatpush1.xpose.msra.mxu0 0.0
    %2290 = vmatprep.subr.mxu0 0.0
    %2291 = vmatpush1.xpose.msra.mxu0 0.0
    %2292 = vmatprep.subr.mxu0 0.0
    %2293 = vmatpush1.xpose.msra.mxu0 0.0
    %2294 = vmatprep.subr.mxu0 0.0
    %2295 = vmatpush1.xpose.msra.mxu0 0.0
    %2296 = vmatprep.subr.mxu0 0.0
    %2297 = vmatpush1.xpose.msra.mxu0 0.0
    %2298 = vmatprep.subr.mxu0 0.0
    %2299 = vmatpush1.xpose.msra.mxu0 0.0
    %2300 = vmatprep.subr.mxu0 0.0
    %2301 = vmatpush1.xpose.msra.mxu0 0.0
    %2302 = vmatprep.subr.mxu0 0.0
    %2303 = vmatpush1.xpose.msra.mxu0 0.0
    %2304 = vmatprep.subr.mxu0 0.0
    %2305 = vmatpush1.xpose.msra.mxu0 0.0
    %2306 = vmatprep.subr.mxu0 0.0
    %2307 = vmatpush1.xpose.msra.mxu0 0.0
    %2308 = vmatprep.mubr.f32.mxu0 0.0
    %2309 = vmatmul.mubr.f32.gmra.mrb[0].mxu0 %v2197
    %v2310 = vpop.f32.mrb[0].mxu0
    %v2311 = vadd.f32 %v2194, %v2310
    %v2312 = vpop.f32.mrb[0].mxu0
    %2313 = vmatprep.mubr.f32.mxu0 0.0
    %2314 = vmatmul.mubr.f32.gmra.mrb[0].mxu0 %v2200
    %v2315 = vpop.f32.mrb[0].mxu0
    %v2316 = vadd.f32 %v2194, %v2315
    %v2317 = vpop.f32.mrb[0].mxu0
    %2318 = vmatprep.mubr.f32.mxu0 0.0
    %2319 = vmatmul.mubr.f32.gmra.mrb[0].mxu0 %v2203
    %v2320 = vpop.f32.mrb[0].mxu0
    %v2321 = vadd.f32 %v2194, %v2320
    %v2322 = vpop.f32.mrb[0].mxu0
    %2323 = vmatprep.mubr.f32.mxu0 0.0
    %2324 = vmatmul.mubr.f32.gmra.mrb[0].mxu0 %v2206
    %v2325 = vpop.f32.mrb[0].mxu0
    %v2326 = vadd.f32 %v2194, %v2325
    %v2327 = vpop.f32.mrb[0].mxu0
    %2328 = vdwg.mxu0
    %v2329 = vmul.f32 %v2311, %v332
    %v2330 = vmul.f32 %v2316, %v332
    %v2331 = vmul.f32 %v2311, %v336
    %v2332 = vmul.f32 %v2316, %v336
    %v2333 = vmul.f32 %v2311, %v340
    %v2334 = vmul.f32 %v2316, %v340
    %v2335 = vmul.f32 %v2311, %v344
    %v2336 = vmul.f32 %v2316, %v344
    %v2337 = vmul.f32 %v2321, %v332
    %v2338 = vmul.f32 %v2326, %v332
    %v2339 = vmul.f32 %v2321, %v336
    %v2340 = vmul.f32 %v2326, %v336
    %v2341 = vmul.f32 %v2321, %v340
    %v2342 = vmul.f32 %v2326, %v340
    %v2343 = vmul.f32 %v2321, %v344
    %v2344 = vmul.f32 %v2326, %v344
    %2347 = vrot.lane.b32.xlu0 %v2311, 96
    %v2348 = vpop.permute.xlu0 %2347
    %2349 = vrot.lane.b32.xlu0 %v2316, 96
    %v2350 = vpop.permute.xlu0 %2349
    %v2352 = vsel %vm70, %v2329, 0
    %v2355 = vsel %vm70, %v2330, 0
    %v2358 = vsel %vm70, %v2331, 0
    %v2361 = vsel %vm70, %v2332, 0
    %v2364 = vsel %vm70, %v2333, 0
    %v2367 = vsel %vm70, %v2334, 0
    %v2370 = vsel %vm70, %v2335, 0
    %v2373 = vsel %vm70, %v2336, 0
    %v2375 = vsel %vm70, %v2348, 0
    %v2377 = vsel %vm70, %v2350, 0
    %2379 = vmatprep.subr.mxu0 0.0
    %2380 = vmatpush1.xpose.msra.mxu0 %v2375
    %2381 = vmatprep.subr.mxu0 0.0
    %2382 = vmatpush1.xpose.msra.mxu0 %v2377
    %2383 = vmatprep.subr.mxu0 0.0
    %2384 = vmatpush1.xpose.msra.mxu0 0.0
    %2385 = vmatprep.subr.mxu0 0.0
    %2386 = vmatpush1.xpose.msra.mxu0 0.0
    %2387 = vmatprep.subr.mxu0 0.0
    %2388 = vmatpush1.xpose.msra.mxu0 0.0
    %2389 = vmatprep.subr.mxu0 0.0
    %2390 = vmatpush1.xpose.msra.mxu0 0.0
    %2391 = vmatprep.subr.mxu0 0.0
    %2392 = vmatpush1.xpose.msra.mxu0 0.0
    %2393 = vmatprep.subr.mxu0 0.0
    %2394 = vmatpush1.xpose.msra.mxu0 0.0
    %2395 = vmatprep.subr.mxu0 0.0
    %2396 = vmatpush1.xpose.msra.mxu0 0.0
    %2397 = vmatprep.subr.mxu0 0.0
    %2398 = vmatpush1.xpose.msra.mxu0 0.0
    %2399 = vmatprep.subr.mxu0 0.0
    %2400 = vmatpush1.xpose.msra.mxu0 0.0
    %2401 = vmatprep.subr.mxu0 0.0
    %2402 = vmatpush1.xpose.msra.mxu0 0.0
    %2403 = vmatprep.subr.mxu0 0.0
    %2404 = vmatpush1.xpose.msra.mxu0 0.0
    %2405 = vmatprep.subr.mxu0 0.0
    %2406 = vmatpush1.xpose.msra.mxu0 0.0
    %2407 = vmatprep.subr.mxu0 0.0
    %2408 = vmatpush1.xpose.msra.mxu0 0.0
    %2409 = vmatprep.subr.mxu0 0.0
    %2410 = vmatpush1.xpose.msra.mxu0 0.0
    %2411 = vmatprep.subr.mxu0 0.0
    %2412 = vmatpush1.xpose.msra.mxu0 0.0
    %2413 = vmatprep.subr.mxu0 0.0
    %2414 = vmatpush1.xpose.msra.mxu0 0.0
    %2415 = vmatprep.subr.mxu0 0.0
    %2416 = vmatpush1.xpose.msra.mxu0 0.0
    %2417 = vmatprep.subr.mxu0 0.0
    %2418 = vmatpush1.xpose.msra.mxu0 0.0
    %2419 = vmatprep.subr.mxu0 0.0
    %2420 = vmatpush1.xpose.msra.mxu0 0.0
    %2421 = vmatprep.subr.mxu0 0.0
    %2422 = vmatpush1.xpose.msra.mxu0 0.0
    %2423 = vmatprep.subr.mxu0 0.0
    %2424 = vmatpush1.xpose.msra.mxu0 0.0
    %2425 = vmatprep.subr.mxu0 0.0
    %2426 = vmatpush1.xpose.msra.mxu0 0.0
    %2427 = vmatprep.subr.mxu0 0.0
    %2428 = vmatpush1.xpose.msra.mxu0 0.0
    %2429 = vmatprep.subr.mxu0 0.0
    %2430 = vmatpush1.xpose.msra.mxu0 0.0
    %2431 = vmatprep.subr.mxu0 0.0
    %2432 = vmatpush1.xpose.msra.mxu0 0.0
    %2433 = vmatprep.subr.mxu0 0.0
    %2434 = vmatpush1.xpose.msra.mxu0 0.0
    %2435 = vmatprep.subr.mxu0 0.0
    %2436 = vmatpush1.xpose.msra.mxu0 0.0
    %2437 = vmatprep.subr.mxu0 0.0
    %2438 = vmatpush1.xpose.msra.mxu0 0.0
    %2439 = vmatprep.subr.mxu0 0.0
    %2440 = vmatpush1.xpose.msra.mxu0 0.0
    %2441 = vmatprep.subr.mxu0 0.0
    %2442 = vmatpush1.xpose.msra.mxu0 0.0
    %2443 = vmatprep.mubr.f32.mxu0 0.0
    %2444 = vmatmul.mubr.f32.gmra.mrb[0].mxu0 %v2352
    %v2445 = vpop.f32.mrb[0].mxu0
    %v2446 = vadd.f32 0.0, %v2445
    %v2447 = vpop.f32.mrb[0].mxu0
    %2448 = vmatprep.mubr.f32.mxu0 0.0
    %2449 = vmatmul.mubr.f32.gmra.mrb[0].mxu0 %v2355
    %v2450 = vpop.f32.mrb[0].mxu0
    %v2451 = vadd.f32 0.0, %v2450
    %v2452 = vpop.f32.mrb[0].mxu0
    %2453 = vmatprep.mubr.f32.mxu0 0.0
    %2454 = vmatmul.mubr.f32.gmra.mrb[0].mxu0 %v2358
    %v2455 = vpop.f32.mrb[0].mxu0
    %v2456 = vadd.f32 0.0, %v2455
    %v2457 = vpop.f32.mrb[0].mxu0
    %2458 = vmatprep.mubr.f32.mxu0 0.0
    %2459 = vmatmul.mubr.f32.gmra.mrb[0].mxu0 %v2361
    %v2460 = vpop.f32.mrb[0].mxu0
    %v2461 = vadd.f32 0.0, %v2460
    %v2462 = vpop.f32.mrb[0].mxu0
    %2463 = vmatprep.mubr.f32.mxu0 0.0
    %2464 = vmatmul.mubr.f32.gmra.mrb[0].mxu0 %v2364
    %v2465 = vpop.f32.mrb[0].mxu0
    %v2466 = vadd.f32 0.0, %v2465
    %v2467 = vpop.f32.mrb[0].mxu0
    %2468 = vmatprep.mubr.f32.mxu0 0.0
    %2469 = vmatmul.mubr.f32.gmra.mrb[0].mxu0 %v2367
    %v2470 = vpop.f32.mrb[0].mxu0
    %v2471 = vadd.f32 0.0, %v2470
    %v2472 = vpop.f32.mrb[0].mxu0
    %2473 = vmatprep.mubr.f32.mxu0 0.0
    %2474 = vmatmul.mubr.f32.gmra.mrb[0].mxu0 %v2370
    %v2475 = vpop.f32.mrb[0].mxu0
    %v2476 = vadd.f32 0.0, %v2475
    %v2477 = vpop.f32.mrb[0].mxu0
    %2478 = vmatprep.mubr.f32.mxu0 0.0
    %2479 = vmatmul.mubr.f32.gmra.mrb[0].mxu0 %v2373
    %v2480 = vpop.f32.mrb[0].mxu0
    %v2481 = vadd.f32 0.0, %v2480
    %v2482 = vpop.f32.mrb[0].mxu0
    %2483 = vdwg.mxu0
    %2486 = vrot.lane.b32.xlu0 %v2321, 96
    %v2487 = vpop.permute.xlu0 %2486
    %2488 = vrot.lane.b32.xlu0 %v2326, 96
    %v2489 = vpop.permute.xlu0 %2488
    %v2491 = vsel %vm70, %v2337, 0
    %v2494 = vsel %vm70, %v2338, 0
    %v2497 = vsel %vm70, %v2339, 0
    %v2500 = vsel %vm70, %v2340, 0
    %v2503 = vsel %vm70, %v2341, 0
    %v2506 = vsel %vm70, %v2342, 0
    %v2509 = vsel %vm70, %v2343, 0
    %v2512 = vsel %vm70, %v2344, 0
    %v2514 = vsel %vm70, %v2487, 0
    %v2516 = vsel %vm70, %v2489, 0
    %2518 = vmatprep.subr.mxu0 0.0
    %2519 = vmatpush1.xpose.msra.mxu0 %v2514
    %2520 = vmatprep.subr.mxu0 0.0
    %2521 = vmatpush1.xpose.msra.mxu0 %v2516
    %2522 = vmatprep.subr.mxu0 0.0
    %2523 = vmatpush1.xpose.msra.mxu0 0.0
    %2524 = vmatprep.subr.mxu0 0.0
    %2525 = vmatpush1.xpose.msra.mxu0 0.0
    %2526 = vmatprep.subr.mxu0 0.0
    %2527 = vmatpush1.xpose.msra.mxu0 0.0
    %2528 = vmatprep.subr.mxu0 0.0
    %2529 = vmatpush1.xpose.msra.mxu0 0.0
    %2530 = vmatprep.subr.mxu0 0.0
    %2531 = vmatpush1.xpose.msra.mxu0 0.0
    %2532 = vmatprep.subr.mxu0 0.0
    %2533 = vmatpush1.xpose.msra.mxu0 0.0
    %2534 = vmatprep.subr.mxu0 0.0
    %2535 = vmatpush1.xpose.msra.mxu0 0.0
    %2536 = vmatprep.subr.mxu0 0.0
    %2537 = vmatpush1.xpose.msra.mxu0 0.0
    %2538 = vmatprep.subr.mxu0 0.0
    %2539 = vmatpush1.xpose.msra.mxu0 0.0
    %2540 = vmatprep.subr.mxu0 0.0
    %2541 = vmatpush1.xpose.msra.mxu0 0.0
    %2542 = vmatprep.subr.mxu0 0.0
    %2543 = vmatpush1.xpose.msra.mxu0 0.0
    %2544 = vmatprep.subr.mxu0 0.0
    %2545 = vmatpush1.xpose.msra.mxu0 0.0
    %2546 = vmatprep.subr.mxu0 0.0
    %2547 = vmatpush1.xpose.msra.mxu0 0.0
    %2548 = vmatprep.subr.mxu0 0.0
    %2549 = vmatpush1.xpose.msra.mxu0 0.0
    %2550 = vmatprep.subr.mxu0 0.0
    %2551 = vmatpush1.xpose.msra.mxu0 0.0
    %2552 = vmatprep.subr.mxu0 0.0
    %2553 = vmatpush1.xpose.msra.mxu0 0.0
    %2554 = vmatprep.subr.mxu0 0.0
    %2555 = vmatpush1.xpose.msra.mxu0 0.0
    %2556 = vmatprep.subr.mxu0 0.0
    %2557 = vmatpush1.xpose.msra.mxu0 0.0
    %2558 = vmatprep.subr.mxu0 0.0
    %2559 = vmatpush1.xpose.msra.mxu0 0.0
    %2560 = vmatprep.subr.mxu0 0.0
    %2561 = vmatpush1.xpose.msra.mxu0 0.0
    %2562 = vmatprep.subr.mxu0 0.0
    %2563 = vmatpush1.xpose.msra.mxu0 0.0
    %2564 = vmatprep.subr.mxu0 0.0
    %2565 = vmatpush1.xpose.msra.mxu0 0.0
    %2566 = vmatprep.subr.mxu0 0.0
    %2567 = vmatpush1.xpose.msra.mxu0 0.0
    %2568 = vmatprep.subr.mxu0 0.0
    %2569 = vmatpush1.xpose.msra.mxu0 0.0
    %2570 = vmatprep.subr.mxu0 0.0
    %2571 = vmatpush1.xpose.msra.mxu0 0.0
    %2572 = vmatprep.subr.mxu0 0.0
    %2573 = vmatpush1.xpose.msra.mxu0 0.0
    %2574 = vmatprep.subr.mxu0 0.0
    %2575 = vmatpush1.xpose.msra.mxu0 0.0
    %2576 = vmatprep.subr.mxu0 0.0
    %2577 = vmatpush1.xpose.msra.mxu0 0.0
    %2578 = vmatprep.subr.mxu0 0.0
    %2579 = vmatpush1.xpose.msra.mxu0 0.0
    %2580 = vmatprep.subr.mxu0 0.0
    %2581 = vmatpush1.xpose.msra.mxu0 0.0
    %2582 = vmatprep.mubr.f32.mxu0 0.0
    %2583 = vmatmul.mubr.f32.gmra.mrb[0].mxu0 %v2491
    %v2584 = vpop.f32.mrb[0].mxu0
    %v2585 = vadd.f32 0.0, %v2584
    %v2586 = vpop.f32.mrb[0].mxu0
    %2587 = vmatprep.mubr.f32.mxu0 0.0
    %2588 = vmatmul.mubr.f32.gmra.mrb[0].mxu0 %v2494
    %v2589 = vpop.f32.mrb[0].mxu0
    %v2590 = vadd.f32 0.0, %v2589
    %v2591 = vpop.f32.mrb[0].mxu0
    %2592 = vmatprep.mubr.f32.mxu0 0.0
    %2593 = vmatmul.mubr.f32.gmra.mrb[0].mxu0 %v2497
    %v2594 = vpop.f32.mrb[0].mxu0
    %v2595 = vadd.f32 0.0, %v2594
    %v2596 = vpop.f32.mrb[0].mxu0
    %2597 = vmatprep.mubr.f32.mxu0 0.0
    %2598 = vmatmul.mubr.f32.gmra.mrb[0].mxu0 %v2500
    %v2599 = vpop.f32.mrb[0].mxu0
    %v2600 = vadd.f32 0.0, %v2599
    %v2601 = vpop.f32.mrb[0].mxu0
    %2602 = vmatprep.mubr.f32.mxu0 0.0
    %2603 = vmatmul.mubr.f32.gmra.mrb[0].mxu0 %v2503
    %v2604 = vpop.f32.mrb[0].mxu0
    %v2605 = vadd.f32 0.0, %v2604
    %v2606 = vpop.f32.mrb[0].mxu0
    %2607 = vmatprep.mubr.f32.mxu0 0.0
    %2608 = vmatmul.mubr.f32.gmra.mrb[0].mxu0 %v2506
    %v2609 = vpop.f32.mrb[0].mxu0
    %v2610 = vadd.f32 0.0, %v2609
    %v2611 = vpop.f32.mrb[0].mxu0
    %2612 = vmatprep.mubr.f32.mxu0 0.0
    %2613 = vmatmul.mubr.f32.gmra.mrb[0].mxu0 %v2509
    %v2614 = vpop.f32.mrb[0].mxu0
    %v2615 = vadd.f32 0.0, %v2614
    %v2616 = vpop.f32.mrb[0].mxu0
    %2617 = vmatprep.mubr.f32.mxu0 0.0
    %2618 = vmatmul.mubr.f32.gmra.mrb[0].mxu0 %v2512
    %v2619 = vpop.f32.mrb[0].mxu0
    %v2620 = vadd.f32 0.0, %v2619
    %v2621 = vpop.f32.mrb[0].mxu0
    %2622 = vdwg.mxu0
    %v2623 = vmul.f32 %v2446, 0.35355338
    %v2624 = vmul.f32 %v2451, 0.35355338
    %v2625 = vmul.f32 %v2456, 0.35355338
    %v2626 = vmul.f32 %v2461, 0.35355338
    %v2627 = vmul.f32 %v2466, 0.35355338
    %v2628 = vmul.f32 %v2471, 0.35355338
    %v2629 = vmul.f32 %v2476, 0.35355338
    %v2630 = vmul.f32 %v2481, 0.35355338
    %v2631 = vmul.f32 %v2585, 0.35355338
    %v2632 = vmul.f32 %v2590, 0.35355338
    %v2633 = vmul.f32 %v2595, 0.35355338
    %v2634 = vmul.f32 %v2600, 0.35355338
    %v2635 = vmul.f32 %v2605, 0.35355338
    %v2636 = vmul.f32 %v2610, 0.35355338
    %v2637 = vmul.f32 %v2615, 0.35355338
    %v2638 = vmul.f32 %v2620, 0.35355338
    %v2639 = vsel %vm659, %v2623, -inf
    %2640 = vmax.xlane.f32.xlu0 %v2639
    %v2641 = vpop.xlane.xlu0 %2640
    %v2642 = vsel %vm659, %v2624, -inf
    %2643 = vmax.xlane.f32.xlu0 %v2642
    %v2644 = vpop.xlane.xlu0 %2643
    %v2645 = vsel %vm659, %v2625, -inf
    %2646 = vmax.xlane.f32.xlu0 %v2645
    %v2647 = vpop.xlane.xlu0 %2646
    %v2648 = vsel %vm659, %v2626, -inf
    %2649 = vmax.xlane.f32.xlu0 %v2648
    %v2650 = vpop.xlane.xlu0 %2649
    %v2651 = vsel %vm659, %v2627, -inf
    %2652 = vmax.xlane.f32.xlu0 %v2651
    %v2653 = vpop.xlane.xlu0 %2652
    %v2654 = vsel %vm659, %v2628, -inf
    %2655 = vmax.xlane.f32.xlu0 %v2654
    %v2656 = vpop.xlane.xlu0 %2655
    %v2657 = vsel %vm659, %v2629, -inf
    %2658 = vmax.xlane.f32.xlu0 %v2657
    %v2659 = vpop.xlane.xlu0 %2658
    %v2660 = vsel %vm659, %v2630, -inf
    %2661 = vmax.xlane.f32.xlu0 %v2660
    %v2662 = vpop.xlane.xlu0 %2661
    %v2663 = vsel %vm659, %v2631, -inf
    %2664 = vmax.xlane.f32.xlu0 %v2663
    %v2665 = vpop.xlane.xlu0 %2664
    %v2666 = vsel %vm659, %v2632, -inf
    %2667 = vmax.xlane.f32.xlu0 %v2666
    %v2668 = vpop.xlane.xlu0 %2667
    %v2669 = vsel %vm659, %v2633, -inf
    %2670 = vmax.xlane.f32.xlu0 %v2669
    %v2671 = vpop.xlane.xlu0 %2670
    %v2672 = vsel %vm659, %v2634, -inf
    %2673 = vmax.xlane.f32.xlu0 %v2672
    %v2674 = vpop.xlane.xlu0 %2673
    %v2675 = vsel %vm659, %v2635, -inf
    %2676 = vmax.xlane.f32.xlu0 %v2675
    %v2677 = vpop.xlane.xlu0 %2676
    %v2678 = vsel %vm659, %v2636, -inf
    %2679 = vmax.xlane.f32.xlu0 %v2678
    %v2680 = vpop.xlane.xlu0 %2679
    %v2681 = vsel %vm659, %v2637, -inf
    %2682 = vmax.xlane.f32.xlu0 %v2681
    %v2683 = vpop.xlane.xlu0 %2682
    %v2684 = vsel %vm659, %v2638, -inf
    %2685 = vmax.xlane.f32.xlu0 %v2684
    %v2686 = vpop.xlane.xlu0 %2685
    %v2687 = vsub.f32 %v2623, %v2641
    %v2688 = vsub.f32 %v2624, %v2644
    %v2689 = vsub.f32 %v2625, %v2647
    %v2690 = vsub.f32 %v2626, %v2650
    %v2691 = vsub.f32 %v2627, %v2653
    %v2692 = vsub.f32 %v2628, %v2656
    %v2693 = vsub.f32 %v2629, %v2659
    %v2694 = vsub.f32 %v2630, %v2662
    %v2695 = vsub.f32 %v2631, %v2665
    %v2696 = vsub.f32 %v2632, %v2668
    %v2697 = vsub.f32 %v2633, %v2671
    %v2698 = vsub.f32 %v2634, %v2674
    %v2699 = vsub.f32 %v2635, %v2677
    %v2700 = vsub.f32 %v2636, %v2680
    %v2701 = vsub.f32 %v2637, %v2683
    %v2702 = vsub.f32 %v2638, %v2686
    %v2703 = vmul.f32 %v2687, 1.442695
    %v2704 = vpow.pop %v2703
    %v2705 = vmul.f32 %v2688, 1.442695
    %v2706 = vpow.pop %v2705
    %v2707 = vmul.f32 %v2689, 1.442695
    %v2708 = vpow.pop %v2707
    %v2709 = vmul.f32 %v2690, 1.442695
    %v2710 = vpow.pop %v2709
    %v2711 = vmul.f32 %v2691, 1.442695
    %v2712 = vpow.pop %v2711
    %v2713 = vmul.f32 %v2692, 1.442695
    %v2714 = vpow.pop %v2713
    %v2715 = vmul.f32 %v2693, 1.442695
    %v2716 = vpow.pop %v2715
    %v2717 = vmul.f32 %v2694, 1.442695
    %v2718 = vpow.pop %v2717
    %v2719 = vmul.f32 %v2695, 1.442695
    %v2720 = vpow.pop %v2719
    %v2721 = vmul.f32 %v2696, 1.442695
    %v2722 = vpow.pop %v2721
    %v2723 = vmul.f32 %v2697, 1.442695
    %v2724 = vpow.pop %v2723
    %v2725 = vmul.f32 %v2698, 1.442695
    %v2726 = vpow.pop %v2725
    %v2727 = vmul.f32 %v2699, 1.442695
    %v2728 = vpow.pop %v2727
    %v2729 = vmul.f32 %v2700, 1.442695
    %v2730 = vpow.pop %v2729
    %v2731 = vmul.f32 %v2701, 1.442695
    %v2732 = vpow.pop %v2731
    %v2733 = vmul.f32 %v2702, 1.442695
    %v2734 = vpow.pop %v2733
    %v2735 = vsel %vm659, %v2704, 0.0
    %2736 = vadd.xlane.f32.xlu0 %v2735
    %v2737 = vpop.xlane.xlu0 %2736
    %v2738 = vsel %vm659, %v2706, 0.0
    %2739 = vadd.xlane.f32.xlu0 %v2738
    %v2740 = vpop.xlane.xlu0 %2739
    %v2741 = vsel %vm659, %v2708, 0.0
    %2742 = vadd.xlane.f32.xlu0 %v2741
    %v2743 = vpop.xlane.xlu0 %2742
    %v2744 = vsel %vm659, %v2710, 0.0
    %2745 = vadd.xlane.f32.xlu0 %v2744
    %v2746 = vpop.xlane.xlu0 %2745
    %v2747 = vsel %vm659, %v2712, 0.0
    %2748 = vadd.xlane.f32.xlu0 %v2747
    %v2749 = vpop.xlane.xlu0 %2748
    %v2750 = vsel %vm659, %v2714, 0.0
    %2751 = vadd.xlane.f32.xlu0 %v2750
    %v2752 = vpop.xlane.xlu0 %2751
    %v2753 = vsel %vm659, %v2716, 0.0
    %2754 = vadd.xlane.f32.xlu0 %v2753
    %v2755 = vpop.xlane.xlu0 %2754
    %v2756 = vsel %vm659, %v2718, 0.0
    %2757 = vadd.xlane.f32.xlu0 %v2756
    %v2758 = vpop.xlane.xlu0 %2757
    %v2759 = vsel %vm659, %v2720, 0.0
    %2760 = vadd.xlane.f32.xlu0 %v2759
    %v2761 = vpop.xlane.xlu0 %2760
    %v2762 = vsel %vm659, %v2722, 0.0
    %2763 = vadd.xlane.f32.xlu0 %v2762
    %v2764 = vpop.xlane.xlu0 %2763
    %v2765 = vsel %vm659, %v2724, 0.0
    %2766 = vadd.xlane.f32.xlu0 %v2765
    %v2767 = vpop.xlane.xlu0 %2766
    %v2768 = vsel %vm659, %v2726, 0.0
    %2769 = vadd.xlane.f32.xlu0 %v2768
    %v2770 = vpop.xlane.xlu0 %2769
    %v2771 = vsel %vm659, %v2728, 0.0
    %2772 = vadd.xlane.f32.xlu0 %v2771
    %v2773 = vpop.xlane.xlu0 %2772
    %v2774 = vsel %vm659, %v2730, 0.0
    %2775 = vadd.xlane.f32.xlu0 %v2774
    %v2776 = vpop.xlane.xlu0 %2775
    %v2777 = vsel %vm659, %v2732, 0.0
    %2778 = vadd.xlane.f32.xlu0 %v2777
    %v2779 = vpop.xlane.xlu0 %2778
    %v2780 = vsel %vm659, %v2734, 0.0
    %2781 = vadd.xlane.f32.xlu0 %v2780
    %v2782 = vpop.xlane.xlu0 %2781
    %v2783 = vrcp.pop %v2737
    %v2784 = vrcp.pop %v2740
    %v2785 = vrcp.pop %v2743
    %v2786 = vrcp.pop %v2746
    %v2787 = vrcp.pop %v2749
    %v2788 = vrcp.pop %v2752
    %v2789 = vrcp.pop %v2755
    %v2790 = vrcp.pop %v2758
    %v2791 = vrcp.pop %v2761
    %v2792 = vrcp.pop %v2764
    %v2793 = vrcp.pop %v2767
    %v2794 = vrcp.pop %v2770
    %v2795 = vrcp.pop %v2773
    %v2796 = vrcp.pop %v2776
    %v2797 = vrcp.pop %v2779
    %v2798 = vrcp.pop %v2782
    %v2799 = vmul.f32 %v2704, %v2783
    %v2800 = vmul.f32 %v2706, %v2784
    %v2801 = vmul.f32 %v2708, %v2785
    %v2802 = vmul.f32 %v2710, %v2786
    %v2803 = vmul.f32 %v2712, %v2787
    %v2804 = vmul.f32 %v2714, %v2788
    %v2805 = vmul.f32 %v2716, %v2789
    %v2806 = vmul.f32 %v2718, %v2790
    %v2807 = vmul.f32 %v2720, %v2791
    %v2808 = vmul.f32 %v2722, %v2792
    %v2809 = vmul.f32 %v2724, %v2793
    %v2810 = vmul.f32 %v2726, %v2794
    %v2811 = vmul.f32 %v2728, %v2795
    %v2812 = vmul.f32 %v2730, %v2796
    %v2813 = vmul.f32 %v2732, %v2797
    %v2814 = vmul.f32 %v2734, %v2798
    %v2815 = vmul.f32 %v2311, %v837
    %v2816 = vmul.f32 %v2316, %v837
    %v2817 = vmul.f32 %v2311, %v839
    %v2818 = vmul.f32 %v2316, %v839
    %v2819 = vmul.f32 %v2311, %v841
    %v2820 = vmul.f32 %v2316, %v841
    %v2821 = vmul.f32 %v2311, %v843
    %v2822 = vmul.f32 %v2316, %v843
    %v2823 = vmul.f32 %v2321, %v837
    %v2824 = vmul.f32 %v2326, %v837
    %v2825 = vmul.f32 %v2321, %v839
    %v2826 = vmul.f32 %v2326, %v839
    %v2827 = vmul.f32 %v2321, %v841
    %v2828 = vmul.f32 %v2326, %v841
    %v2829 = vmul.f32 %v2321, %v843
    %v2830 = vmul.f32 %v2326, %v843
    %2833 = vrot.lane.b32.xlu0 %v2815, 64
    %v2834 = vpop.permute.xlu0 %2833
    %2835 = vrot.lane.b32.xlu0 %v2816, 64
    %v2836 = vpop.permute.xlu0 %2835
    %v2840 = vsel %vm659, %v2799, 0
    %v2843 = vsel %vm659, %v2800, 0
    %2845 = vmatprep.subr.mxu0 0.0
    %2846 = vmatpush1.msra.mxu0 %v2834
    %2847 = vmatprep.subr.mxu0 0.0
    %2848 = vmatpush1.msra.mxu0 %v2836
    %2849 = vmatprep.subr.mxu0 0.0
    %2850 = vmatpush1.msra.mxu0 0.0
    %2851 = vmatprep.subr.mxu0 0.0
    %2852 = vmatpush1.msra.mxu0 0.0
    %2853 = vmatprep.subr.mxu0 0.0
    %2854 = vmatpush1.msra.mxu0 0.0
    %2855 = vmatprep.subr.mxu0 0.0
    %2856 = vmatpush1.msra.mxu0 0.0
    %2857 = vmatprep.subr.mxu0 0.0
    %2858 = vmatpush1.msra.mxu0 0.0
    %2859 = vmatprep.subr.mxu0 0.0
    %2860 = vmatpush1.msra.mxu0 0.0
    %2861 = vmatprep.subr.mxu0 0.0
    %2862 = vmatpush1.msra.mxu0 0.0
    %2863 = vmatprep.subr.mxu0 0.0
    %2864 = vmatpush1.msra.mxu0 0.0
    %2865 = vmatprep.subr.mxu0 0.0
    %2866 = vmatpush1.msra.mxu0 0.0
    %2867 = vmatprep.subr.mxu0 0.0
    %2868 = vmatpush1.msra.mxu0 0.0
    %2869 = vmatprep.subr.mxu0 0.0
    %2870 = vmatpush1.msra.mxu0 0.0
    %2871 = vmatprep.subr.mxu0 0.0
    %2872 = vmatpush1.msra.mxu0 0.0
    %2873 = vmatprep.subr.mxu0 0.0
    %2874 = vmatpush1.msra.mxu0 0.0
    %2875 = vmatprep.subr.mxu0 0.0
    %2876 = vmatpush1.msra.mxu0 0.0
    %2877 = vmatprep.subr.mxu0 0.0
    %2878 = vmatpush1.msra.mxu0 0.0
    %2879 = vmatprep.subr.mxu0 0.0
    %2880 = vmatpush1.msra.mxu0 0.0
    %2881 = vmatprep.subr.mxu0 0.0
    %2882 = vmatpush1.msra.mxu0 0.0
    %2883 = vmatprep.subr.mxu0 0.0
    %2884 = vmatpush1.msra.mxu0 0.0
    %2885 = vmatprep.subr.mxu0 0.0
    %2886 = vmatpush1.msra.mxu0 0.0
    %2887 = vmatprep.subr.mxu0 0.0
    %2888 = vmatpush1.msra.mxu0 0.0
    %2889 = vmatprep.subr.mxu0 0.0
    %2890 = vmatpush1.msra.mxu0 0.0
    %2891 = vmatprep.subr.mxu0 0.0
    %2892 = vmatpush1.msra.mxu0 0.0
    %2893 = vmatprep.subr.mxu0 0.0
    %2894 = vmatpush1.msra.mxu0 0.0
    %2895 = vmatprep.subr.mxu0 0.0
    %2896 = vmatpush1.msra.mxu0 0.0
    %2897 = vmatprep.subr.mxu0 0.0
    %2898 = vmatpush1.msra.mxu0 0.0
    %2899 = vmatprep.subr.mxu0 0.0
    %2900 = vmatpush1.msra.mxu0 0.0
    %2901 = vmatprep.subr.mxu0 0.0
    %2902 = vmatpush1.msra.mxu0 0.0
    %2903 = vmatprep.subr.mxu0 0.0
    %2904 = vmatpush1.msra.mxu0 0.0
    %2905 = vmatprep.subr.mxu0 0.0
    %2906 = vmatpush1.msra.mxu0 0.0
    %2907 = vmatprep.subr.mxu0 0.0
    %2908 = vmatpush1.msra.mxu0 0.0
    %2909 = vmatprep.mubr.f32.mxu0 0.0
    %2910 = vmatmul.mubr.f32.gmra.mrb[0].mxu0 %v2840
    %v2911 = vpop.f32.mrb[0].mxu0
    %v2912 = vadd.f32 0.0, %v2911
    %v2913 = vpop.f32.mrb[0].mxu0
    %2914 = vmatprep.mubr.f32.mxu0 0.0
    %2915 = vmatmul.mubr.f32.gmra.mrb[0].mxu0 %v2843
    %v2916 = vpop.f32.mrb[0].mxu0
    %v2917 = vadd.f32 0.0, %v2916
    %v2918 = vpop.f32.mrb[0].mxu0
    %2919 = vdwg.mxu0
    %2922 = vrot.lane.b32.xlu0 %v2817, 64
    %v2923 = vpop.permute.xlu0 %2922
    %2924 = vrot.lane.b32.xlu0 %v2818, 64
    %v2925 = vpop.permute.xlu0 %2924
    %v2929 = vsel %vm659, %v2801, 0
    %v2932 = vsel %vm659, %v2802, 0
    %2934 = vmatprep.subr.mxu0 0.0
    %2935 = vmatpush1.msra.mxu0 %v2923
    %2936 = vmatprep.subr.mxu0 0.0
    %2937 = vmatpush1.msra.mxu0 %v2925
    %2938 = vmatprep.subr.mxu0 0.0
    %2939 = vmatpush1.msra.mxu0 0.0
    %2940 = vmatprep.subr.mxu0 0.0
    %2941 = vmatpush1.msra.mxu0 0.0
    %2942 = vmatprep.subr.mxu0 0.0
    %2943 = vmatpush1.msra.mxu0 0.0
    %2944 = vmatprep.subr.mxu0 0.0
    %2945 = vmatpush1.msra.mxu0 0.0
    %2946 = vmatprep.subr.mxu0 0.0
    %2947 = vmatpush1.msra.mxu0 0.0
    %2948 = vmatprep.subr.mxu0 0.0
    %2949 = vmatpush1.msra.mxu0 0.0
    %2950 = vmatprep.subr.mxu0 0.0
    %2951 = vmatpush1.msra.mxu0 0.0
    %2952 = vmatprep.subr.mxu0 0.0
    %2953 = vmatpush1.msra.mxu0 0.0
    %2954 = vmatprep.subr.mxu0 0.0
    %2955 = vmatpush1.msra.mxu0 0.0
    %2956 = vmatprep.subr.mxu0 0.0
    %2957 = vmatpush1.msra.mxu0 0.0
    %2958 = vmatprep.subr.mxu0 0.0
    %2959 = vmatpush1.msra.mxu0 0.0
    %2960 = vmatprep.subr.mxu0 0.0
    %2961 = vmatpush1.msra.mxu0 0.0
    %2962 = vmatprep.subr.mxu0 0.0
    %2963 = vmatpush1.msra.mxu0 0.0
    %2964 = vmatprep.subr.mxu0 0.0
    %2965 = vmatpush1.msra.mxu0 0.0
    %2966 = vmatprep.subr.mxu0 0.0
    %2967 = vmatpush1.msra.mxu0 0.0
    %2968 = vmatprep.subr.mxu0 0.0
    %2969 = vmatpush1.msra.mxu0 0.0
    %2970 = vmatprep.subr.mxu0 0.0
    %2971 = vmatpush1.msra.mxu0 0.0
    %2972 = vmatprep.subr.mxu0 0.0
    %2973 = vmatpush1.msra.mxu0 0.0
    %2974 = vmatprep.subr.mxu0 0.0
    %2975 = vmatpush1.msra.mxu0 0.0
    %2976 = vmatprep.subr.mxu0 0.0
    %2977 = vmatpush1.msra.mxu0 0.0
    %2978 = vmatprep.subr.mxu0 0.0
    %2979 = vmatpush1.msra.mxu0 0.0
    %2980 = vmatprep.subr.mxu0 0.0
    %2981 = vmatpush1.msra.mxu0 0.0
    %2982 = vmatprep.subr.mxu0 0.0
    %2983 = vmatpush1.msra.mxu0 0.0
    %2984 = vmatprep.subr.mxu0 0.0
    %2985 = vmatpush1.msra.mxu0 0.0
    %2986 = vmatprep.subr.mxu0 0.0
    %2987 = vmatpush1.msra.mxu0 0.0
    %2988 = vmatprep.subr.mxu0 0.0
    %2989 = vmatpush1.msra.mxu0 0.0
    %2990 = vmatprep.subr.mxu0 0.0
    %2991 = vmatpush1.msra.mxu0 0.0
    %2992 = vmatprep.subr.mxu0 0.0
    %2993 = vmatpush1.msra.mxu0 0.0
    %2994 = vmatprep.subr.mxu0 0.0
    %2995 = vmatpush1.msra.mxu0 0.0
    %2996 = vmatprep.subr.mxu0 0.0
    %2997 = vmatpush1.msra.mxu0 0.0
    %2998 = vmatprep.mubr.f32.mxu0 0.0
    %2999 = vmatmul.mubr.f32.gmra.mrb[0].mxu0 %v2929
    %v3000 = vpop.f32.mrb[0].mxu0
    %v3001 = vadd.f32 0.0, %v3000
    %v3002 = vpop.f32.mrb[0].mxu0
    %3003 = vmatprep.mubr.f32.mxu0 0.0
    %3004 = vmatmul.mubr.f32.gmra.mrb[0].mxu0 %v2932
    %v3005 = vpop.f32.mrb[0].mxu0
    %v3006 = vadd.f32 0.0, %v3005
    %v3007 = vpop.f32.mrb[0].mxu0
    %3008 = vdwg.mxu0
    %3011 = vrot.lane.b32.xlu0 %v2819, 64
    %v3012 = vpop.permute.xlu0 %3011
    %3013 = vrot.lane.b32.xlu0 %v2820, 64
    %v3014 = vpop.permute.xlu0 %3013
    %v3018 = vsel %vm659, %v2803, 0
    %v3021 = vsel %vm659, %v2804, 0
    %3023 = vmatprep.subr.mxu0 0.0
    %3024 = vmatpush1.msra.mxu0 %v3012
    %3025 = vmatprep.subr.mxu0 0.0
    %3026 = vmatpush1.msra.mxu0 %v3014
    %3027 = vmatprep.subr.mxu0 0.0
    %3028 = vmatpush1.msra.mxu0 0.0
    %3029 = vmatprep.subr.mxu0 0.0
    %3030 = vmatpush1.msra.mxu0 0.0
    %3031 = vmatprep.subr.mxu0 0.0
    %3032 = vmatpush1.msra.mxu0 0.0
    %3033 = vmatprep.subr.mxu0 0.0
    %3034 = vmatpush1.msra.mxu0 0.0
    %3035 = vmatprep.subr.mxu0 0.0
    %3036 = vmatpush1.msra.mxu0 0.0
    %3037 = vmatprep.subr.mxu0 0.0
    %3038 = vmatpush1.msra.mxu0 0.0
    %3039 = vmatprep.subr.mxu0 0.0
    %3040 = vmatpush1.msra.mxu0 0.0
    %3041 = vmatprep.subr.mxu0 0.0
    %3042 = vmatpush1.msra.mxu0 0.0
    %3043 = vmatprep.subr.mxu0 0.0
    %3044 = vmatpush1.msra.mxu0 0.0
    %3045 = vmatprep.subr.mxu0 0.0
    %3046 = vmatpush1.msra.mxu0 0.0
    %3047 = vmatprep.subr.mxu0 0.0
    %3048 = vmatpush1.msra.mxu0 0.0
    %3049 = vmatprep.subr.mxu0 0.0
    %3050 = vmatpush1.msra.mxu0 0.0
    %3051 = vmatprep.subr.mxu0 0.0
    %3052 = vmatpush1.msra.mxu0 0.0
    %3053 = vmatprep.subr.mxu0 0.0
    %3054 = vmatpush1.msra.mxu0 0.0
    %3055 = vmatprep.subr.mxu0 0.0
    %3056 = vmatpush1.msra.mxu0 0.0
    %3057 = vmatprep.subr.mxu0 0.0
    %3058 = vmatpush1.msra.mxu0 0.0
    %3059 = vmatprep.subr.mxu0 0.0
    %3060 = vmatpush1.msra.mxu0 0.0
    %3061 = vmatprep.subr.mxu0 0.0
    %3062 = vmatpush1.msra.mxu0 0.0
    %3063 = vmatprep.subr.mxu0 0.0
    %3064 = vmatpush1.msra.mxu0 0.0
    %3065 = vmatprep.subr.mxu0 0.0
    %3066 = vmatpush1.msra.mxu0 0.0
    %3067 = vmatprep.subr.mxu0 0.0
    %3068 = vmatpush1.msra.mxu0 0.0
    %3069 = vmatprep.subr.mxu0 0.0
    %3070 = vmatpush1.msra.mxu0 0.0
    %3071 = vmatprep.subr.mxu0 0.0
    %3072 = vmatpush1.msra.mxu0 0.0
    %3073 = vmatprep.subr.mxu0 0.0
    %3074 = vmatpush1.msra.mxu0 0.0
    %3075 = vmatprep.subr.mxu0 0.0
    %3076 = vmatpush1.msra.mxu0 0.0
    %3077 = vmatprep.subr.mxu0 0.0
    %3078 = vmatpush1.msra.mxu0 0.0
    %3079 = vmatprep.subr.mxu0 0.0
    %3080 = vmatpush1.msra.mxu0 0.0
    %3081 = vmatprep.subr.mxu0 0.0
    %3082 = vmatpush1.msra.mxu0 0.0
    %3083 = vmatprep.subr.mxu0 0.0
    %3084 = vmatpush1.msra.mxu0 0.0
    %3085 = vmatprep.subr.mxu0 0.0
    %3086 = vmatpush1.msra.mxu0 0.0
    %3087 = vmatprep.mubr.f32.mxu0 0.0
    %3088 = vmatmul.mubr.f32.gmra.mrb[0].mxu0 %v3018
    %v3089 = vpop.f32.mrb[0].mxu0
    %v3090 = vadd.f32 0.0, %v3089
    %v3091 = vpop.f32.mrb[0].mxu0
    %3092 = vmatprep.mubr.f32.mxu0 0.0
    %3093 = vmatmul.mubr.f32.gmra.mrb[0].mxu0 %v3021
    %v3094 = vpop.f32.mrb[0].mxu0
    %v3095 = vadd.f32 0.0, %v3094
    %v3096 = vpop.f32.mrb[0].mxu0
    %3097 = vdwg.mxu0
    %3100 = vrot.lane.b32.xlu0 %v2821, 64
    %v3101 = vpop.permute.xlu0 %3100
    %3102 = vrot.lane.b32.xlu0 %v2822, 64
    %v3103 = vpop.permute.xlu0 %3102
    %v3107 = vsel %vm659, %v2805, 0
    %v3110 = vsel %vm659, %v2806, 0
    %3112 = vmatprep.subr.mxu0 0.0
    %3113 = vmatpush1.msra.mxu0 %v3101
    %3114 = vmatprep.subr.mxu0 0.0
    %3115 = vmatpush1.msra.mxu0 %v3103
    %3116 = vmatprep.subr.mxu0 0.0
    %3117 = vmatpush1.msra.mxu0 0.0
    %3118 = vmatprep.subr.mxu0 0.0
    %3119 = vmatpush1.msra.mxu0 0.0
    %3120 = vmatprep.subr.mxu0 0.0
    %3121 = vmatpush1.msra.mxu0 0.0
    %3122 = vmatprep.subr.mxu0 0.0
    %3123 = vmatpush1.msra.mxu0 0.0
    %3124 = vmatprep.subr.mxu0 0.0
    %3125 = vmatpush1.msra.mxu0 0.0
    %3126 = vmatprep.subr.mxu0 0.0
    %3127 = vmatpush1.msra.mxu0 0.0
    %3128 = vmatprep.subr.mxu0 0.0
    %3129 = vmatpush1.msra.mxu0 0.0
    %3130 = vmatprep.subr.mxu0 0.0
    %3131 = vmatpush1.msra.mxu0 0.0
    %3132 = vmatprep.subr.mxu0 0.0
    %3133 = vmatpush1.msra.mxu0 0.0
    %3134 = vmatprep.subr.mxu0 0.0
    %3135 = vmatpush1.msra.mxu0 0.0
    %3136 = vmatprep.subr.mxu0 0.0
    %3137 = vmatpush1.msra.mxu0 0.0
    %3138 = vmatprep.subr.mxu0 0.0
    %3139 = vmatpush1.msra.mxu0 0.0
    %3140 = vmatprep.subr.mxu0 0.0
    %3141 = vmatpush1.msra.mxu0 0.0
    %3142 = vmatprep.subr.mxu0 0.0
    %3143 = vmatpush1.msra.mxu0 0.0
    %3144 = vmatprep.subr.mxu0 0.0
    %3145 = vmatpush1.msra.mxu0 0.0
    %3146 = vmatprep.subr.mxu0 0.0
    %3147 = vmatpush1.msra.mxu0 0.0
    %3148 = vmatprep.subr.mxu0 0.0
    %3149 = vmatpush1.msra.mxu0 0.0
    %3150 = vmatprep.subr.mxu0 0.0
    %3151 = vmatpush1.msra.mxu0 0.0
    %3152 = vmatprep.subr.mxu0 0.0
    %3153 = vmatpush1.msra.mxu0 0.0
    %3154 = vmatprep.subr.mxu0 0.0
    %3155 = vmatpush1.msra.mxu0 0.0
    %3156 = vmatprep.subr.mxu0 0.0
    %3157 = vmatpush1.msra.mxu0 0.0
    %3158 = vmatprep.subr.mxu0 0.0
    %3159 = vmatpush1.msra.mxu0 0.0
    %3160 = vmatprep.subr.mxu0 0.0
    %3161 = vmatpush1.msra.mxu0 0.0
    %3162 = vmatprep.subr.mxu0 0.0
    %3163 = vmatpush1.msra.mxu0 0.0
    %3164 = vmatprep.subr.mxu0 0.0
    %3165 = vmatpush1.msra.mxu0 0.0
    %3166 = vmatprep.subr.mxu0 0.0
    %3167 = vmatpush1.msra.mxu0 0.0
    %3168 = vmatprep.subr.mxu0 0.0
    %3169 = vmatpush1.msra.mxu0 0.0
    %3170 = vmatprep.subr.mxu0 0.0
    %3171 = vmatpush1.msra.mxu0 0.0
    %3172 = vmatprep.subr.mxu0 0.0
    %3173 = vmatpush1.msra.mxu0 0.0
    %3174 = vmatprep.subr.mxu0 0.0
    %3175 = vmatpush1.msra.mxu0 0.0
    %3176 = vmatprep.mubr.f32.mxu0 0.0
    %3177 = vmatmul.mubr.f32.gmra.mrb[0].mxu0 %v3107
    %v3178 = vpop.f32.mrb[0].mxu0
    %v3179 = vadd.f32 0.0, %v3178
    %v3180 = vpop.f32.mrb[0].mxu0
    %3181 = vmatprep.mubr.f32.mxu0 0.0
    %3182 = vmatmul.mubr.f32.gmra.mrb[0].mxu0 %v3110
    %v3183 = vpop.f32.mrb[0].mxu0
    %v3184 = vadd.f32 0.0, %v3183
    %v3185 = vpop.f32.mrb[0].mxu0
    %3186 = vdwg.mxu0
    %3189 = vrot.lane.b32.xlu0 %v2823, 64
    %v3190 = vpop.permute.xlu0 %3189
    %3191 = vrot.lane.b32.xlu0 %v2824, 64
    %v3192 = vpop.permute.xlu0 %3191
    %v3196 = vsel %vm659, %v2807, 0
    %v3199 = vsel %vm659, %v2808, 0
    %3201 = vmatprep.subr.mxu0 0.0
    %3202 = vmatpush1.msra.mxu0 %v3190
    %3203 = vmatprep.subr.mxu0 0.0
    %3204 = vmatpush1.msra.mxu0 %v3192
    %3205 = vmatprep.subr.mxu0 0.0
    %3206 = vmatpush1.msra.mxu0 0.0
    %3207 = vmatprep.subr.mxu0 0.0
    %3208 = vmatpush1.msra.mxu0 0.0
    %3209 = vmatprep.subr.mxu0 0.0
    %3210 = vmatpush1.msra.mxu0 0.0
    %3211 = vmatprep.subr.mxu0 0.0
    %3212 = vmatpush1.msra.mxu0 0.0
    %3213 = vmatprep.subr.mxu0 0.0
    %3214 = vmatpush1.msra.mxu0 0.0
    %3215 = vmatprep.subr.mxu0 0.0
    %3216 = vmatpush1.msra.mxu0 0.0
    %3217 = vmatprep.subr.mxu0 0.0
    %3218 = vmatpush1.msra.mxu0 0.0
    %3219 = vmatprep.subr.mxu0 0.0
    %3220 = vmatpush1.msra.mxu0 0.0
    %3221 = vmatprep.subr.mxu0 0.0
    %3222 = vmatpush1.msra.mxu0 0.0
    %3223 = vmatprep.subr.mxu0 0.0
    %3224 = vmatpush1.msra.mxu0 0.0
    %3225 = vmatprep.subr.mxu0 0.0
    %3226 = vmatpush1.msra.mxu0 0.0
    %3227 = vmatprep.subr.mxu0 0.0
    %3228 = vmatpush1.msra.mxu0 0.0
    %3229 = vmatprep.subr.mxu0 0.0
    %3230 = vmatpush1.msra.mxu0 0.0
    %3231 = vmatprep.subr.mxu0 0.0
    %3232 = vmatpush1.msra.mxu0 0.0
    %3233 = vmatprep.subr.mxu0 0.0
    %3234 = vmatpush1.msra.mxu0 0.0
    %3235 = vmatprep.subr.mxu0 0.0
    %3236 = vmatpush1.msra.mxu0 0.0
    %3237 = vmatprep.subr.mxu0 0.0
    %3238 = vmatpush1.msra.mxu0 0.0
    %3239 = vmatprep.subr.mxu0 0.0
    %3240 = vmatpush1.msra.mxu0 0.0
    %3241 = vmatprep.subr.mxu0 0.0
    %3242 = vmatpush1.msra.mxu0 0.0
    %3243 = vmatprep.subr.mxu0 0.0
    %3244 = vmatpush1.msra.mxu0 0.0
    %3245 = vmatprep.subr.mxu0 0.0
    %3246 = vmatpush1.msra.mxu0 0.0
    %3247 = vmatprep.subr.mxu0 0.0
    %3248 = vmatpush1.msra.mxu0 0.0
    %3249 = vmatprep.subr.mxu0 0.0
    %3250 = vmatpush1.msra.mxu0 0.0
    %3251 = vmatprep.subr.mxu0 0.0
    %3252 = vmatpush1.msra.mxu0 0.0
    %3253 = vmatprep.subr.mxu0 0.0
    %3254 = vmatpush1.msra.mxu0 0.0
    %3255 = vmatprep.subr.mxu0 0.0
    %3256 = vmatpush1.msra.mxu0 0.0
    %3257 = vmatprep.subr.mxu0 0.0
    %3258 = vmatpush1.msra.mxu0 0.0
    %3259 = vmatprep.subr.mxu0 0.0
    %3260 = vmatpush1.msra.mxu0 0.0
    %3261 = vmatprep.subr.mxu0 0.0
    %3262 = vmatpush1.msra.mxu0 0.0
    %3263 = vmatprep.subr.mxu0 0.0
    %3264 = vmatpush1.msra.mxu0 0.0
    %3265 = vmatprep.mubr.f32.mxu0 0.0
    %3266 = vmatmul.mubr.f32.gmra.mrb[0].mxu0 %v3196
    %v3267 = vpop.f32.mrb[0].mxu0
    %v3268 = vadd.f32 0.0, %v3267
    %v3269 = vpop.f32.mrb[0].mxu0
    %3270 = vmatprep.mubr.f32.mxu0 0.0
    %3271 = vmatmul.mubr.f32.gmra.mrb[0].mxu0 %v3199
    %v3272 = vpop.f32.mrb[0].mxu0
    %v3273 = vadd.f32 0.0, %v3272
    %v3274 = vpop.f32.mrb[0].mxu0
    %3275 = vdwg.mxu0
    %3278 = vrot.lane.b32.xlu0 %v2825, 64
    %v3279 = vpop.permute.xlu0 %3278
    %3280 = vrot.lane.b32.xlu0 %v2826, 64
    %v3281 = vpop.permute.xlu0 %3280
    %v3285 = vsel %vm659, %v2809, 0
    %v3288 = vsel %vm659, %v2810, 0
    %3290 = vmatprep.subr.mxu0 0.0
    %3291 = vmatpush1.msra.mxu0 %v3279
    %3292 = vmatprep.subr.mxu0 0.0
    %3293 = vmatpush1.msra.mxu0 %v3281
    %3294 = vmatprep.subr.mxu0 0.0
    %3295 = vmatpush1.msra.mxu0 0.0
    %3296 = vmatprep.subr.mxu0 0.0
    %3297 = vmatpush1.msra.mxu0 0.0
    %3298 = vmatprep.subr.mxu0 0.0
    %3299 = vmatpush1.msra.mxu0 0.0
    %3300 = vmatprep.subr.mxu0 0.0
    %3301 = vmatpush1.msra.mxu0 0.0
    %3302 = vmatprep.subr.mxu0 0.0
    %3303 = vmatpush1.msra.mxu0 0.0
    %3304 = vmatprep.subr.mxu0 0.0
    %3305 = vmatpush1.msra.mxu0 0.0
    %3306 = vmatprep.subr.mxu0 0.0
    %3307 = vmatpush1.msra.mxu0 0.0
    %3308 = vmatprep.subr.mxu0 0.0
    %3309 = vmatpush1.msra.mxu0 0.0
    %3310 = vmatprep.subr.mxu0 0.0
    %3311 = vmatpush1.msra.mxu0 0.0
    %3312 = vmatprep.subr.mxu0 0.0
    %3313 = vmatpush1.msra.mxu0 0.0
    %3314 = vmatprep.subr.mxu0 0.0
    %3315 = vmatpush1.msra.mxu0 0.0
    %3316 = vmatprep.subr.mxu0 0.0
    %3317 = vmatpush1.msra.mxu0 0.0
    %3318 = vmatprep.subr.mxu0 0.0
    %3319 = vmatpush1.msra.mxu0 0.0
    %3320 = vmatprep.subr.mxu0 0.0
    %3321 = vmatpush1.msra.mxu0 0.0
    %3322 = vmatprep.subr.mxu0 0.0
    %3323 = vmatpush1.msra.mxu0 0.0
    %3324 = vmatprep.subr.mxu0 0.0
    %3325 = vmatpush1.msra.mxu0 0.0
    %3326 = vmatprep.subr.mxu0 0.0
    %3327 = vmatpush1.msra.mxu0 0.0
    %3328 = vmatprep.subr.mxu0 0.0
    %3329 = vmatpush1.msra.mxu0 0.0
    %3330 = vmatprep.subr.mxu0 0.0
    %3331 = vmatpush1.msra.mxu0 0.0
    %3332 = vmatprep.subr.mxu0 0.0
    %3333 = vmatpush1.msra.mxu0 0.0
    %3334 = vmatprep.subr.mxu0 0.0
    %3335 = vmatpush1.msra.mxu0 0.0
    %3336 = vmatprep.subr.mxu0 0.0
    %3337 = vmatpush1.msra.mxu0 0.0
    %3338 = vmatprep.subr.mxu0 0.0
    %3339 = vmatpush1.msra.mxu0 0.0
    %3340 = vmatprep.subr.mxu0 0.0
    %3341 = vmatpush1.msra.mxu0 0.0
    %3342 = vmatprep.subr.mxu0 0.0
    %3343 = vmatpush1.msra.mxu0 0.0
    %3344 = vmatprep.subr.mxu0 0.0
    %3345 = vmatpush1.msra.mxu0 0.0
    %3346 = vmatprep.subr.mxu0 0.0
    %3347 = vmatpush1.msra.mxu0 0.0
    %3348 = vmatprep.subr.mxu0 0.0
    %3349 = vmatpush1.msra.mxu0 0.0
    %3350 = vmatprep.subr.mxu0 0.0
    %3351 = vmatpush1.msra.mxu0 0.0
    %3352 = vmatprep.subr.mxu0 0.0
    %3353 = vmatpush1.msra.mxu0 0.0
    %3354 = vmatprep.mubr.f32.mxu0 0.0
    %3355 = vmatmul.mubr.f32.gmra.mrb[0].mxu0 %v3285
    %v3356 = vpop.f32.mrb[0].mxu0
    %v3357 = vadd.f32 0.0, %v3356
    %v3358 = vpop.f32.mrb[0].mxu0
    %3359 = vmatprep.mubr.f32.mxu0 0.0
    %3360 = vmatmul.mubr.f32.gmra.mrb[0].mxu0 %v3288
    %v3361 = vpop.f32.mrb[0].mxu0
    %v3362 = vadd.f32 0.0, %v3361
    %v3363 = vpop.f32.mrb[0].mxu0
    %3364 = vdwg.mxu0
    %3367 = vrot.lane.b32.xlu0 %v2827, 64
    %v3368 = vpop.permute.xlu0 %3367
    %3369 = vrot.lane.b32.xlu0 %v2828, 64
    %v3370 = vpop.permute.xlu0 %3369
    %v3374 = vsel %vm659, %v2811, 0
    %v3377 = vsel %vm659, %v2812, 0
    %3379 = vmatprep.subr.mxu0 0.0
    %3380 = vmatpush1.msra.mxu0 %v3368
    %3381 = vmatprep.subr.mxu0 0.0
    %3382 = vmatpush1.msra.mxu0 %v3370
    %3383 = vmatprep.subr.mxu0 0.0
    %3384 = vmatpush1.msra.mxu0 0.0
    %3385 = vmatprep.subr.mxu0 0.0
    %3386 = vmatpush1.msra.mxu0 0.0
    %3387 = vmatprep.subr.mxu0 0.0
    %3388 = vmatpush1.msra.mxu0 0.0
    %3389 = vmatprep.subr.mxu0 0.0
    %3390 = vmatpush1.msra.mxu0 0.0
    %3391 = vmatprep.subr.mxu0 0.0
    %3392 = vmatpush1.msra.mxu0 0.0
    %3393 = vmatprep.subr.mxu0 0.0
    %3394 = vmatpush1.msra.mxu0 0.0
    %3395 = vmatprep.subr.mxu0 0.0
    %3396 = vmatpush1.msra.mxu0 0.0
    %3397 = vmatprep.subr.mxu0 0.0
    %3398 = vmatpush1.msra.mxu0 0.0
    %3399 = vmatprep.subr.mxu0 0.0
    %3400 = vmatpush1.msra.mxu0 0.0
    %3401 = vmatprep.subr.mxu0 0.0
    %3402 = vmatpush1.msra.mxu0 0.0
    %3403 = vmatprep.subr.mxu0 0.0
    %3404 = vmatpush1.msra.mxu0 0.0
    %3405 = vmatprep.subr.mxu0 0.0
    %3406 = vmatpush1.msra.mxu0 0.0
    %3407 = vmatprep.subr.mxu0 0.0
    %3408 = vmatpush1.msra.mxu0 0.0
    %3409 = vmatprep.subr.mxu0 0.0
    %3410 = vmatpush1.msra.mxu0 0.0
    %3411 = vmatprep.subr.mxu0 0.0
    %3412 = vmatpush1.msra.mxu0 0.0
    %3413 = vmatprep.subr.mxu0 0.0
    %3414 = vmatpush1.msra.mxu0 0.0
    %3415 = vmatprep.subr.mxu0 0.0
    %3416 = vmatpush1.msra.mxu0 0.0
    %3417 = vmatprep.subr.mxu0 0.0
    %3418 = vmatpush1.msra.mxu0 0.0
    %3419 = vmatprep.subr.mxu0 0.0
    %3420 = vmatpush1.msra.mxu0 0.0
    %3421 = vmatprep.subr.mxu0 0.0
    %3422 = vmatpush1.msra.mxu0 0.0
    %3423 = vmatprep.subr.mxu0 0.0
    %3424 = vmatpush1.msra.mxu0 0.0
    %3425 = vmatprep.subr.mxu0 0.0
    %3426 = vmatpush1.msra.mxu0 0.0
    %3427 = vmatprep.subr.mxu0 0.0
    %3428 = vmatpush1.msra.mxu0 0.0
    %3429 = vmatprep.subr.mxu0 0.0
    %3430 = vmatpush1.msra.mxu0 0.0
    %3431 = vmatprep.subr.mxu0 0.0
    %3432 = vmatpush1.msra.mxu0 0.0
    %3433 = vmatprep.subr.mxu0 0.0
    %3434 = vmatpush1.msra.mxu0 0.0
    %3435 = vmatprep.subr.mxu0 0.0
    %3436 = vmatpush1.msra.mxu0 0.0
    %3437 = vmatprep.subr.mxu0 0.0
    %3438 = vmatpush1.msra.mxu0 0.0
    %3439 = vmatprep.subr.mxu0 0.0
    %3440 = vmatpush1.msra.mxu0 0.0
    %3441 = vmatprep.subr.mxu0 0.0
    %3442 = vmatpush1.msra.mxu0 0.0
    %3443 = vmatprep.mubr.f32.mxu0 0.0
    %3444 = vmatmul.mubr.f32.gmra.mrb[0].mxu0 %v3374
    %v3445 = vpop.f32.mrb[0].mxu0
    %v3446 = vadd.f32 0.0, %v3445
    %v3447 = vpop.f32.mrb[0].mxu0
    %3448 = vmatprep.mubr.f32.mxu0 0.0
    %3449 = vmatmul.mubr.f32.gmra.mrb[0].mxu0 %v3377
    %v3450 = vpop.f32.mrb[0].mxu0
    %v3451 = vadd.f32 0.0, %v3450
    %v3452 = vpop.f32.mrb[0].mxu0
    %3453 = vdwg.mxu0
    %3456 = vrot.lane.b32.xlu0 %v2829, 64
    %v3457 = vpop.permute.xlu0 %3456
    %3458 = vrot.lane.b32.xlu0 %v2830, 64
    %v3459 = vpop.permute.xlu0 %3458
    %v3463 = vsel %vm659, %v2813, 0
    %v3466 = vsel %vm659, %v2814, 0
    %3468 = vmatprep.subr.mxu0 0.0
    %3469 = vmatpush1.msra.mxu0 %v3457
    %3470 = vmatprep.subr.mxu0 0.0
    %3471 = vmatpush1.msra.mxu0 %v3459
    %3472 = vmatprep.subr.mxu0 0.0
    %3473 = vmatpush1.msra.mxu0 0.0
    %3474 = vmatprep.subr.mxu0 0.0
    %3475 = vmatpush1.msra.mxu0 0.0
    %3476 = vmatprep.subr.mxu0 0.0
    %3477 = vmatpush1.msra.mxu0 0.0
    %3478 = vmatprep.subr.mxu0 0.0
    %3479 = vmatpush1.msra.mxu0 0.0
    %3480 = vmatprep.subr.mxu0 0.0
    %3481 = vmatpush1.msra.mxu0 0.0
    %3482 = vmatprep.subr.mxu0 0.0
    %3483 = vmatpush1.msra.mxu0 0.0
    %3484 = vmatprep.subr.mxu0 0.0
    %3485 = vmatpush1.msra.mxu0 0.0
    %3486 = vmatprep.subr.mxu0 0.0
    %3487 = vmatpush1.msra.mxu0 0.0
    %3488 = vmatprep.subr.mxu0 0.0
    %3489 = vmatpush1.msra.mxu0 0.0
    %3490 = vmatprep.subr.mxu0 0.0
    %3491 = vmatpush1.msra.mxu0 0.0
    %3492 = vmatprep.subr.mxu0 0.0
    %3493 = vmatpush1.msra.mxu0 0.0
    %3494 = vmatprep.subr.mxu0 0.0
    %3495 = vmatpush1.msra.mxu0 0.0
    %3496 = vmatprep.subr.mxu0 0.0
    %3497 = vmatpush1.msra.mxu0 0.0
    %3498 = vmatprep.subr.mxu0 0.0
    %3499 = vmatpush1.msra.mxu0 0.0
    %3500 = vmatprep.subr.mxu0 0.0
    %3501 = vmatpush1.msra.mxu0 0.0
    %3502 = vmatprep.subr.mxu0 0.0
    %3503 = vmatpush1.msra.mxu0 0.0
    %3504 = vmatprep.subr.mxu0 0.0
    %3505 = vmatpush1.msra.mxu0 0.0
    %3506 = vmatprep.subr.mxu0 0.0
    %3507 = vmatpush1.msra.mxu0 0.0
    %3508 = vmatprep.subr.mxu0 0.0
    %3509 = vmatpush1.msra.mxu0 0.0
    %3510 = vmatprep.subr.mxu0 0.0
    %3511 = vmatpush1.msra.mxu0 0.0
    %3512 = vmatprep.subr.mxu0 0.0
    %3513 = vmatpush1.msra.mxu0 0.0
    %3514 = vmatprep.subr.mxu0 0.0
    %3515 = vmatpush1.msra.mxu0 0.0
    %3516 = vmatprep.subr.mxu0 0.0
    %3517 = vmatpush1.msra.mxu0 0.0
    %3518 = vmatprep.subr.mxu0 0.0
    %3519 = vmatpush1.msra.mxu0 0.0
    %3520 = vmatprep.subr.mxu0 0.0
    %3521 = vmatpush1.msra.mxu0 0.0
    %3522 = vmatprep.subr.mxu0 0.0
    %3523 = vmatpush1.msra.mxu0 0.0
    %3524 = vmatprep.subr.mxu0 0.0
    %3525 = vmatpush1.msra.mxu0 0.0
    %3526 = vmatprep.subr.mxu0 0.0
    %3527 = vmatpush1.msra.mxu0 0.0
    %3528 = vmatprep.subr.mxu0 0.0
    %3529 = vmatpush1.msra.mxu0 0.0
    %3530 = vmatprep.subr.mxu0 0.0
    %3531 = vmatpush1.msra.mxu0 0.0
    %3532 = vmatprep.mubr.f32.mxu0 0.0
    %3533 = vmatmul.mubr.f32.gmra.mrb[0].mxu0 %v3463
    %v3534 = vpop.f32.mrb[0].mxu0
    %v3535 = vadd.f32 0.0, %v3534
    %v3536 = vpop.f32.mrb[0].mxu0
    %3537 = vmatprep.mubr.f32.mxu0 0.0
    %3538 = vmatmul.mubr.f32.gmra.mrb[0].mxu0 %v3466
    %v3539 = vpop.f32.mrb[0].mxu0
    %v3540 = vadd.f32 0.0, %v3539
    %v3541 = vpop.f32.mrb[0].mxu0
    %3542 = vdwg.mxu0
    %v3543 = vadd.f32 %v2912, %v3001
    %v3544 = vadd.f32 %v2917, %v3006
    %v3545 = vadd.f32 %v3268, %v3357
    %v3546 = vadd.f32 %v3273, %v3362
    %v3547 = vadd.f32 %v3543, %v3090
    %v3548 = vadd.f32 %v3544, %v3095
    %v3549 = vadd.f32 %v3545, %v3446
    %v3550 = vadd.f32 %v3546, %v3451
    %v3551 = vadd.f32 %v3547, %v3179
    %v3552 = vadd.f32 %v3548, %v3184
    %v3553 = vadd.f32 %v3549, %v3535
    %v3554 = vadd.f32 %v3550, %v3540
    %s3555 = scalar_lea.vmem %s7, 32
    %v3556 = vld [vmem:[%s3555] sm:$0xff]
    %v3557 = vld [vmem:[%s3555 + $0x8] sm:$0xff]
    %v3558 = vld [vmem:[%s3555 + $0x10] sm:$0xff]
    %v3559 = vld [vmem:[%s3555 + $0x18] sm:$0xff]
    %s3560 = scalar_lea.vmem %s8, 1
    %v3561 = vld [vmem:[%s3560] sm:$0x1]
    %v3563 = vlaneseq
    %v3564 = vshrl.u32 %v3563, 7
    %v3565 = vsub.s32 0, %v3564
    %v3566 = vrot.slane %v3561, %v3565
    %v3569 = vsel %vm70, %v3551, 0
    %v3572 = vsel %vm70, %v3552, 0
    %v3575 = vsel %vm70, %v3553, 0
    %v3578 = vsel %vm70, %v3554, 0
    %v3581 = vsel %vm70, %v3556, 0
    %v3584 = vsel %vm70, %v3557, 0
    %v3587 = vsel %vm70, %v3558, 0
    %v3590 = vsel %vm70, %v3559, 0
    %3592 = vmatprep.subr.mxu0 0.0
    %3593 = vmatpush1.xpose.msra.mxu0 %v3581
    %3594 = vmatprep.subr.mxu0 0.0
    %3595 = vmatpush1.xpose.msra.mxu0 %v3584
    %3596 = vmatprep.subr.mxu0 0.0
    %3597 = vmatpush1.xpose.msra.mxu0 %v3587
    %3598 = vmatprep.subr.mxu0 0.0
    %3599 = vmatpush1.xpose.msra.mxu0 %v3590
    %3600 = vmatprep.subr.mxu0 0.0
    %3601 = vmatpush1.xpose.msra.mxu0 0.0
    %3602 = vmatprep.subr.mxu0 0.0
    %3603 = vmatpush1.xpose.msra.mxu0 0.0
    %3604 = vmatprep.subr.mxu0 0.0
    %3605 = vmatpush1.xpose.msra.mxu0 0.0
    %3606 = vmatprep.subr.mxu0 0.0
    %3607 = vmatpush1.xpose.msra.mxu0 0.0
    %3608 = vmatprep.subr.mxu0 0.0
    %3609 = vmatpush1.xpose.msra.mxu0 0.0
    %3610 = vmatprep.subr.mxu0 0.0
    %3611 = vmatpush1.xpose.msra.mxu0 0.0
    %3612 = vmatprep.subr.mxu0 0.0
    %3613 = vmatpush1.xpose.msra.mxu0 0.0
    %3614 = vmatprep.subr.mxu0 0.0
    %3615 = vmatpush1.xpose.msra.mxu0 0.0
    %3616 = vmatprep.subr.mxu0 0.0
    %3617 = vmatpush1.xpose.msra.mxu0 0.0
    %3618 = vmatprep.subr.mxu0 0.0
    %3619 = vmatpush1.xpose.msra.mxu0 0.0
    %3620 = vmatprep.subr.mxu0 0.0
    %3621 = vmatpush1.xpose.msra.mxu0 0.0
    %3622 = vmatprep.subr.mxu0 0.0
    %3623 = vmatpush1.xpose.msra.mxu0 0.0
    %3624 = vmatprep.subr.mxu0 0.0
    %3625 = vmatpush1.xpose.msra.mxu0 0.0
    %3626 = vmatprep.subr.mxu0 0.0
    %3627 = vmatpush1.xpose.msra.mxu0 0.0
    %3628 = vmatprep.subr.mxu0 0.0
    %3629 = vmatpush1.xpose.msra.mxu0 0.0
    %3630 = vmatprep.subr.mxu0 0.0
    %3631 = vmatpush1.xpose.msra.mxu0 0.0
    %3632 = vmatprep.subr.mxu0 0.0
    %3633 = vmatpush1.xpose.msra.mxu0 0.0
    %3634 = vmatprep.subr.mxu0 0.0
    %3635 = vmatpush1.xpose.msra.mxu0 0.0
    %3636 = vmatprep.subr.mxu0 0.0
    %3637 = vmatpush1.xpose.msra.mxu0 0.0
    %3638 = vmatprep.subr.mxu0 0.0
    %3639 = vmatpush1.xpose.msra.mxu0 0.0
    %3640 = vmatprep.subr.mxu0 0.0
    %3641 = vmatpush1.xpose.msra.mxu0 0.0
    %3642 = vmatprep.subr.mxu0 0.0
    %3643 = vmatpush1.xpose.msra.mxu0 0.0
    %3644 = vmatprep.subr.mxu0 0.0
    %3645 = vmatpush1.xpose.msra.mxu0 0.0
    %3646 = vmatprep.subr.mxu0 0.0
    %3647 = vmatpush1.xpose.msra.mxu0 0.0
    %3648 = vmatprep.subr.mxu0 0.0
    %3649 = vmatpush1.xpose.msra.mxu0 0.0
    %3650 = vmatprep.subr.mxu0 0.0
    %3651 = vmatpush1.xpose.msra.mxu0 0.0
    %3652 = vmatprep.subr.mxu0 0.0
    %3653 = vmatpush1.xpose.msra.mxu0 0.0
    %3654 = vmatprep.subr.mxu0 0.0
    %3655 = vmatpush1.xpose.msra.mxu0 0.0
    %3656 = vmatprep.mubr.f32.mxu0 0.0
    %3657 = vmatmul.mubr.f32.gmra.mrb[0].mxu0 %v3569
    %v3658 = vpop.f32.mrb[0].mxu0
    %v3659 = vadd.f32 %v3566, %v3658
    %v3660 = vpop.f32.mrb[0].mxu0
    %3661 = vmatprep.mubr.f32.mxu0 0.0
    %3662 = vmatmul.mubr.f32.gmra.mrb[0].mxu0 %v3572
    %v3663 = vpop.f32.mrb[0].mxu0
    %v3664 = vadd.f32 %v3566, %v3663
    %v3665 = vpop.f32.mrb[0].mxu0
    %3666 = vmatprep.mubr.f32.mxu0 0.0
    %3667 = vmatmul.mubr.f32.gmra.mrb[0].mxu0 %v3575
    %v3668 = vpop.f32.mrb[0].mxu0
    %v3669 = vadd.f32 %v3566, %v3668
    %v3670 = vpop.f32.mrb[0].mxu0
    %3671 = vmatprep.mubr.f32.mxu0 0.0
    %3672 = vmatmul.mubr.f32.gmra.mrb[0].mxu0 %v3578
    %v3673 = vpop.f32.mrb[0].mxu0
    %v3674 = vadd.f32 %v3566, %v3673
    %v3675 = vpop.f32.mrb[0].mxu0
    %3676 = vdwg.mxu0
    %v3677 = vadd.f32 %v2087, %v3659
    %v3678 = vadd.f32 %v2088, %v3664
    %v3679 = vadd.f32 %v2089, %v3669
    %v3680 = vadd.f32 %v2090, %v3674
    %s3681 = scalar_lea.vmem %s9, 1
    %v3682 = vld [vmem:[%s3681] sm:$0x1]
    %s3683 = scalar_lea.vmem %s10, 1
    %v3684 = vld [vmem:[%s3683] sm:$0x1]
    %v3685 = vsel %vm70, %v3677, 0.0
    %3686 = vadd.xlane.f32.xlu0 %v3685
    %v3687 = vpop.xlane.xlu0 %3686
    %v3688 = vsel %vm70, %v3678, 0.0
    %3689 = vadd.xlane.f32.xlu0 %v3688
    %v3690 = vpop.xlane.xlu0 %3689
    %v3691 = vsel %vm70, %v3679, 0.0
    %3692 = vadd.xlane.f32.xlu0 %v3691
    %v3693 = vpop.xlane.xlu0 %3692
    %v3694 = vsel %vm70, %v3680, 0.0
    %3695 = vadd.xlane.f32.xlu0 %v3694
    %v3696 = vpop.xlane.xlu0 %3695
    %v3697 = vmul.f32 %v3687, %v83
    %v3698 = vmul.f32 %v3690, %v83
    %v3699 = vmul.f32 %v3693, %v83
    %v3700 = vmul.f32 %v3696, %v83
    %v3701 = vmul.f32 %v3677, %v3677
    %v3702 = vmul.f32 %v3678, %v3678
    %v3703 = vmul.f32 %v3679, %v3679
    %v3704 = vmul.f32 %v3680, %v3680
    %v3705 = vsel %vm70, %v3701, 0.0
    %3706 = vadd.xlane.f32.xlu0 %v3705
    %v3707 = vpop.xlane.xlu0 %3706
    %v3708 = vsel %vm70, %v3702, 0.0
    %3709 = vadd.xlane.f32.xlu0 %v3708
    %v3710 = vpop.xlane.xlu0 %3709
    %v3711 = vsel %vm70, %v3703, 0.0
    %3712 = vadd.xlane.f32.xlu0 %v3711
    %v3713 = vpop.xlane.xlu0 %3712
    %v3714 = vsel %vm70, %v3704, 0.0
    %3715 = vadd.xlane.f32.xlu0 %v3714
    %v3716 = vpop.xlane.xlu0 %3715
    %v3717 = vmul.f32 %v3707, %v83
    %v3718 = vmul.f32 %v3710, %v83
    %v3719 = vmul.f32 %v3713, %v83
    %v3720 = vmul.f32 %v3716, %v83
    %v3721 = vmul.f32 %v3697, %v3697
    %v3722 = vmul.f32 %v3698, %v3698
    %v3723 = vmul.f32 %v3699, %v3699
    %v3724 = vmul.f32 %v3700, %v3700
    %v3725 = vsub.f32 %v3717, %v3721
    %v3726 = vsub.f32 %v3718, %v3722
    %v3727 = vsub.f32 %v3719, %v3723
    %v3728 = vsub.f32 %v3720, %v3724
    %v3729 = vsub.f32 %v3677, %v3697
    %v3730 = vsub.f32 %v3678, %v3698
    %v3731 = vsub.f32 %v3679, %v3699
    %v3732 = vsub.f32 %v3680, %v3700
    %v3733 = vadd.f32 %v3725, 1e-05
    %v3734 = vadd.f32 %v3726, 1e-05
    %v3735 = vadd.f32 %v3727, 1e-05
    %v3736 = vadd.f32 %v3728, 1e-05
    %v3737 = vrsqrt.pop %v3733
    %v3738 = vrsqrt.pop %v3734
    %v3739 = vrsqrt.pop %v3735
    %v3740 = vrsqrt.pop %v3736
    %v3741 = vmul.f32 %v3729, %v3737
    %v3742 = vmul.f32 %v3730, %v3738
    %v3743 = vmul.f32 %v3731, %v3739
    %v3744 = vmul.f32 %v3732, %v3740
    %v3746 = vlaneseq
    %v3747 = vshrl.u32 %v3746, 7
    %v3748 = vsub.s32 0, %v3747
    %v3749 = vrot.slane %v3682, %v3748
    %v3751 = vmul.f32 %v3741, %v3749
    %v3752 = vmul.f32 %v3742, %v3749
    %v3753 = vmul.f32 %v3743, %v3749
    %v3754 = vmul.f32 %v3744, %v3749
    %v3756 = vlaneseq
    %v3757 = vshrl.u32 %v3756, 7
    %v3758 = vsub.s32 0, %v3757
    %v3759 = vrot.slane %v3684, %v3758
    %v3761 = vadd.f32 %v3751, %v3759
    %v3762 = vadd.f32 %v3752, %v3759
    %v3763 = vadd.f32 %v3753, %v3759
    %v3764 = vadd.f32 %v3754, %v3759
    %s3765 = scalar_lea.vmem %s11, 64
    %v3766 = vld [vmem:[%s3765] sm:$0xff]
    %v3767 = vld [vmem:[%s3765 + $0x8] sm:$0xff]
    %v3768 = vld [vmem:[%s3765 + $0x10] sm:$0xff]
    %v3769 = vld [vmem:[%s3765 + $0x18] sm:$0xff]
    %v3770 = vld [vmem:[%s3765 + $0x20] sm:$0xff]
    %v3771 = vld [vmem:[%s3765 + $0x28] sm:$0xff]
    %v3772 = vld [vmem:[%s3765 + $0x30] sm:$0xff]
    %v3773 = vld [vmem:[%s3765 + $0x38] sm:$0xff]
    %s3774 = scalar_lea.vmem %s12, 1
    %v3775 = vld [vmem:[%s3774] sm:$0x1]
    %v3777 = vlaneseq
    %v3778 = vshrl.u32 %v3777, 7
    %v3779 = vsub.s32 0, %v3778
    %v3780 = vrot.slane %v3775, %v3779
    %v3783 = vsel %vm70, %v3761, 0
    %v3786 = vsel %vm70, %v3762, 0
    %v3789 = vsel %vm70, %v3763, 0
    %v3792 = vsel %vm70, %v3764, 0
    %v3795 = vsel %vm70, %v3766, 0
    %v3798 = vsel %vm70, %v3767, 0
    %v3801 = vsel %vm70, %v3768, 0
    %v3804 = vsel %vm70, %v3769, 0
    %v3807 = vsel %vm70, %v3770, 0
    %v3810 = vsel %vm70, %v3771, 0
    %v3813 = vsel %vm70, %v3772, 0
    %v3816 = vsel %vm70, %v3773, 0
    %3818 = vmatprep.subr.mxu0 0.0
    %3819 = vmatpush1.xpose.msra.mxu0 %v3795
    %3820 = vmatprep.subr.mxu0 0.0
    %3821 = vmatpush1.xpose.msra.mxu0 %v3798
    %3822 = vmatprep.subr.mxu0 0.0
    %3823 = vmatpush1.xpose.msra.mxu0 %v3801
    %3824 = vmatprep.subr.mxu0 0.0
    %3825 = vmatpush1.xpose.msra.mxu0 %v3804
    %3826 = vmatprep.subr.mxu0 0.0
    %3827 = vmatpush1.xpose.msra.mxu0 %v3807
    %3828 = vmatprep.subr.mxu0 0.0
    %3829 = vmatpush1.xpose.msra.mxu0 %v3810
    %3830 = vmatprep.subr.mxu0 0.0
    %3831 = vmatpush1.xpose.msra.mxu0 %v3813
    %3832 = vmatprep.subr.mxu0 0.0
    %3833 = vmatpush1.xpose.msra.mxu0 %v3816
    %3834 = vmatprep.subr.mxu0 0.0
    %3835 = vmatpush1.xpose.msra.mxu0 0.0
    %3836 = vmatprep.subr.mxu0 0.0
    %3837 = vmatpush1.xpose.msra.mxu0 0.0
    %3838 = vmatprep.subr.mxu0 0.0
    %3839 = vmatpush1.xpose.msra.mxu0 0.0
    %3840 = vmatprep.subr.mxu0 0.0
    %3841 = vmatpush1.xpose.msra.mxu0 0.0
    %3842 = vmatprep.subr.mxu0 0.0
    %3843 = vmatpush1.xpose.msra.mxu0 0.0
    %3844 = vmatprep.subr.mxu0 0.0
    %3845 = vmatpush1.xpose.msra.mxu0 0.0
    %3846 = vmatprep.subr.mxu0 0.0
    %3847 = vmatpush1.xpose.msra.mxu0 0.0
    %3848 = vmatprep.subr.mxu0 0.0
    %3849 = vmatpush1.xpose.msra.mxu0 0.0
    %3850 = vmatprep.subr.mxu0 0.0
    %3851 = vmatpush1.xpose.msra.mxu0 0.0
    %3852 = vmatprep.subr.mxu0 0.0
    %3853 = vmatpush1.xpose.msra.mxu0 0.0
    %3854 = vmatprep.subr.mxu0 0.0
    %3855 = vmatpush1.xpose.msra.mxu0 0.0
    %3856 = vmatprep.subr.mxu0 0.0
    %3857 = vmatpush1.xpose.msra.mxu0 0.0
    %3858 = vmatprep.subr.mxu0 0.0
    %3859 = vmatpush1.xpose.msra.mxu0 0.0
    %3860 = vmatprep.subr.mxu0 0.0
    %3861 = vmatpush1.xpose.msra.mxu0 0.0
    %3862 = vmatprep.subr.mxu0 0.0
    %3863 = vmatpush1.xpose.msra.mxu0 0.0
    %3864 = vmatprep.subr.mxu0 0.0
    %3865 = vmatpush1.xpose.msra.mxu0 0.0
    %3866 = vmatprep.subr.mxu0 0.0
    %3867 = vmatpush1.xpose.msra.mxu0 0.0
    %3868 = vmatprep.subr.mxu0 0.0
    %3869 = vmatpush1.xpose.msra.mxu0 0.0
    %3870 = vmatprep.subr.mxu0 0.0
    %3871 = vmatpush1.xpose.msra.mxu0 0.0
    %3872 = vmatprep.subr.mxu0 0.0
    %3873 = vmatpush1.xpose.msra.mxu0 0.0
    %3874 = vmatprep.subr.mxu0 0.0
    %3875 = vmatpush1.xpose.msra.mxu0 0.0
    %3876 = vmatprep.subr.mxu0 0.0
    %3877 = vmatpush1.xpose.msra.mxu0 0.0
    %3878 = vmatprep.subr.mxu0 0.0
    %3879 = vmatpush1.xpose.msra.mxu0 0.0
    %3880 = vmatprep.subr.mxu0 0.0
    %3881 = vmatpush1.xpose.msra.mxu0 0.0
    %3882 = vmatprep.mubr.f32.mxu0 0.0
    %3883 = vmatmul.mubr.f32.gmra.mrb[0].mxu0 %v3783
    %v3884 = vpop.f32.mrb[0].mxu0
    %v3885 = vadd.f32 %v3780, %v3884
    %v3886 = vpop.f32.mrb[0].mxu0
    %3887 = vmatprep.mubr.f32.mxu0 0.0
    %3888 = vmatmul.mubr.f32.gmra.mrb[0].mxu0 %v3786
    %v3889 = vpop.f32.mrb[0].mxu0
    %v3890 = vadd.f32 %v3780, %v3889
    %v3891 = vpop.f32.mrb[0].mxu0
    %3892 = vmatprep.mubr.f32.mxu0 0.0
    %3893 = vmatmul.mubr.f32.gmra.mrb[0].mxu0 %v3789
    %v3894 = vpop.f32.mrb[0].mxu0
    %v3895 = vadd.f32 %v3780, %v3894
    %v3896 = vpop.f32.mrb[0].mxu0
    %3897 = vmatprep.mubr.f32.mxu0 0.0
    %3898 = vmatmul.mubr.f32.gmra.mrb[0].mxu0 %v3792
    %v3899 = vpop.f32.mrb[0].mxu0
    %v3900 = vadd.f32 %v3780, %v3899
    %v3901 = vpop.f32.mrb[0].mxu0
    %3902 = vdwg.mxu0
    %v3903 = vmul.f32 %v3885, 0.5
    %v3904 = vmul.f32 %v3890, 0.5
    %v3905 = vmul.f32 %v3895, 0.5
    %v3906 = vmul.f32 %v3900, 0.5
    %v3907 = vmul.f32 %v3885, 0.044715
    %v3908 = vmul.f32 %v3890, 0.044715
    %v3909 = vmul.f32 %v3895, 0.044715
    %v3910 = vmul.f32 %v3900, 0.044715
    %v3911 = vmul.f32 %v3907, %v3885
    %v3912 = vmul.f32 %v3908, %v3890
    %v3913 = vmul.f32 %v3909, %v3895
    %v3914 = vmul.f32 %v3910, %v3900
    %v3915 = vmul.f32 %v3911, %v3885
    %v3916 = vmul.f32 %v3912, %v3890
    %v3917 = vmul.f32 %v3913, %v3895
    %v3918 = vmul.f32 %v3914, %v3900
    %v3919 = vadd.f32 %v3885, %v3915
    %v3920 = vadd.f32 %v3890, %v3916
    %v3921 = vadd.f32 %v3895, %v3917
    %v3922 = vadd.f32 %v3900, %v3918
    %v3923 = vmul.f32 %v3919, 0.7978846
    %v3924 = vmul.f32 %v3920, 0.7978846
    %v3925 = vmul.f32 %v3921, 0.7978846
    %v3926 = vmul.f32 %v3922, 0.7978846
    %v3927 = vtanh.pop %v3923
    %v3928 = vtanh.pop %v3924
    %v3929 = vtanh.pop %v3925
    %v3930 = vtanh.pop %v3926
    %v3931 = vadd.f32 %v3927, 1.0
    %v3932 = vadd.f32 %v3928, 1.0
    %v3933 = vadd.f32 %v3929, 1.0
    %v3934 = vadd.f32 %v3930, 1.0
    %v3935 = vmul.f32 %v3903, %v3931
    %v3936 = vmul.f32 %v3904, %v3932
    %v3937 = vmul.f32 %v3905, %v3933
    %v3938 = vmul.f32 %v3906, %v3934
    %s3939 = scalar_lea.vmem %s13, 32
    %v3940 = vld [vmem:[%s3939] sm:$0xff]
    %v3941 = vld [vmem:[%s3939 + $0x8] sm:$0xff]
    %v3942 = vld [vmem:[%s3939 + $0x10] sm:$0xff]
    %v3943 = vld [vmem:[%s3939 + $0x18] sm:$0xff]
    %s3944 = scalar_lea.vmem %s14, 1
    %v3945 = vld [vmem:[%s3944] sm:$0x1]
    %v3947 = vlaneseq
    %v3948 = vshrl.u32 %v3947, 7
    %v3949 = vsub.s32 0, %v3948
    %v3950 = vrot.slane %v3945, %v3949
    %v3953 = vsel %vm1977, %v3935, 0
    %v3956 = vsel %vm1977, %v3936, 0
    %v3959 = vsel %vm1977, %v3937, 0
    %v3962 = vsel %vm1977, %v3938, 0
    %v3965 = vsel %vm1977, %v3940, 0
    %v3968 = vsel %vm1977, %v3941, 0
    %v3971 = vsel %vm1977, %v3942, 0
    %v3974 = vsel %vm1977, %v3943, 0
    %3976 = vmatprep.subr.mxu0 0.0
    %3977 = vmatpush1.xpose.msra.mxu0 %v3965
    %3978 = vmatprep.subr.mxu0 0.0
    %3979 = vmatpush1.xpose.msra.mxu0 %v3968
    %3980 = vmatprep.subr.mxu0 0.0
    %3981 = vmatpush1.xpose.msra.mxu0 %v3971
    %3982 = vmatprep.subr.mxu0 0.0
    %3983 = vmatpush1.xpose.msra.mxu0 %v3974
    %3984 = vmatprep.subr.mxu0 0.0
    %3985 = vmatpush1.xpose.msra.mxu0 0.0
    %3986 = vmatprep.subr.mxu0 0.0
    %3987 = vmatpush1.xpose.msra.mxu0 0.0
    %3988 = vmatprep.subr.mxu0 0.0
    %3989 = vmatpush1.xpose.msra.mxu0 0.0
    %3990 = vmatprep.subr.mxu0 0.0
    %3991 = vmatpush1.xpose.msra.mxu0 0.0
    %3992 = vmatprep.subr.mxu0 0.0
    %3993 = vmatpush1.xpose.msra.mxu0 0.0
    %3994 = vmatprep.subr.mxu0 0.0
    %3995 = vmatpush1.xpose.msra.mxu0 0.0
    %3996 = vmatprep.subr.mxu0 0.0
    %3997 = vmatpush1.xpose.msra.mxu0 0.0
    %3998 = vmatprep.subr.mxu0 0.0
    %3999 = vmatpush1.xpose.msra.mxu0 0.0
    %4000 = vmatprep.subr.mxu0 0.0
    %4001 = vmatpush1.xpose.msra.mxu0 0.0
    %4002 = vmatprep.subr.mxu0 0.0
    %4003 = vmatpush1.xpose.msra.mxu0 0.0
    %4004 = vmatprep.subr.mxu0 0.0
    %4005 = vmatpush1.xpose.msra.mxu0 0.0
    %4006 = vmatprep.subr.mxu0 0.0
    %4007 = vmatpush1.xpose.msra.mxu0 0.0
    %4008 = vmatprep.subr.mxu0 0.0
    %4009 = vmatpush1.xpose.msra.mxu0 0.0
    %4010 = vmatprep.subr.mxu0 0.0
    %4011 = vmatpush1.xpose.msra.mxu0 0.0
    %4012 = vmatprep.subr.mxu0 0.0
    %4013 = vmatpush1.xpose.msra.mxu0 0.0
    %4014 = vmatprep.subr.mxu0 0.0
    %4015 = vmatpush1.xpose.msra.mxu0 0.0
    %4016 = vmatprep.subr.mxu0 0.0
    %4017 = vmatpush1.xpose.msra.mxu0 0.0
    %4018 = vmatprep.subr.mxu0 0.0
    %4019 = vmatpush1.xpose.msra.mxu0 0.0
    %4020 = vmatprep.subr.mxu0 0.0
    %4021 = vmatpush1.xpose.msra.mxu0 0.0
    %4022 = vmatprep.subr.mxu0 0.0
    %4023 = vmatpush1.xpose.msra.mxu0 0.0
    %4024 = vmatprep.subr.mxu0 0.0
    %4025 = vmatpush1.xpose.msra.mxu0 0.0
    %4026 = vmatprep.subr.mxu0 0.0
    %4027 = vmatpush1.xpose.msra.mxu0 0.0
    %4028 = vmatprep.subr.mxu0 0.0
    %4029 = vmatpush1.xpose.msra.mxu0 0.0
    %4030 = vmatprep.subr.mxu0 0.0
    %4031 = vmatpush1.xpose.msra.mxu0 0.0
    %4032 = vmatprep.subr.mxu0 0.0
    %4033 = vmatpush1.xpose.msra.mxu0 0.0
    %4034 = vmatprep.subr.mxu0 0.0
    %4035 = vmatpush1.xpose.msra.mxu0 0.0
    %4036 = vmatprep.subr.mxu0 0.0
    %4037 = vmatpush1.xpose.msra.mxu0 0.0
    %4038 = vmatprep.subr.mxu0 0.0
    %4039 = vmatpush1.xpose.msra.mxu0 0.0
    %4040 = vmatprep.mubr.f32.mxu0 0.0
    %4041 = vmatmul.mubr.f32.gmra.mrb[0].mxu0 %v3953
    %v4042 = vpop.f32.mrb[0].mxu0
    %v4043 = vadd.f32 %v3950, %v4042
    %v4044 = vpop.f32.mrb[0].mxu0
    %4045 = vmatprep.mubr.f32.mxu0 0.0
    %4046 = vmatmul.mubr.f32.gmra.mrb[0].mxu0 %v3956
    %v4047 = vpop.f32.mrb[0].mxu0
    %v4048 = vpop.f32.mrb[0].mxu0
    %4049 = vmatprep.mubr.f32.mxu0 0.0
    %4050 = vmatmul.mubr.f32.gmra.mrb[0].mxu0 %v3959
    %v4051 = vpop.f32.mrb[0].mxu0
    %v4052 = vadd.f32 %v3950, %v4051
    %v4053 = vpop.f32.mrb[0].mxu0
    %4054 = vmatprep.mubr.f32.mxu0 0.0
    %4055 = vmatmul.mubr.f32.gmra.mrb[0].mxu0 %v3962
    %v4056 = vpop.f32.mrb[0].mxu0
    %v4057 = vpop.f32.mrb[0].mxu0
    %4058 = vdwg.mxu0
    %v4059 = vadd.f32 %v3677, %v4043
    %v4060 = vadd.f32 %v3679, %v4052
    %v4061 = vld [vmem:[%s15] sm:$0x1]
    %v4062 = vld [vmem:[%s16] sm:$0x1]
    %v4065 = vrot.slane %v4060, 7
    %vm4066 = vcmask 1041409
    %v4067 = vsel %vm4066, %v4065, %v4059
    %vm4069 = vcmask 254976
    %v4070 = vsel %vm4069, %v4067, 0.0
    %4071 = vadd.xlane.f32.xlu0 %v4070
    %v4072 = vpop.xlane.xlu0 %4071
    %v4073 = vmul.f32 %v4072, %v83
    %v4074 = vmul.f32 %v4059, %v4059
    %v4075 = vmul.f32 %v4060, %v4060
    %v4078 = vrot.slane %v4075, 7
    %v4079 = vsel %vm4066, %v4078, %v4074
    %v4081 = vsel %vm4069, %v4079, 0.0
    %4082 = vadd.xlane.f32.xlu0 %v4081
    %v4083 = vpop.xlane.xlu0 %4082
    %v4084 = vmul.f32 %v4083, %v83
    %v4085 = vmul.f32 %v4073, %v4073
    %v4086 = vsub.f32 %v4084, %v4085
    %v4088 = vrot.slane %v4073, 1
    %v4091 = vsub.f32 %v4059, %v4073
    %v4092 = vsub.f32 %v4060, %v4088
    %v4093 = vadd.f32 %v4086, 1e-05
    %v4094 = vrsqrt.pop %v4093
    %v4096 = vrot.slane %v4094, 1
    %v4099 = vmul.f32 %v4091, %v4094
    %v4100 = vmul.f32 %v4092, %v4096
    %v4102 = vlaneseq
    %v4103 = vshrl.u32 %v4102, 7
    %v4104 = vsub.s32 0, %v4103
    %v4105 = vrot.slane %v4061, %v4104
    %v4107 = vmul.f32 %v4099, %v4105
    %v4108 = vmul.f32 %v4100, %v4105
    %v4110 = vlaneseq
    %v4111 = vshrl.u32 %v4110, 7
    %v4112 = vsub.s32 0, %v4111
    %v4113 = vrot.slane %v4062, %v4112
    %v4115 = vadd.f32 %v4107, %v4113
    %v4116 = vadd.f32 %v4108, %v4113
    %v4119 = vrot.slane %v4116, 7
    %v4120 = vsel %vm4066, %v4119, %v4115
    %4122 = vst.msk [vmem:[#allocation2] sm:$0x3] %vm4069, %v4120
    // Predicated region
    $region70: #{tpu_custom_call.1} parent=1 // pred_check
      _
    $region71: #{tpu_custom_call.1} parent=1 // pred_check_branch
      %4124 = sbr.rel (0) target = $region73
    $region72: #{tpu_custom_call.1} parent=1 // pred_region
      %s4126 = ssub.s32 32, 32
      %4127 = vsyncadd [#allocation3], %s4126
      %s4129 = sshll.u32 [#allocation2], 4
      %s4130 = int_to_ptr.vmem [resolvable:$true] %s4129
      %4132 = dma.vmem_to_hbm [thread:$0]  %s4130, 32, %s17, [#allocation3]
    $region73: #{tpu_custom_call.1} parent=1 // pred_fallthru
      _
    // Predicated region
    $region74: #{tpu_custom_call.1} parent=1 // pred_check
      _
    $region75: #{tpu_custom_call.1} parent=1 // pred_check_branch
      %4134 = sbr.rel (0) target = $region77
    $region76: #{tpu_custom_call.1} parent=1 // pred_region
      %4135 = dma.done [#allocation3], 32
    $region77: #{tpu_custom_call.1} parent=1 // pred_fallthru
      _
    %4136 = vsyncpa [#allocation3], 1

</llo_original>
